<compile_context>
chip_gen: v7x
topology: tpu7x:2x2x1
jax: 0.10.0
libtpu: 0.0.40
codegen_flags: <defaults>
</compile_context>

<pallas_src>
import jax
import jax.numpy as jnp
from jax.experimental import pallas as pl
from jax.experimental.pallas import tpu as pltpu

# ----------------------------- configuration --------------------------------
B_TOTAL = 16     # graphs per call (any multiple of B_TILE; scale up freely)
B_TILE = 8       # graphs per grid step (multiple of 8 -> sublane aligned)
NUM_TILES = B_TOTAL // B_TILE
N = 8            # max nodes per graph (dense padding)
N_DIM = 3        # spatial dims
X_CLASS = 5      # atom-type classes
NODE_NF = X_CLASS + 1 + 1          # one-hot + atom_num + degree = 7
D = N_DIM + NODE_NF                # 10 real per-node channels
DP = 12                            # padded block width (xh block / eps block)
W = 2 * DP                         # 24: [xh(10), t-slot, 1-slot | eps(10), 0, 0]
F = NODE_NF                        # 7 feature channels
F1 = 8                             # padded feature width in the t==0 branch
HID = 32         # hidden width of the stand-in dynamics MLP
H1 = HID + 1     # + ones-carrier column (layer-2 bias)
T_STEPS = 1000   # diffusion steps
PRECISION = 1e-5
NV0, NV1, NV2 = 4.0, 9.0, 4.0      # norm_values (one-hot, atom_num, degree)
EPSILON = 1e-10
_INV_SQRT2 = 0.7071067811865476
LANES = 128      # lane-dense output width
BN = B_TILE * N  # rows per grid step


# ----------------------------- kernel helpers --------------------------------
def _erf(x):
    # Abramowitz & Stegun 7.1.26 polynomial (|err| < 1.5e-7).
    # TODO(synk): exact lax.erf not relied on to keep the Mosaic lowering simple.
    a1, a2, a3, a4, a5 = 0.254829592, -0.284496736, 1.421413741, -1.453152027, 1.061405429
    p = 0.3275911
    sgn = jnp.where(x >= 0.0, 1.0, -1.0)
    ax = jnp.abs(x)
    t = pl.reciprocal(1.0 + p * ax, approx=True)     # EUP slot, rare path only
    poly = ((((a5 * t + a4) * t + a3) * t + a2) * t + a1) * t
    return sgn * (1.0 - poly * jnp.exp(-ax * ax))


def _cdf_std_gaussian(x):
    return 0.5 * (1.0 + _erf(x * _INV_SQRT2))


def _stable_sigmoid_pair(g):
    """Returns (sigmoid(g), sigmoid(-g)) without 1-sigmoid cancellation/overflow."""
    e = jnp.exp(-jnp.abs(g))
    inv_den = 1.0 / (1.0 + e)
    sig = jnp.where(g >= 0.0, inv_den, e * inv_den)
    sig_neg = jnp.where(g >= 0.0, e * inv_den, inv_den)
    return sig, sig_neg


# --------------------------------- kernel ------------------------------------
def gfmdiff_loss_kernel(
    flags_ref,                                     # SMEM scalar prefetch: (NUM_TILES,) int32
    slab_ref, mask_ref, scal_ref,                  # packed per-node data + per-graph scalars
    w1_ref, w2_ref,                                # packed dynamics MLP weights (VMEM-resident)
    loss_ref):
    f32 = jnp.float32

    # ---- compile-time selector / aggregation constants (iota-built) ---------
    c24 = jax.lax.broadcasted_iota(jnp.int32, (1, W), 1)
    norm_inv = jnp.where((c24 >= N_DIM) & (c24 < N_DIM + X_CLASS), 1.0 / NV0,
               jnp.where(c24 == N_DIM + X_CLASS, 1.0 / NV1,
               jnp.where(c24 == N_DIM + X_CLASS + 1, 1.0 / NV2, 1.0))).astype(f32)
    pos_sel = ((c24 < N_DIM) | ((c24 >= DP) & (c24 < DP + N_DIM))).astype(f32)
    xh_sel = (c24 < D).astype(f32)
    eps_sel = ((c24 >= DP) & (c24 < DP + D)).astype(f32)
    t_sel = (c24 == D).astype(f32)
    one_sel = (c24 == D + 1).astype(f32)

    # per-tile batch aggregation matrices: agg (B_TILE, BN), aggT (BN, B_TILE)
    rr = jax.lax.broadcasted_iota(jnp.int32, (B_TILE, BN), 1)
    bb = jax.lax.broadcasted_iota(jnp.int32, (B_TILE, BN), 0)
    agg = ((rr >= bb * N) & (rr < (bb + 1) * N)).astype(f32)
    rrT = jax.lax.broadcasted_iota(jnp.int32, (BN, B_TILE), 0)
    bbT = jax.lax.broadcasted_iota(jnp.int32, (BN, B_TILE), 1)
    aggT = ((rrT >= bbT * N) & (rrT < (bbT + 1) * N)).astype(f32)

    # channel-reduction selector (W, 4): [full err | pos err | ||xh||^2 | 0]
    ri = jax.lax.broadcasted_iota(jnp.int32, (W, 4), 0)
    rj = jax.lax.broadcasted_iota(jnp.int32, (W, 4), 1)
    red = (((rj == 0) & (ri >= DP) & (ri < DP + D))
           | ((rj == 1) & (ri >= DP) & (ri < DP + N_DIM))
           | ((rj == 2) & (ri < D))).astype(f32)

    # ---- per-graph scalars ----------------------------------------------------
    mask = mask_ref[...]                                   # (BN, 1)
    scal = scal_ref[...]                                   # (B_TILE, 8)
    gamma_t = scal[:, 0:1]
    gamma_T = scal[:, 1:2]
    t = scal[:, 2:3]
    t_iszero = scal[:, 3:4]
    n_nodes = scal[:, 4:5]

    inv_n = pl.reciprocal(jnp.maximum(n_nodes, 1.0), approx=True)   # (B_TILE, 1)

    sig_t, sig_neg_t = _stable_sigmoid_pair(gamma_t)       # sigmoid(g), sigmoid(-g)
    sigma_t = jnp.sqrt(sig_t)
    alpha_t = jnp.sqrt(sig_neg_t)
    sig_T, sig_neg_T = _stable_sigmoid_pair(gamma_T)

    # ---- normalize + mask + remove CoG (pos channels of xh AND eps) ----------
    slab_m = slab_ref[...] * norm_inv * mask               # (BN, W)
    mean_b = jnp.dot(agg, slab_m, preferred_element_type=f32) * inv_n     # (B_TILE, W)
    mean_r = jnp.dot(aggT, mean_b, preferred_element_type=f32)            # (BN, W)
    slab_c = (slab_m - mean_r * pos_sel) * mask

    # ---- z_t = alpha*xh + sigma*eps (folded) + dynamics MLP (2 MXU matmuls) --
    # TODO(synk): the real EquiGNN dynamics is an external module not provided;
    # a deterministic masked MLP (t and biases folded into W1a/W2a) stands in.
    coef_b = alpha_t * xh_sel + sigma_t * eps_sel + t * t_sel + one_sel   # (B_TILE, W)
    coef_r = jnp.dot(aggT, coef_b, preferred_element_type=f32)            # (BN, W)
    zfold = slab_c * coef_r                                               # (BN, W)
    h = jnp.maximum(jnp.dot(zfold, w1_ref[...], preferred_element_type=f32), 0.0)
    gnn = jnp.dot(h, w2_ref[...], preferred_element_type=f32) * mask      # gnn in cols DP:DP+D

    # ---- fused reductions on the MXU ------------------------------------------
    diff = slab_c * eps_sel - gnn                  # eps - gnn (cols DP:DP+D), 0 elsewhere
    packed = slab_c * xh_sel + diff                # xh in cols 0:D, residual in DP:DP+D
    sq = packed * packed
    red_b = jnp.dot(agg, jnp.dot(sq, red, preferred_element_type=f32),
                    preferred_element_type=f32)                           # (B_TILE, 4)
    err_all = red_b[:, 0:1]
    err_pos = red_b[:, 1:2]
    xh_sq = red_b[:, 2:3]

    # calc_error (training + l2): reference divides by the padded N * D
    loss_gt0 = (0.5 / (N * D)) * err_all                   # SNR_weight == 1

    # kl_prior: KL(q(z_T|x) || N(0,I)) fused to a couple of scalars per graph
    log_sigma_T = 0.5 * jnp.log(sig_T)
    const_T = -log_sigma_T + 0.5 * sig_T - 0.5             # (B_TILE, 1)
    n_terms = jnp.maximum(n_nodes * NODE_NF + (n_nodes - 1.0) * N_DIM, 0.0)
    kl_prior = const_T * n_terms + 0.5 * sig_neg_T * xh_sq # alpha_T^2 * ||xh||^2

    base = kl_prior + jnp.where(t_iszero > 0.5, 0.0, loss_gt0)
    loss_ref[...] = jnp.broadcast_to(base, (B_TILE, LANES))   # full (8,128) unmasked store

    # ---- loss_term_0 = -log_pxh_z0_wo_constant, gated per tile on any(t == 0) -
    tile_has_zero = flags_ref[pl.program_id(0)] > 0

    @pl.when(tile_has_zero)
    def _loss_term_0():
        # branch-local selector constants (iota-built)
        pi = jax.lax.broadcasted_iota(jnp.int32, (W, F1), 0)
        pj = jax.lax.broadcasted_iota(jnp.int32, (W, F1), 1)
        nv_j = jnp.where(pj == X_CLASS, NV1,
               jnp.where(pj == X_CLASS + 1, NV2, NV0)).astype(f32)
        hit_x = (pj < F) & (pi == pj + N_DIM)
        px = jnp.where(hit_x, nv_j, 0.0).astype(f32)       # slab_c -> raw feats
        pz = jnp.where(hit_x | ((pj < F) & (pi == pj + N_DIM + DP)),
                       nv_j, 0.0).astype(f32)              # zfold  -> raw-scale z_t feats

        c8 = jax.lax.broadcasted_iota(jnp.int32, (1, F1), 1)
        x_sel7 = (c8 < X_CLASS).astype(f32)
        ad_sel7 = ((c8 >= X_CLASS) & (c8 < F)).astype(f32)
        nv_row = jnp.where(c8 == X_CLASS, NV1,
                 jnp.where(c8 == X_CLASS + 1, NV2,
                 jnp.where(c8 < X_CLASS, NV0, 1.0))).astype(f32)
        ones_col = jnp.ones((F1, 1), f32)

        log_p_pos = (-0.5 / (N * N_DIM)) * err_pos         # (B_TILE, 1)

        est7 = jnp.dot(zfold, pz, preferred_element_type=f32)    # z_t feats, raw scale
        raw7 = jnp.dot(slab_c, px, preferred_element_type=f32)   # raw feats (onehot 0/1,...)
        sigma_r = jnp.dot(aggT, sigma_t, preferred_element_type=f32)   # (BN, 1)

        # cdf(c+.5/s)-cdf(c-.5/s) is symmetric in c, so "target - est" works for
        # all 7 columns (x columns use target 1, matching est_x - 1 in the ref).
        target7 = x_sel7 + (1.0 - x_sel7) * raw7
        c7 = target7 - est7
        inv_sig7 = pl.reciprocal(sigma_r * nv_row, approx=True)   # 1/(sigma_0*norm)
        cdf_hi = _cdf_std_gaussian((c7 + 0.5) * inv_sig7)
        cdf_lo = _cdf_std_gaussian((c7 - 0.5) * inv_sig7)
        prob7 = jnp.maximum(cdf_hi - cdf_lo, 0.0) + EPSILON       # (BN, F1)
        logp = jnp.log(prob7)

        # logsumexp over the 5 class columns: probs are in [eps, 1+eps] so the
        # plain sum is numerically exact (no over/underflow) and goes to the MXU.
        z_sum = jnp.dot(prob7 * x_sel7, ones_col, preferred_element_type=f32)  # (BN,1)
        log_z = jnp.log(z_sum)

        wts7 = x_sel7 * raw7 + ad_sel7 * mask              # onehot weights | node mask
        contrib = (logp - log_z * x_sel7) * wts7           # (BN, F1)
        per_b = jnp.dot(agg, contrib, preferred_element_type=f32)        # (B_TILE, F1)
        log_ph = jnp.dot(per_b, ones_col, preferred_element_type=f32)    # (B_TILE, 1)

        loss_term_0 = -(log_p_pos + log_ph)
        add = jnp.where(t_iszero > 0.5, loss_term_0, 0.0)
        loss_ref[...] = loss_ref[...] + jnp.broadcast_to(add, (B_TILE, LANES))


# ------------------------------ host wrapper ---------------------------------
@jax.jit
def gfmdiff_forward(slab, mask2, scal, w1a, w2a, n_nodes_int, log_pn_table):
    # per-tile SMEM flag: 1 if any graph in the tile drew t == 0
    flags = (jnp.max(scal[:, 3].reshape(NUM_TILES, B_TILE), axis=1) > 0.0).astype(jnp.int32)

    loss2d = pl.pallas_call(
        gfmdiff_loss_kernel,
        grid_spec=pltpu.PrefetchScalarGridSpec(
            num_scalar_prefetch=1,
            grid=(NUM_TILES,),
            in_specs=[
                pl.BlockSpec((BN, W), lambda i, _f: (i, 0)),       # packed per-node slab
                pl.BlockSpec((BN, 1), lambda i, _f: (i, 0)),       # node mask
                pl.BlockSpec((B_TILE, 8), lambda i, _f: (i, 0)),   # per-graph scalars
                pl.BlockSpec((W, H1), lambda i, _f: (0, 0)),       # weights: VMEM-resident
                pl.BlockSpec((H1, W), lambda i, _f: (0, 0)),
            ],
            out_specs=pl.BlockSpec((B_TILE, LANES), lambda i, _f: (i, 0)),
        ),
        out_shape=jax.ShapeDtypeStruct((B_TOTAL, LANES), jnp.float32),
        # "parallel" lets v7x's 2 TensorCores split the batch tiles; harmless on v5e/v6e.
        # NOTE(v7x): when B_TOTAL grows, re-derive B_TILE against 64 MiB VMEM and
        # raise vmem_limit_bytes explicitly if needed.
        compiler_params=pltpu.CompilerParams(dimension_semantics=("parallel",)),
    )(flags, slab, mask2, scal, w1a, w2a)

    loss = loss2d[:, 0]                           # lane-dense slab -> per-graph loss
    neg_log_pxh = loss                            # delta_log_px == 0 (l2 training)
    log_pn = jnp.take(log_pn_table, n_nodes_int)  # DistributionNodes.log_prob
    neg_log_pxh = jnp.mean(neg_log_pxh - log_pn, axis=0)
    reg_term = jnp.array([0.0], dtype=jnp.float32)
    mean_abs_z = jnp.float32(0.0)
    return neg_log_pxh, reg_term, mean_abs_z


def gamma_schedule(t):
    """polynomial_2 noise schedule (continuous, precision-adjusted)."""
    # TODO(synk): original NoiseSchedule class not provided; standard EDM form.
    a2 = (1.0 - 2.0 * PRECISION) * (1.0 - t ** 2) ** 2 + PRECISION
    return jnp.log(1.0 - a2) - jnp.log(a2)


def pack_slab(pos, onehot, anum, deg, eps, node_mask):
    """Host-side packing: [pos(3) onehot(5) anum deg 1 1 | eps(10) 0 0] -> (B*N, 24)."""
    b = pos.shape[0]
    ones = jnp.ones((b, N, 1), jnp.float32)
    xh_blk = jnp.concatenate([pos, onehot, anum, deg, ones, ones], axis=2)     # (B,N,12)
    eps_blk = jnp.concatenate([eps, jnp.zeros((b, N, DP - D), jnp.float32)], axis=2)
    slab = jnp.concatenate([xh_blk, eps_blk], axis=2).reshape(b * N, W)
    mask2 = node_mask.reshape(b * N, 1)
    return slab, mask2


def pack_dynamics_params(w1z, w1t, b1, w2, b2):
    """Fold w1t / b1 / b2 into two matmul operands (ones column carries layer-2 bias)."""
    w1a = jnp.zeros((W, H1), jnp.float32)
    w1a = w1a.at[0:D, 0:HID].set(w1z)          # z @ w1z from the alpha*xh block
    w1a = w1a.at[DP:DP + D, 0:HID].set(w1z)    # ... plus the sigma*eps block
    w1a = w1a.at[D, 0:HID].set(w1t)            # t column
    w1a = w1a.at[D + 1, 0:HID].set(b1)         # bias via the ones column
    w1a = w1a.at[D + 1, HID].set(1.0)          # ones-carrier for layer-2 bias
    w2a = jnp.zeros((H1, W), jnp.float32)
    w2a = w2a.at[0:HID, DP:DP + D].set(w2)     # gnn output lands in cols DP:DP+D
    w2a = w2a.at[HID, DP:DP + D].set(b2)
    return w1a, w2a


if __name__ == "__main__":
    key = jax.random.PRNGKey(0)
    ks = jax.random.split(key, 12)

    # synthetic dense batch (read_batch output equivalent)
    n_nodes = jax.random.randint(ks[0], (B_TOTAL,), 3, N + 1)
    node_mask = (jnp.arange(N)[None, :] < n_nodes[:, None]).astype(jnp.float32)[:, :, None]

    pos = jax.random.normal(ks[1], (B_TOTAL, N, N_DIM), jnp.float32) * node_mask
    atom_type = jax.random.randint(ks[2], (B_TOTAL, N), 0, X_CLASS)
    onehot = jax.nn.one_hot(atom_type, X_CLASS, dtype=jnp.float32) * node_mask
    anum = jax.random.randint(ks[3], (B_TOTAL, N, 1), 1, 9).astype(jnp.float32) * node_mask
    deg = jax.random.randint(ks[4], (B_TOTAL, N, 1), 1, 5).astype(jnp.float32) * node_mask
    eps = jax.random.normal(ks[5], (B_TOTAL, N, D), jnp.float32)

    # diffusion timestep (training: lower bound 0); force one t==0 to exercise
    # the gated branch on tile 0 while tile 1 takes the fast path.
    t_int = jax.random.randint(ks[6], (B_TOTAL, 1), 0, T_STEPS + 1).astype(jnp.float32)
    t_int = t_int.at[0, 0].set(0.0)
    t = t_int / T_STEPS
    gamma_t = gamma_schedule(t)
    gamma_T = gamma_schedule(jnp.ones((B_TOTAL, 1), jnp.float32))
    t_iszero = (t_int == 0).astype(jnp.float32)
    n_nodes_f = n_nodes.astype(jnp.float32)[:, None]
    scal = jnp.concatenate(
        [gamma_t, gamma_T, t, t_iszero, n_nodes_f, jnp.zeros((B_TOTAL, 3), jnp.float32)],
        axis=1)                                                          # (B,8)

    slab, mask2 = pack_slab(pos, onehot, anum, deg, eps, node_mask)

    # deterministic stand-in dynamics parameters (packed / folded)
    w1 = 0.2 * jax.random.normal(ks[7], (D + 1, HID), jnp.float32)
    b1 = 0.05 * jax.random.normal(ks[8], (HID,), jnp.float32)
    w2 = 0.2 * jax.random.normal(ks[9], (HID, D), jnp.float32)
    b2 = 0.05 * jax.random.normal(ks[10], (D,), jnp.float32)
    w1a, w2a = pack_dynamics_params(w1[:D], w1[D], b1, w2, b2)

    # DistributionNodes over node counts 0..N (deterministic histogram)
    hist = jnp.array([0, 0, 0, 1, 2, 3, 4, 3, 2], dtype=jnp.float32)
    log_pn_table = jnp.log(hist / jnp.sum(hist) + 1e-30)

    neg_log_pxh, reg_term, mean_abs_z = gfmdiff_forward(
        slab, mask2, scal, w1a, w2a, n_nodes, log_pn_table)
    jax.block_until_ready(neg_log_pxh)
    assert bool(jnp.isfinite(neg_log_pxh))
    print("KERNEL_OK")
</pallas_src>

<mosaic_0001>
module attributes {stable_mosaic.version = 11 : i64} {
  func.func @gfmdiff_loss_kernel(%arg0: i32, %arg1: memref<2xi32, #tpu.memory_space<smem>>, %arg2: memref<64x24xf32, #tpu.memory_space<vmem>>, %arg3: memref<64x1xf32, #tpu.memory_space<vmem>>, %arg4: memref<8x8xf32, #tpu.memory_space<vmem>>, %arg5: memref<24x33xf32, #tpu.memory_space<vmem>>, %arg6: memref<33x24xf32, #tpu.memory_space<vmem>>, %arg7: memref<8x128xf32, #tpu.memory_space<vmem>>) attributes {dimension_semantics = [#tpu.dimension_semantics<parallel>], iteration_bounds = array<i64: 2>, scalar_prefetch = 1 : i64, scratch_operands = 0 : i64, tpu.core_type = #tpu.core_type<tc>, window_params = [{transform_indices = @transform_0, window_bounds = array<i64: 64, 24>}, {transform_indices = @transform_1, window_bounds = array<i64: 64, 1>}, {transform_indices = @transform_2, window_bounds = array<i64: 8, 8>}, {pipeline_mode = #tpu.pipeline_mode<synchronous>, transform_indices = @transform_3, window_bounds = array<i64: 24, 33>}, {pipeline_mode = #tpu.pipeline_mode<synchronous>, transform_indices = @transform_4, window_bounds = array<i64: 33, 24>}, {transform_indices = @transform_5, window_bounds = array<i64: 8, 128>}]} {
    %0 = tpu.iota {dimensions = array<i32: 1>} : vector<1x24xi32>
    %c3_i32 = arith.constant 3 : i32
    %1 = vector.broadcast %c3_i32 : i32 to vector<1x24xi32>
    %2 = arith.cmpi sge, %0, %1 : vector<1x24xi32>
    %c8_i32 = arith.constant 8 : i32
    %3 = vector.broadcast %c8_i32 : i32 to vector<1x24xi32>
    %4 = arith.cmpi slt, %0, %3 : vector<1x24xi32>
    %5 = arith.andi %2, %4 : vector<1x24xi1>
    %c8_i32_0 = arith.constant 8 : i32
    %6 = vector.broadcast %c8_i32_0 : i32 to vector<1x24xi32>
    %7 = arith.cmpi eq, %0, %6 : vector<1x24xi32>
    %c9_i32 = arith.constant 9 : i32
    %8 = vector.broadcast %c9_i32 : i32 to vector<1x24xi32>
    %9 = arith.cmpi eq, %0, %8 : vector<1x24xi32>
    %cst = arith.constant 2.500000e-01 : f32
    %cst_1 = arith.constant 1.000000e+00 : f32
    %10 = vector.broadcast %cst : f32 to vector<1x24xf32>
    %11 = vector.broadcast %cst_1 : f32 to vector<1x24xf32>
    %12 = arith.select %9, %10, %11 : vector<1x24xi1>, vector<1x24xf32>
    %cst_2 = arith.constant 0.111111112 : f32
    %13 = vector.broadcast %cst_2 : f32 to vector<1x24xf32>
    %14 = arith.select %7, %13, %12 : vector<1x24xi1>, vector<1x24xf32>
    %cst_3 = arith.constant 2.500000e-01 : f32
    %15 = vector.broadcast %cst_3 : f32 to vector<1x24xf32>
    %16 = arith.select %5, %15, %14 : vector<1x24xi1>, vector<1x24xf32>
    %c3_i32_4 = arith.constant 3 : i32
    %17 = vector.broadcast %c3_i32_4 : i32 to vector<1x24xi32>
    %18 = arith.cmpi slt, %0, %17 : vector<1x24xi32>
    %c12_i32 = arith.constant 12 : i32
    %19 = vector.broadcast %c12_i32 : i32 to vector<1x24xi32>
    %20 = arith.cmpi sge, %0, %19 : vector<1x24xi32>
    %c15_i32 = arith.constant 15 : i32
    %21 = vector.broadcast %c15_i32 : i32 to vector<1x24xi32>
    %22 = arith.cmpi slt, %0, %21 : vector<1x24xi32>
    %23 = arith.andi %20, %22 : vector<1x24xi1>
    %24 = arith.ori %18, %23 : vector<1x24xi1>
    %25 = arith.extui %24 : vector<1x24xi1> to vector<1x24xi32>
    %26 = arith.sitofp %25 : vector<1x24xi32> to vector<1x24xf32>
    %c10_i32 = arith.constant 10 : i32
    %27 = vector.broadcast %c10_i32 : i32 to vector<1x24xi32>
    %28 = arith.cmpi slt, %0, %27 : vector<1x24xi32>
    %29 = arith.extui %28 : vector<1x24xi1> to vector<1x24xi32>
    %30 = arith.sitofp %29 : vector<1x24xi32> to vector<1x24xf32>
    %c12_i32_5 = arith.constant 12 : i32
    %31 = vector.broadcast %c12_i32_5 : i32 to vector<1x24xi32>
    %32 = arith.cmpi sge, %0, %31 : vector<1x24xi32>
    %c22_i32 = arith.constant 22 : i32
    %33 = vector.broadcast %c22_i32 : i32 to vector<1x24xi32>
    %34 = arith.cmpi slt, %0, %33 : vector<1x24xi32>
    %35 = arith.andi %32, %34 : vector<1x24xi1>
    %36 = arith.extui %35 : vector<1x24xi1> to vector<1x24xi32>
    %37 = arith.sitofp %36 : vector<1x24xi32> to vector<1x24xf32>
    %c10_i32_6 = arith.constant 10 : i32
    %38 = vector.broadcast %c10_i32_6 : i32 to vector<1x24xi32>
    %39 = arith.cmpi eq, %0, %38 : vector<1x24xi32>
    %40 = arith.extui %39 : vector<1x24xi1> to vector<1x24xi32>
    %41 = arith.sitofp %40 : vector<1x24xi32> to vector<1x24xf32>
    %c11_i32 = arith.constant 11 : i32
    %42 = vector.broadcast %c11_i32 : i32 to vector<1x24xi32>
    %43 = arith.cmpi eq, %0, %42 : vector<1x24xi32>
    %44 = arith.extui %43 : vector<1x24xi1> to vector<1x24xi32>
    %45 = arith.sitofp %44 : vector<1x24xi32> to vector<1x24xf32>
    %46 = tpu.iota {dimensions = array<i32: 1>} : vector<8x64xi32>
    %47 = tpu.iota {dimensions = array<i32: 0>} : vector<8x64xi32>
    %c8_i32_7 = arith.constant 8 : i32
    %48 = vector.broadcast %c8_i32_7 : i32 to vector<8x64xi32>
    %49 = arith.muli %47, %48 : vector<8x64xi32>
    %50 = arith.cmpi sge, %46, %49 : vector<8x64xi32>
    %c1_i32 = arith.constant 1 : i32
    %51 = vector.broadcast %c1_i32 : i32 to vector<8x64xi32>
    %52 = arith.addi %47, %51 : vector<8x64xi32>
    %c8_i32_8 = arith.constant 8 : i32
    %53 = vector.broadcast %c8_i32_8 : i32 to vector<8x64xi32>
    %54 = arith.muli %52, %53 : vector<8x64xi32>
    %55 = arith.cmpi slt, %46, %54 : vector<8x64xi32>
    %56 = arith.andi %50, %55 : vector<8x64xi1>
    %57 = arith.extui %56 : vector<8x64xi1> to vector<8x64xi32>
    %58 = arith.sitofp %57 : vector<8x64xi32> to vector<8x64xf32>
    %59 = tpu.iota {dimensions = array<i32: 0>} : vector<64x8xi32>
    %60 = tpu.iota {dimensions = array<i32: 1>} : vector<64x8xi32>
    %c8_i32_9 = arith.constant 8 : i32
    %61 = vector.broadcast %c8_i32_9 : i32 to vector<64x8xi32>
    %62 = arith.muli %60, %61 : vector<64x8xi32>
    %63 = arith.cmpi sge, %59, %62 : vector<64x8xi32>
    %c1_i32_10 = arith.constant 1 : i32
    %64 = vector.broadcast %c1_i32_10 : i32 to vector<64x8xi32>
    %65 = arith.addi %60, %64 : vector<64x8xi32>
    %c8_i32_11 = arith.constant 8 : i32
    %66 = vector.broadcast %c8_i32_11 : i32 to vector<64x8xi32>
    %67 = arith.muli %65, %66 : vector<64x8xi32>
    %68 = arith.cmpi slt, %59, %67 : vector<64x8xi32>
    %69 = arith.andi %63, %68 : vector<64x8xi1>
    %70 = arith.extui %69 : vector<64x8xi1> to vector<64x8xi32>
    %71 = arith.sitofp %70 : vector<64x8xi32> to vector<64x8xf32>
    %72 = tpu.iota {dimensions = array<i32: 0>} : vector<24x4xi32>
    %73 = tpu.iota {dimensions = array<i32: 1>} : vector<24x4xi32>
    %c0_i32 = arith.constant 0 : i32
    %74 = vector.broadcast %c0_i32 : i32 to vector<24x4xi32>
    %75 = arith.cmpi eq, %73, %74 : vector<24x4xi32>
    %c12_i32_12 = arith.constant 12 : i32
    %76 = vector.broadcast %c12_i32_12 : i32 to vector<24x4xi32>
    %77 = arith.cmpi sge, %72, %76 : vector<24x4xi32>
    %78 = arith.andi %75, %77 : vector<24x4xi1>
    %c22_i32_13 = arith.constant 22 : i32
    %79 = vector.broadcast %c22_i32_13 : i32 to vector<24x4xi32>
    %80 = arith.cmpi slt, %72, %79 : vector<24x4xi32>
    %81 = arith.andi %78, %80 : vector<24x4xi1>
    %c1_i32_14 = arith.constant 1 : i32
    %82 = vector.broadcast %c1_i32_14 : i32 to vector<24x4xi32>
    %83 = arith.cmpi eq, %73, %82 : vector<24x4xi32>
    %c12_i32_15 = arith.constant 12 : i32
    %84 = vector.broadcast %c12_i32_15 : i32 to vector<24x4xi32>
    %85 = arith.cmpi sge, %72, %84 : vector<24x4xi32>
    %86 = arith.andi %83, %85 : vector<24x4xi1>
    %c15_i32_16 = arith.constant 15 : i32
    %87 = vector.broadcast %c15_i32_16 : i32 to vector<24x4xi32>
    %88 = arith.cmpi slt, %72, %87 : vector<24x4xi32>
    %89 = arith.andi %86, %88 : vector<24x4xi1>
    %90 = arith.ori %81, %89 : vector<24x4xi1>
    %c2_i32 = arith.constant 2 : i32
    %91 = vector.broadcast %c2_i32 : i32 to vector<24x4xi32>
    %92 = arith.cmpi eq, %73, %91 : vector<24x4xi32>
    %c10_i32_17 = arith.constant 10 : i32
    %93 = vector.broadcast %c10_i32_17 : i32 to vector<24x4xi32>
    %94 = arith.cmpi slt, %72, %93 : vector<24x4xi32>
    %95 = arith.andi %92, %94 : vector<24x4xi1>
    %96 = arith.ori %90, %95 : vector<24x4xi1>
    %97 = arith.extui %96 : vector<24x4xi1> to vector<24x4xi32>
    %98 = arith.sitofp %97 : vector<24x4xi32> to vector<24x4xf32>
    %c0 = arith.constant 0 : index
    %c0_18 = arith.constant 0 : index
    %99 = vector.load %arg3[%c0, %c0_18] : memref<64x1xf32, #tpu.memory_space<vmem>>, vector<64x1xf32>
    %c0_19 = arith.constant 0 : index
    %c0_20 = arith.constant 0 : index
    %100 = vector.load %arg4[%c0_19, %c0_20] : memref<8x8xf32, #tpu.memory_space<vmem>>, vector<8x8xf32>
    %101 = vector.extract_strided_slice %100 {offsets = [0, 0], sizes = [8, 1], strides = [1, 1]} : vector<8x8xf32> to vector<8x1xf32>
    %102 = vector.extract_strided_slice %100 {offsets = [0, 1], sizes = [8, 1], strides = [1, 1]} : vector<8x8xf32> to vector<8x1xf32>
    %103 = vector.extract_strided_slice %100 {offsets = [0, 2], sizes = [8, 1], strides = [1, 1]} : vector<8x8xf32> to vector<8x1xf32>
    %104 = vector.extract_strided_slice %100 {offsets = [0, 3], sizes = [8, 1], strides = [1, 1]} : vector<8x8xf32> to vector<8x1xf32>
    %105 = vector.extract_strided_slice %100 {offsets = [0, 4], sizes = [8, 1], strides = [1, 1]} : vector<8x8xf32> to vector<8x1xf32>
    %cst_21 = arith.constant 1.000000e+00 : f32
    %106 = vector.broadcast %cst_21 : f32 to vector<8x1xf32>
    %107 = arith.maximumf %105, %106 : vector<8x1xf32>
    %108 = tpu.reciprocal %107 {approx = true} : vector<8x1xf32> -> vector<8x1xf32>
    %109 = math.absf %101 : vector<8x1xf32>
    %cst_22 = arith.constant 0.000000e+00 : f32
    %110 = vector.broadcast %cst_22 : f32 to vector<8x1xf32>
    %111 = arith.subf %110, %109 : vector<8x1xf32>
    %112 = math.exp %111 : vector<8x1xf32>
    %cst_23 = arith.constant 1.000000e+00 : f32
    %113 = vector.broadcast %cst_23 : f32 to vector<8x1xf32>
    %114 = arith.addf %113, %112 : vector<8x1xf32>
    %cst_24 = arith.constant 1.000000e+00 : f32
    %115 = vector.broadcast %cst_24 : f32 to vector<8x1xf32>
    %116 = arith.divf %115, %114 : vector<8x1xf32>
    %cst_25 = arith.constant 0.000000e+00 : f32
    %117 = vector.broadcast %cst_25 : f32 to vector<8x1xf32>
    %118 = arith.cmpf oge, %101, %117 : vector<8x1xf32>
    %119 = arith.mulf %112, %116 : vector<8x1xf32>
    %120 = arith.select %118, %116, %119 : vector<8x1xi1>, vector<8x1xf32>
    %cst_26 = arith.constant 0.000000e+00 : f32
    %121 = vector.broadcast %cst_26 : f32 to vector<8x1xf32>
    %122 = arith.cmpf oge, %101, %121 : vector<8x1xf32>
    %123 = arith.mulf %112, %116 : vector<8x1xf32>
    %124 = arith.select %122, %123, %116 : vector<8x1xi1>, vector<8x1xf32>
    %125 = math.sqrt %120 : vector<8x1xf32>
    %126 = math.sqrt %124 : vector<8x1xf32>
    %127 = math.absf %102 : vector<8x1xf32>
    %cst_27 = arith.constant 0.000000e+00 : f32
    %128 = vector.broadcast %cst_27 : f32 to vector<8x1xf32>
    %129 = arith.subf %128, %127 : vector<8x1xf32>
    %130 = math.exp %129 : vector<8x1xf32>
    %cst_28 = arith.constant 1.000000e+00 : f32
    %131 = vector.broadcast %cst_28 : f32 to vector<8x1xf32>
    %132 = arith.addf %131, %130 : vector<8x1xf32>
    %cst_29 = arith.constant 1.000000e+00 : f32
    %133 = vector.broadcast %cst_29 : f32 to vector<8x1xf32>
    %134 = arith.divf %133, %132 : vector<8x1xf32>
    %cst_30 = arith.constant 0.000000e+00 : f32
    %135 = vector.broadcast %cst_30 : f32 to vector<8x1xf32>
    %136 = arith.cmpf oge, %102, %135 : vector<8x1xf32>
    %137 = arith.mulf %130, %134 : vector<8x1xf32>
    %138 = arith.select %136, %134, %137 : vector<8x1xi1>, vector<8x1xf32>
    %cst_31 = arith.constant 0.000000e+00 : f32
    %139 = vector.broadcast %cst_31 : f32 to vector<8x1xf32>
    %140 = arith.cmpf oge, %102, %139 : vector<8x1xf32>
    %141 = arith.mulf %130, %134 : vector<8x1xf32>
    %142 = arith.select %140, %141, %134 : vector<8x1xi1>, vector<8x1xf32>
    %c0_32 = arith.constant 0 : index
    %c0_33 = arith.constant 0 : index
    %143 = vector.load %arg2[%c0_32, %c0_33] : memref<64x24xf32, #tpu.memory_space<vmem>>, vector<64x24xf32>
    %144 = vector.broadcast %16 : vector<1x24xf32> to vector<64x24xf32>
    %145 = arith.mulf %143, %144 : vector<64x24xf32>
    %146 = vector.broadcast %99 : vector<64x1xf32> to vector<64x24xf32>
    %147 = arith.mulf %145, %146 : vector<64x24xf32>
    %cst_34 = arith.constant dense<0.000000e+00> : vector<8x24xf32>
    %148 = tpu.matmul %58, %147, %cst_34 {dimension_numbers = #tpu.dot_dimension_numbers<[1], [0], [0], [1], [0, 0, 1, 1], [], []>} : vector<8x64xf32>, vector<64x24xf32>, vector<8x24xf32> -> vector<8x24xf32>
    %149 = vector.broadcast %108 : vector<8x1xf32> to vector<8x24xf32>
    %150 = arith.mulf %148, %149 : vector<8x24xf32>
    %cst_35 = arith.constant dense<0.000000e+00> : vector<64x24xf32>
    %151 = tpu.matmul %71, %150, %cst_35 {dimension_numbers = #tpu.dot_dimension_numbers<[1], [0], [0], [1], [0, 0, 1, 1], [], []>} : vector<64x8xf32>, vector<8x24xf32>, vector<64x24xf32> -> vector<64x24xf32>
    %152 = vector.broadcast %26 : vector<1x24xf32> to vector<64x24xf32>
    %153 = arith.mulf %151, %152 : vector<64x24xf32>
    %154 = arith.subf %147, %153 : vector<64x24xf32>
    %155 = vector.broadcast %99 : vector<64x1xf32> to vector<64x24xf32>
    %156 = arith.mulf %154, %155 : vector<64x24xf32>
    %157 = vector.broadcast %126 : vector<8x1xf32> to vector<8x24xf32>
    %158 = vector.broadcast %30 : vector<1x24xf32> to vector<8x24xf32>
    %159 = arith.mulf %157, %158 : vector<8x24xf32>
    %160 = vector.broadcast %125 : vector<8x1xf32> to vector<8x24xf32>
    %161 = vector.broadcast %37 : vector<1x24xf32> to vector<8x24xf32>
    %162 = arith.mulf %160, %161 : vector<8x24xf32>
    %163 = arith.addf %159, %162 : vector<8x24xf32>
    %164 = vector.broadcast %103 : vector<8x1xf32> to vector<8x24xf32>
    %165 = vector.broadcast %41 : vector<1x24xf32> to vector<8x24xf32>
    %166 = arith.mulf %164, %165 : vector<8x24xf32>
    %167 = arith.addf %163, %166 : vector<8x24xf32>
    %168 = vector.broadcast %45 : vector<1x24xf32> to vector<8x24xf32>
    %169 = arith.addf %167, %168 : vector<8x24xf32>
    %cst_36 = arith.constant dense<0.000000e+00> : vector<64x24xf32>
    %170 = tpu.matmul %71, %169, %cst_36 {dimension_numbers = #tpu.dot_dimension_numbers<[1], [0], [0], [1], [0, 0, 1, 1], [], []>} : vector<64x8xf32>, vector<8x24xf32>, vector<64x24xf32> -> vector<64x24xf32>
    %171 = arith.mulf %156, %170 : vector<64x24xf32>
    %c0_37 = arith.constant 0 : index
    %c0_38 = arith.constant 0 : index
    %172 = vector.load %arg5[%c0_37, %c0_38] : memref<24x33xf32, #tpu.memory_space<vmem>>, vector<24x33xf32>
    %cst_39 = arith.constant dense<0.000000e+00> : vector<64x33xf32>
    %173 = tpu.matmul %171, %172, %cst_39 {dimension_numbers = #tpu.dot_dimension_numbers<[1], [0], [0], [1], [0, 0, 1, 1], [], []>} : vector<64x24xf32>, vector<24x33xf32>, vector<64x33xf32> -> vector<64x33xf32>
    %cst_40 = arith.constant 0.000000e+00 : f32
    %174 = vector.broadcast %cst_40 : f32 to vector<64x33xf32>
    %175 = arith.maximumf %173, %174 : vector<64x33xf32>
    %c0_41 = arith.constant 0 : index
    %c0_42 = arith.constant 0 : index
    %176 = vector.load %arg6[%c0_41, %c0_42] : memref<33x24xf32, #tpu.memory_space<vmem>>, vector<33x24xf32>
    %cst_43 = arith.constant dense<0.000000e+00> : vector<64x24xf32>
    %177 = tpu.matmul %175, %176, %cst_43 {dimension_numbers = #tpu.dot_dimension_numbers<[1], [0], [0], [1], [0, 0, 1, 1], [], []>} : vector<64x33xf32>, vector<33x24xf32>, vector<64x24xf32> -> vector<64x24xf32>
    %178 = vector.broadcast %99 : vector<64x1xf32> to vector<64x24xf32>
    %179 = arith.mulf %177, %178 : vector<64x24xf32>
    %180 = vector.broadcast %37 : vector<1x24xf32> to vector<64x24xf32>
    %181 = arith.mulf %156, %180 : vector<64x24xf32>
    %182 = arith.subf %181, %179 : vector<64x24xf32>
    %183 = vector.broadcast %30 : vector<1x24xf32> to vector<64x24xf32>
    %184 = arith.mulf %156, %183 : vector<64x24xf32>
    %185 = arith.addf %184, %182 : vector<64x24xf32>
    %186 = arith.mulf %185, %185 : vector<64x24xf32>
    %cst_44 = arith.constant dense<0.000000e+00> : vector<64x4xf32>
    %187 = tpu.matmul %186, %98, %cst_44 {dimension_numbers = #tpu.dot_dimension_numbers<[1], [0], [0], [1], [0, 0, 1, 1], [], []>} : vector<64x24xf32>, vector<24x4xf32>, vector<64x4xf32> -> vector<64x4xf32>
    %cst_45 = arith.constant dense<0.000000e+00> : vector<8x4xf32>
    %188 = tpu.matmul %58, %187, %cst_45 {dimension_numbers = #tpu.dot_dimension_numbers<[1], [0], [0], [1], [0, 0, 1, 1], [], []>} : vector<8x64xf32>, vector<64x4xf32>, vector<8x4xf32> -> vector<8x4xf32>
    %189 = vector.extract_strided_slice %188 {offsets = [0, 0], sizes = [8, 1], strides = [1, 1]} : vector<8x4xf32> to vector<8x1xf32>
    %190 = vector.extract_strided_slice %188 {offsets = [0, 1], sizes = [8, 1], strides = [1, 1]} : vector<8x4xf32> to vector<8x1xf32>
    %191 = vector.extract_strided_slice %188 {offsets = [0, 2], sizes = [8, 1], strides = [1, 1]} : vector<8x4xf32> to vector<8x1xf32>
    %cst_46 = arith.constant 6.250000e-03 : f32
    %192 = vector.broadcast %cst_46 : f32 to vector<8x1xf32>
    %193 = arith.mulf %192, %189 : vector<8x1xf32>
    %194 = math.log %138 : vector<8x1xf32>
    %cst_47 = arith.constant 5.000000e-01 : f32
    %195 = vector.broadcast %cst_47 : f32 to vector<8x1xf32>
    %196 = arith.mulf %195, %194 : vector<8x1xf32>
    %cst_48 = arith.constant 0.000000e+00 : f32
    %197 = vector.broadcast %cst_48 : f32 to vector<8x1xf32>
    %198 = arith.subf %197, %196 : vector<8x1xf32>
    %cst_49 = arith.constant 5.000000e-01 : f32
    %199 = vector.broadcast %cst_49 : f32 to vector<8x1xf32>
    %200 = arith.mulf %199, %138 : vector<8x1xf32>
    %201 = arith.addf %198, %200 : vector<8x1xf32>
    %cst_50 = arith.constant 5.000000e-01 : f32
    %202 = vector.broadcast %cst_50 : f32 to vector<8x1xf32>
    %203 = arith.subf %201, %202 : vector<8x1xf32>
    %cst_51 = arith.constant 7.000000e+00 : f32
    %204 = vector.broadcast %cst_51 : f32 to vector<8x1xf32>
    %205 = arith.mulf %105, %204 : vector<8x1xf32>
    %cst_52 = arith.constant 1.000000e+00 : f32
    %206 = vector.broadcast %cst_52 : f32 to vector<8x1xf32>
    %207 = arith.subf %105, %206 : vector<8x1xf32>
    %cst_53 = arith.constant 3.000000e+00 : f32
    %208 = vector.broadcast %cst_53 : f32 to vector<8x1xf32>
    %209 = arith.mulf %207, %208 : vector<8x1xf32>
    %210 = arith.addf %205, %209 : vector<8x1xf32>
    %cst_54 = arith.constant 0.000000e+00 : f32
    %211 = vector.broadcast %cst_54 : f32 to vector<8x1xf32>
    %212 = arith.maximumf %210, %211 : vector<8x1xf32>
    %213 = arith.mulf %203, %212 : vector<8x1xf32>
    %cst_55 = arith.constant 5.000000e-01 : f32
    %214 = vector.broadcast %cst_55 : f32 to vector<8x1xf32>
    %215 = arith.mulf %214, %142 : vector<8x1xf32>
    %216 = arith.mulf %215, %191 : vector<8x1xf32>
    %217 = arith.addf %213, %216 : vector<8x1xf32>
    %cst_56 = arith.constant 5.000000e-01 : f32
    %218 = vector.broadcast %cst_56 : f32 to vector<8x1xf32>
    %219 = arith.cmpf ogt, %104, %218 : vector<8x1xf32>
    %cst_57 = arith.constant 0.000000e+00 : f32
    %220 = vector.broadcast %cst_57 : f32 to vector<8x1xf32>
    %221 = arith.select %219, %220, %193 : vector<8x1xi1>, vector<8x1xf32>
    %222 = arith.addf %217, %221 : vector<8x1xf32>
    %223 = vector.shape_cast %222 : vector<8x1xf32> to vector<8x1xf32>
    %224 = vector.broadcast %223 : vector<8x1xf32> to vector<8x128xf32>
    %c0_58 = arith.constant 0 : index
    %c0_59 = arith.constant 0 : index
    %225 = vector.load %arg7[%c0_58, %c0_59] : memref<8x128xf32, #tpu.memory_space<vmem>>, vector<8x128xf32>
    tpu.vector_store %arg7[%c0_58, %c0_59], %224 {strides = array<i32>} : memref<8x128xf32, #tpu.memory_space<vmem>>, vector<8x128xf32>,
    %226 = arith.index_cast %arg0 : i32 to index
    %227 = memref.load %arg1[%226] : memref<2xi32, #tpu.memory_space<smem>>
    %c0_i32_60 = arith.constant 0 : i32
    %228 = arith.cmpi sgt, %227, %c0_i32_60 : i32
    %229 = arith.extui %228 : i1 to i32
    %c0_i32_61 = arith.constant 0 : i32
    %230 = arith.cmpi ne, %229, %c0_i32_61 : i32
    scf.if %230 {
      %231 = tpu.iota {dimensions = array<i32: 0>} : vector<24x8xi32>
      %232 = tpu.iota {dimensions = array<i32: 1>} : vector<24x8xi32>
      %c5_i32 = arith.constant 5 : i32
      %233 = vector.broadcast %c5_i32 : i32 to vector<24x8xi32>
      %234 = arith.cmpi eq, %232, %233 : vector<24x8xi32>
      %c6_i32 = arith.constant 6 : i32
      %235 = vector.broadcast %c6_i32 : i32 to vector<24x8xi32>
      %236 = arith.cmpi eq, %232, %235 : vector<24x8xi32>
      %cst_62 = arith.constant 4.000000e+00 : f32
      %cst_63 = arith.constant 4.000000e+00 : f32
      %237 = vector.broadcast %cst_62 : f32 to vector<24x8xf32>
      %238 = vector.broadcast %cst_63 : f32 to vector<24x8xf32>
      %239 = arith.select %236, %237, %238 : vector<24x8xi1>, vector<24x8xf32>
      %cst_64 = arith.constant 9.000000e+00 : f32
      %240 = vector.broadcast %cst_64 : f32 to vector<24x8xf32>
      %241 = arith.select %234, %240, %239 : vector<24x8xi1>, vector<24x8xf32>
      %c7_i32 = arith.constant 7 : i32
      %242 = vector.broadcast %c7_i32 : i32 to vector<24x8xi32>
      %243 = arith.cmpi slt, %232, %242 : vector<24x8xi32>
      %c3_i32_65 = arith.constant 3 : i32
      %244 = vector.broadcast %c3_i32_65 : i32 to vector<24x8xi32>
      %245 = arith.addi %232, %244 : vector<24x8xi32>
      %246 = arith.cmpi eq, %231, %245 : vector<24x8xi32>
      %247 = arith.andi %243, %246 : vector<24x8xi1>
      %cst_66 = arith.constant 0.000000e+00 : f32
      %248 = vector.broadcast %cst_66 : f32 to vector<24x8xf32>
      %249 = arith.select %247, %241, %248 : vector<24x8xi1>, vector<24x8xf32>
      %c7_i32_67 = arith.constant 7 : i32
      %250 = vector.broadcast %c7_i32_67 : i32 to vector<24x8xi32>
      %251 = arith.cmpi slt, %232, %250 : vector<24x8xi32>
      %c3_i32_68 = arith.constant 3 : i32
      %252 = vector.broadcast %c3_i32_68 : i32 to vector<24x8xi32>
      %253 = arith.addi %232, %252 : vector<24x8xi32>
      %c12_i32_69 = arith.constant 12 : i32
      %254 = vector.broadcast %c12_i32_69 : i32 to vector<24x8xi32>
      %255 = arith.addi %253, %254 : vector<24x8xi32>
      %256 = arith.cmpi eq, %231, %255 : vector<24x8xi32>
      %257 = arith.andi %251, %256 : vector<24x8xi1>
      %258 = arith.ori %247, %257 : vector<24x8xi1>
      %cst_70 = arith.constant 0.000000e+00 : f32
      %259 = vector.broadcast %cst_70 : f32 to vector<24x8xf32>
      %260 = arith.select %258, %241, %259 : vector<24x8xi1>, vector<24x8xf32>
      %261 = tpu.iota {dimensions = array<i32: 1>} : vector<1x8xi32>
      %c5_i32_71 = arith.constant 5 : i32
      %262 = vector.broadcast %c5_i32_71 : i32 to vector<1x8xi32>
      %263 = arith.cmpi slt, %261, %262 : vector<1x8xi32>
      %264 = arith.extui %263 : vector<1x8xi1> to vector<1x8xi32>
      %265 = arith.sitofp %264 : vector<1x8xi32> to vector<1x8xf32>
      %c5_i32_72 = arith.constant 5 : i32
      %266 = vector.broadcast %c5_i32_72 : i32 to vector<1x8xi32>
      %267 = arith.cmpi sge, %261, %266 : vector<1x8xi32>
      %c7_i32_73 = arith.constant 7 : i32
      %268 = vector.broadcast %c7_i32_73 : i32 to vector<1x8xi32>
      %269 = arith.cmpi slt, %261, %268 : vector<1x8xi32>
      %270 = arith.andi %267, %269 : vector<1x8xi1>
      %271 = arith.extui %270 : vector<1x8xi1> to vector<1x8xi32>
      %272 = arith.sitofp %271 : vector<1x8xi32> to vector<1x8xf32>
      %c5_i32_74 = arith.constant 5 : i32
      %273 = vector.broadcast %c5_i32_74 : i32 to vector<1x8xi32>
      %274 = arith.cmpi eq, %261, %273 : vector<1x8xi32>
      %c6_i32_75 = arith.constant 6 : i32
      %275 = vector.broadcast %c6_i32_75 : i32 to vector<1x8xi32>
      %276 = arith.cmpi eq, %261, %275 : vector<1x8xi32>
      %c5_i32_76 = arith.constant 5 : i32
      %277 = vector.broadcast %c5_i32_76 : i32 to vector<1x8xi32>
      %278 = arith.cmpi slt, %261, %277 : vector<1x8xi32>
      %cst_77 = arith.constant 4.000000e+00 : f32
      %cst_78 = arith.constant 1.000000e+00 : f32
      %279 = vector.broadcast %cst_77 : f32 to vector<1x8xf32>
      %280 = vector.broadcast %cst_78 : f32 to vector<1x8xf32>
      %281 = arith.select %278, %279, %280 : vector<1x8xi1>, vector<1x8xf32>
      %cst_79 = arith.constant 4.000000e+00 : f32
      %282 = vector.broadcast %cst_79 : f32 to vector<1x8xf32>
      %283 = arith.select %276, %282, %281 : vector<1x8xi1>, vector<1x8xf32>
      %cst_80 = arith.constant 9.000000e+00 : f32
      %284 = vector.broadcast %cst_80 : f32 to vector<1x8xf32>
      %285 = arith.select %274, %284, %283 : vector<1x8xi1>, vector<1x8xf32>
      %cst_81 = arith.constant 1.000000e+00 : f32
      %286 = vector.broadcast %cst_81 : f32 to vector<8x1xf32>
      %cst_82 = arith.constant -0.020833334 : f32
      %287 = vector.broadcast %cst_82 : f32 to vector<8x1xf32>
      %288 = arith.mulf %287, %190 : vector<8x1xf32>
      %cst_83 = arith.constant dense<0.000000e+00> : vector<64x8xf32>
      %289 = tpu.matmul %171, %260, %cst_83 {dimension_numbers = #tpu.dot_dimension_numbers<[1], [0], [0], [1], [0, 0, 1, 1], [], []>} : vector<64x24xf32>, vector<24x8xf32>, vector<64x8xf32> -> vector<64x8xf32>
      %cst_84 = arith.constant dense<0.000000e+00> : vector<64x8xf32>
      %290 = tpu.matmul %156, %249, %cst_84 {dimension_numbers = #tpu.dot_dimension_numbers<[1], [0], [0], [1], [0, 0, 1, 1], [], []>} : vector<64x24xf32>, vector<24x8xf32>, vector<64x8xf32> -> vector<64x8xf32>
      %cst_85 = arith.constant dense<0.000000e+00> : vector<64x1xf32>
      %291 = tpu.matmul %71, %125, %cst_85 {dimension_numbers = #tpu.dot_dimension_numbers<[1], [0], [0], [1], [0, 0, 1, 1], [], []>} : vector<64x8xf32>, vector<8x1xf32>, vector<64x1xf32> -> vector<64x1xf32>
      %cst_86 = arith.constant 1.000000e+00 : f32
      %292 = vector.broadcast %cst_86 : f32 to vector<1x8xf32>
      %293 = arith.subf %292, %265 : vector<1x8xf32>
      %294 = vector.broadcast %293 : vector<1x8xf32> to vector<64x8xf32>
      %295 = arith.mulf %294, %290 : vector<64x8xf32>
      %296 = vector.broadcast %265 : vector<1x8xf32> to vector<64x8xf32>
      %297 = arith.addf %296, %295 : vector<64x8xf32>
      %298 = arith.subf %297, %289 : vector<64x8xf32>
      %299 = vector.broadcast %291 : vector<64x1xf32> to vector<64x8xf32>
      %300 = vector.broadcast %285 : vector<1x8xf32> to vector<64x8xf32>
      %301 = arith.mulf %299, %300 : vector<64x8xf32>
      %302 = tpu.reciprocal %301 {approx = true} : vector<64x8xf32> -> vector<64x8xf32>
      %cst_87 = arith.constant 5.000000e-01 : f32
      %303 = vector.broadcast %cst_87 : f32 to vector<64x8xf32>
      %304 = arith.addf %298, %303 : vector<64x8xf32>
      %305 = arith.mulf %304, %302 : vector<64x8xf32>
      %cst_88 = arith.constant 0.707106769 : f32
      %306 = vector.broadcast %cst_88 : f32 to vector<64x8xf32>
      %307 = arith.mulf %305, %306 : vector<64x8xf32>
      %cst_89 = arith.constant 0.000000e+00 : f32
      %308 = vector.broadcast %cst_89 : f32 to vector<64x8xf32>
      %309 = arith.cmpf oge, %307, %308 : vector<64x8xf32>
      %cst_90 = arith.constant 1.000000e+00 : f32
      %cst_91 = arith.constant -1.000000e+00 : f32
      %310 = vector.broadcast %cst_90 : f32 to vector<64x8xf32>
      %311 = vector.broadcast %cst_91 : f32 to vector<64x8xf32>
      %312 = arith.select %309, %310, %311 : vector<64x8xi1>, vector<64x8xf32>
      %313 = math.absf %307 : vector<64x8xf32>
      %cst_92 = arith.constant 0.327591091 : f32
      %314 = vector.broadcast %cst_92 : f32 to vector<64x8xf32>
      %315 = arith.mulf %314, %313 : vector<64x8xf32>
      %cst_93 = arith.constant 1.000000e+00 : f32
      %316 = vector.broadcast %cst_93 : f32 to vector<64x8xf32>
      %317 = arith.addf %316, %315 : vector<64x8xf32>
      %318 = tpu.reciprocal %317 {approx = true} : vector<64x8xf32> -> vector<64x8xf32>
      %cst_94 = arith.constant 1.06140542 : f32
      %319 = vector.broadcast %cst_94 : f32 to vector<64x8xf32>
      %320 = arith.mulf %319, %318 : vector<64x8xf32>
      %cst_95 = arith.constant -1.45315206 : f32
      %321 = vector.broadcast %cst_95 : f32 to vector<64x8xf32>
      %322 = arith.addf %320, %321 : vector<64x8xf32>
      %323 = arith.mulf %322, %318 : vector<64x8xf32>
      %cst_96 = arith.constant 1.42141378 : f32
      %324 = vector.broadcast %cst_96 : f32 to vector<64x8xf32>
      %325 = arith.addf %323, %324 : vector<64x8xf32>
      %326 = arith.mulf %325, %318 : vector<64x8xf32>
      %cst_97 = arith.constant -0.284496725 : f32
      %327 = vector.broadcast %cst_97 : f32 to vector<64x8xf32>
      %328 = arith.addf %326, %327 : vector<64x8xf32>
      %329 = arith.mulf %328, %318 : vector<64x8xf32>
      %cst_98 = arith.constant 0.254829586 : f32
      %330 = vector.broadcast %cst_98 : f32 to vector<64x8xf32>
      %331 = arith.addf %329, %330 : vector<64x8xf32>
      %332 = arith.mulf %331, %318 : vector<64x8xf32>
      %cst_99 = arith.constant 0.000000e+00 : f32
      %333 = vector.broadcast %cst_99 : f32 to vector<64x8xf32>
      %334 = arith.subf %333, %313 : vector<64x8xf32>
      %335 = arith.mulf %334, %313 : vector<64x8xf32>
      %336 = math.exp %335 : vector<64x8xf32>
      %337 = arith.mulf %332, %336 : vector<64x8xf32>
      %cst_100 = arith.constant 1.000000e+00 : f32
      %338 = vector.broadcast %cst_100 : f32 to vector<64x8xf32>
      %339 = arith.subf %338, %337 : vector<64x8xf32>
      %340 = arith.mulf %312, %339 : vector<64x8xf32>
      %cst_101 = arith.constant 1.000000e+00 : f32
      %341 = vector.broadcast %cst_101 : f32 to vector<64x8xf32>
      %342 = arith.addf %341, %340 : vector<64x8xf32>
      %cst_102 = arith.constant 5.000000e-01 : f32
      %343 = vector.broadcast %cst_102 : f32 to vector<64x8xf32>
      %344 = arith.mulf %343, %342 : vector<64x8xf32>
      %cst_103 = arith.constant 5.000000e-01 : f32
      %345 = vector.broadcast %cst_103 : f32 to vector<64x8xf32>
      %346 = arith.subf %298, %345 : vector<64x8xf32>
      %347 = arith.mulf %346, %302 : vector<64x8xf32>
      %cst_104 = arith.constant 0.707106769 : f32
      %348 = vector.broadcast %cst_104 : f32 to vector<64x8xf32>
      %349 = arith.mulf %347, %348 : vector<64x8xf32>
      %cst_105 = arith.constant 0.000000e+00 : f32
      %350 = vector.broadcast %cst_105 : f32 to vector<64x8xf32>
      %351 = arith.cmpf oge, %349, %350 : vector<64x8xf32>
      %cst_106 = arith.constant 1.000000e+00 : f32
      %cst_107 = arith.constant -1.000000e+00 : f32
      %352 = vector.broadcast %cst_106 : f32 to vector<64x8xf32>
      %353 = vector.broadcast %cst_107 : f32 to vector<64x8xf32>
      %354 = arith.select %351, %352, %353 : vector<64x8xi1>, vector<64x8xf32>
      %355 = math.absf %349 : vector<64x8xf32>
      %cst_108 = arith.constant 0.327591091 : f32
      %356 = vector.broadcast %cst_108 : f32 to vector<64x8xf32>
      %357 = arith.mulf %356, %355 : vector<64x8xf32>
      %cst_109 = arith.constant 1.000000e+00 : f32
      %358 = vector.broadcast %cst_109 : f32 to vector<64x8xf32>
      %359 = arith.addf %358, %357 : vector<64x8xf32>
      %360 = tpu.reciprocal %359 {approx = true} : vector<64x8xf32> -> vector<64x8xf32>
      %cst_110 = arith.constant 1.06140542 : f32
      %361 = vector.broadcast %cst_110 : f32 to vector<64x8xf32>
      %362 = arith.mulf %361, %360 : vector<64x8xf32>
      %cst_111 = arith.constant -1.45315206 : f32
      %363 = vector.broadcast %cst_111 : f32 to vector<64x8xf32>
      %364 = arith.addf %362, %363 : vector<64x8xf32>
      %365 = arith.mulf %364, %360 : vector<64x8xf32>
      %cst_112 = arith.constant 1.42141378 : f32
      %366 = vector.broadcast %cst_112 : f32 to vector<64x8xf32>
      %367 = arith.addf %365, %366 : vector<64x8xf32>
      %368 = arith.mulf %367, %360 : vector<64x8xf32>
      %cst_113 = arith.constant -0.284496725 : f32
      %369 = vector.broadcast %cst_113 : f32 to vector<64x8xf32>
      %370 = arith.addf %368, %369 : vector<64x8xf32>
      %371 = arith.mulf %370, %360 : vector<64x8xf32>
      %cst_114 = arith.constant 0.254829586 : f32
      %372 = vector.broadcast %cst_114 : f32 to vector<64x8xf32>
      %373 = arith.addf %371, %372 : vector<64x8xf32>
      %374 = arith.mulf %373, %360 : vector<64x8xf32>
      %cst_115 = arith.constant 0.000000e+00 : f32
      %375 = vector.broadcast %cst_115 : f32 to vector<64x8xf32>
      %376 = arith.subf %375, %355 : vector<64x8xf32>
      %377 = arith.mulf %376, %355 : vector<64x8xf32>
      %378 = math.exp %377 : vector<64x8xf32>
      %379 = arith.mulf %374, %378 : vector<64x8xf32>
      %cst_116 = arith.constant 1.000000e+00 : f32
      %380 = vector.broadcast %cst_116 : f32 to vector<64x8xf32>
      %381 = arith.subf %380, %379 : vector<64x8xf32>
      %382 = arith.mulf %354, %381 : vector<64x8xf32>
      %cst_117 = arith.constant 1.000000e+00 : f32
      %383 = vector.broadcast %cst_117 : f32 to vector<64x8xf32>
      %384 = arith.addf %383, %382 : vector<64x8xf32>
      %cst_118 = arith.constant 5.000000e-01 : f32
      %385 = vector.broadcast %cst_118 : f32 to vector<64x8xf32>
      %386 = arith.mulf %385, %384 : vector<64x8xf32>
      %387 = arith.subf %344, %386 : vector<64x8xf32>
      %cst_119 = arith.constant 0.000000e+00 : f32
      %388 = vector.broadcast %cst_119 : f32 to vector<64x8xf32>
      %389 = arith.maximumf %387, %388 : vector<64x8xf32>
      %cst_120 = arith.constant 1.000000e-10 : f32
      %390 = vector.broadcast %cst_120 : f32 to vector<64x8xf32>
      %391 = arith.addf %389, %390 : vector<64x8xf32>
      %392 = math.log %391 : vector<64x8xf32>
      %393 = vector.broadcast %265 : vector<1x8xf32> to vector<64x8xf32>
      %394 = arith.mulf %391, %393 : vector<64x8xf32>
      %cst_121 = arith.constant dense<0.000000e+00> : vector<64x1xf32>
      %395 = tpu.matmul %394, %286, %cst_121 {dimension_numbers = #tpu.dot_dimension_numbers<[1], [0], [0], [1], [0, 0, 1, 1], [], []>} : vector<64x8xf32>, vector<8x1xf32>, vector<64x1xf32> -> vector<64x1xf32>
      %396 = math.log %395 : vector<64x1xf32>
      %397 = vector.broadcast %265 : vector<1x8xf32> to vector<64x8xf32>
      %398 = arith.mulf %397, %290 : vector<64x8xf32>
      %399 = vector.broadcast %272 : vector<1x8xf32> to vector<64x8xf32>
      %400 = vector.broadcast %99 : vector<64x1xf32> to vector<64x8xf32>
      %401 = arith.mulf %399, %400 : vector<64x8xf32>
      %402 = arith.addf %398, %401 : vector<64x8xf32>
      %403 = vector.broadcast %396 : vector<64x1xf32> to vector<64x8xf32>
      %404 = vector.broadcast %265 : vector<1x8xf32> to vector<64x8xf32>
      %405 = arith.mulf %403, %404 : vector<64x8xf32>
      %406 = arith.subf %392, %405 : vector<64x8xf32>
      %407 = arith.mulf %406, %402 : vector<64x8xf32>
      %cst_122 = arith.constant dense<0.000000e+00> : vector<8x8xf32>
      %408 = tpu.matmul %58, %407, %cst_122 {dimension_numbers = #tpu.dot_dimension_numbers<[1], [0], [0], [1], [0, 0, 1, 1], [], []>} : vector<8x64xf32>, vector<64x8xf32>, vector<8x8xf32> -> vector<8x8xf32>
      %cst_123 = arith.constant dense<0.000000e+00> : vector<8x1xf32>
      %409 = tpu.matmul %408, %286, %cst_123 {dimension_numbers = #tpu.dot_dimension_numbers<[1], [0], [0], [1], [0, 0, 1, 1], [], []>} : vector<8x8xf32>, vector<8x1xf32>, vector<8x1xf32> -> vector<8x1xf32>
      %410 = arith.addf %288, %409 : vector<8x1xf32>
      %cst_124 = arith.constant 0.000000e+00 : f32
      %411 = vector.broadcast %cst_124 : f32 to vector<8x1xf32>
      %412 = arith.subf %411, %410 : vector<8x1xf32>
      %cst_125 = arith.constant 5.000000e-01 : f32
      %413 = vector.broadcast %cst_125 : f32 to vector<8x1xf32>
      %414 = arith.cmpf ogt, %104, %413 : vector<8x1xf32>
      %cst_126 = arith.constant 0.000000e+00 : f32
      %415 = vector.broadcast %cst_126 : f32 to vector<8x1xf32>
      %416 = arith.select %414, %412, %415 : vector<8x1xi1>, vector<8x1xf32>
      %c0_127 = arith.constant 0 : index
      %c0_128 = arith.constant 0 : index
      %417 = vector.load %arg7[%c0_127, %c0_128] : memref<8x128xf32, #tpu.memory_space<vmem>>, vector<8x128xf32>
      %418 = vector.shape_cast %416 : vector<8x1xf32> to vector<8x1xf32>
      %419 = vector.broadcast %418 : vector<8x1xf32> to vector<8x128xf32>
      %420 = arith.addf %417, %419 : vector<8x128xf32>
      %c0_129 = arith.constant 0 : index
      %c0_130 = arith.constant 0 : index
      %421 = vector.load %arg7[%c0_129, %c0_130] : memref<8x128xf32, #tpu.memory_space<vmem>>, vector<8x128xf32>
      tpu.vector_store %arg7[%c0_129, %c0_130], %420 {strides = array<i32>} : memref<8x128xf32, #tpu.memory_space<vmem>>, vector<8x128xf32>,
    } else {
    }
    return
  }
  func.func @transform_0(%arg0: i32, %arg1: memref<2xi32, #tpu.memory_space<smem>>) -> (i32, i32) {
    %c0_i32 = arith.constant 0 : i32
    %c0_i32_0 = arith.constant 0 : i32
    return %arg0, %c0_i32 : i32, i32
  }
  func.func @transform_1(%arg0: i32, %arg1: memref<2xi32, #tpu.memory_space<smem>>) -> (i32, i32) {
    %c0_i32 = arith.constant 0 : i32
    %c0_i32_0 = arith.constant 0 : i32
    return %arg0, %c0_i32 : i32, i32
  }
  func.func @transform_2(%arg0: i32, %arg1: memref<2xi32, #tpu.memory_space<smem>>) -> (i32, i32) {
    %c0_i32 = arith.constant 0 : i32
    %c0_i32_0 = arith.constant 0 : i32
    return %arg0, %c0_i32 : i32, i32
  }
  func.func @transform_3(%arg0: i32, %arg1: memref<2xi32, #tpu.memory_space<smem>>) -> (i32, i32) {
    %c0_i32 = arith.constant 0 : i32
    %c0_i32_0 = arith.constant 0 : i32
    %c0_i32_1 = arith.constant 0 : i32
    return %c0_i32, %c0_i32_0 : i32, i32
  }
  func.func @transform_4(%arg0: i32, %arg1: memref<2xi32, #tpu.memory_space<smem>>) -> (i32, i32) {
    %c0_i32 = arith.constant 0 : i32
    %c0_i32_0 = arith.constant 0 : i32
    %c0_i32_1 = arith.constant 0 : i32
    return %c0_i32, %c0_i32_0 : i32, i32
  }
  func.func @transform_5(%arg0: i32, %arg1: memref<2xi32, #tpu.memory_space<smem>>) -> (i32, i32) {
    %c0_i32 = arith.constant 0 : i32
    %c0_i32_0 = arith.constant 0 : i32
    return %arg0, %c0_i32 : i32, i32
  }
}

</mosaic_0001>

<llo_original>
// kernel: squeeze.2
$region0: #{squeeze.2}
  %s0 = inlined_call_operand.vmem [shape: f32[16], index: 0, kind: input, shape index: {}]
  %s1 = inlined_call_operand.vmem [shape: f32[2,8], index: 1, kind: output, shape index: {}]
  $region1: #{squeeze.2} parent=0
    #allocation0 [shape = 'u8[4096]{0}', space=vmem, size = 0x1000, scoped, tag = 'scoped mem for output reshape']
    #allocation1 [shape = 'u8[4096]{0}', space=vmem, size = 0x1000, scoped, tag = 'scoped mem for input reshape']
    %s3 = sshllo.u32 0, 1
    %v4 = vld [vmem:[%s0] sm:%s3]
    %5 = vst [vmem:[#allocation1] sm:%s3] %v4
    %v6 = vld [vmem:[#allocation1] sm:$0x1]
    %vm7 = vcmask 64512
    %8 = vst.msk [vmem:[#allocation0] sm:$0x1] %vm7, %v6
    %v9 = vld [vmem:[#allocation1] sm:$0x1]
    %10 = vrot.lane.b32.xlu0 %v9, 120
    %v11 = vpop.permute.xlu0 %10
    %vm12 = vcmask 64512
    %s13 = scalar_lea.vmem [#allocation0], 1
    %14 = vst.msk [vmem:[%s13] sm:$0x1] %vm12, %v11
    %s16 = sshllo.u32 0, 2
    %v18 = vld [vmem:[#allocation0] sm:%s16]
    %s19 = sshllo.u32 0, 2
    %20 = vst [vmem:[%s1] sm:%s19] %v18

// kernel: gfmdiff_forward.1
$region0: #{gfmdiff_forward.1}
  #allocation0 [shape = 'u32[]', space=smem, size = 0x4, offset = 0x4, fixed_abs, tag = 'smem constant byte address 0x4 - core index']
  #allocation1 [shape = 'u32[144,128]{1,0:T(1,128)}', space=vmem, size = 0x12000, scoped, tag = 'internal scratch']
  #allocation2 [shape = 's32[1]{0}', space=sflag, size = 0x4, scoped, tag = 'scoped memory for gfmdiff_forward.1']
  #allocation3 [shape = 'u8[512]{0}', space=smem, size = 0x200, scoped, tag = 'prefetched SMEM operand 0']
  %s0 = inlined_call_operand.vmem [shape: s32[2], index: 0, kind: input, shape index: {}]
  %s1 = inlined_call_operand.vmem [shape: f32[128,24], index: 1, kind: input, shape index: {}]
  %s2 = inlined_call_operand.vmem [shape: f32[128,1], index: 2, kind: input, shape index: {}]
  %s3 = inlined_call_operand.vmem [shape: f32[16,8], index: 3, kind: input, shape index: {}]
  %s4 = inlined_call_operand.vmem [shape: f32[24,33], index: 4, kind: input, shape index: {}]
  %s5 = inlined_call_operand.vmem [shape: f32[33,24], index: 5, kind: input, shape index: {}]
  %s6 = inlined_call_operand.vmem [shape: f32[16,128], index: 6, kind: output, shape index: {}]
  %s7 = sld [smem:[#allocation0]]
  $region57: #{gfmdiff_forward.1} parent=0
    _
  %s9 = ssub.s32 1, %s7
  %s10 = scalar_select 0, %s9, %s7
  %s11 = sshll.u32 %s0, 4
  %s12 = int_to_ptr.vmem [resolvable:$true] %s11
  %14 = dma.vmem_to_smem %s12, 16, [#allocation3], [#allocation2]
  %15 = dma.done [#allocation2], 16
  %16 = sfence
  loop: start=0, step=1, limit=4
  $region2: #{gfmdiff_forward.1} parent=0 // loop_pre_header
    _
  $region3: #{gfmdiff_forward.1} parent=0 // loop_header
    %s18 = sphi 0, %s22
    %p19 = scmp.ge.s32.totalorder %s18, 4
    %s28 = sphi 0, %s30
    %s31 = sphi 0, %s28
    %s32 = sphi 0, %s31
    %s48 = sphi 0, %s32
    %s54 = sphi 0, %s56
    %s57 = sphi 0, %s54
    %s58 = sphi 0, %s57
    %s74 = sphi 0, %s58
    %s80 = sphi 0, %s82
    %s83 = sphi 0, %s80
    %s84 = sphi 0, %s83
    %s100 = sphi 0, %s84
    %s104 = sphi 0, %s104
    %s106 = sphi 0, %s104
    %s107 = sphi 0, %s106
    %s121 = sphi 0, %s107
    %s125 = sphi 0, %s125
    %s127 = sphi 0, %s125
    %s128 = sphi 0, %s127
    %s142 = sphi 0, %s128
    %s148 = sphi 0, %s150
    %s151 = sphi 0, %s148
    %s152 = sphi 0, %s151
    %s168 = sphi 0, %s152
  $region4: #{gfmdiff_forward.1} parent=0 // loop_header_branch
    %21 = sbr.rel (%p19) target = $region8
  $region5: #{gfmdiff_forward.1} parent=0 // loop_body
    %s23 = ssub.s32 %s18, 1
    %s24 = ssub.s32 %s18, 2
    %s25 = sadd.s32 %s18, 1
    %s26 = ssub.s32 %s18, %s25
    %p27 = scmp.eq.s32.totalorder %s26, 0
    %s29 = sadd.s32 %s28, 1
    %s30 = scalar_select %p27, %s28, %s29
    %p33 = pneg %p27
    %p34 = scmp.eq.s32.totalorder %s18, 1
    %p35 = por %p33, %p34
    %p36 = scmp.ne.s32.totalorder %s28, %s31
    %p37 = scmp.eq.s32.totalorder %s18, 0
    %p38 = por %p36, %p37
    %p39 = scmp.ne.s32.totalorder %s28, %s31
    %p40 = scmp.eq.s32.totalorder %s23, 1
    %p41 = por %p39, %p40
    %p42 = scmp.ne.s32.totalorder %s31, %s32
    %p43 = scmp.eq.s32.totalorder %s23, 0
    %p44 = por %p42, %p43
    %p45 = scmp.ne.s32.totalorder %s31, %s32
    %p46 = scmp.eq.s32.totalorder %s24, 1
    %p47 = por %p45, %p46
    %p49 = scmp.ne.s32.totalorder %s32, %s48
    %p50 = scmp.eq.s32.totalorder %s24, 0
    %p51 = por %p49, %p50
    %s52 = ssub.s32 %s18, %s25
    %p53 = scmp.eq.s32.totalorder %s52, 0
    %s55 = sadd.s32 %s54, 1
    %s56 = scalar_select %p53, %s54, %s55
    %p59 = pneg %p53
    %p60 = scmp.eq.s32.totalorder %s18, 1
    %p61 = por %p59, %p60
    %p62 = scmp.ne.s32.totalorder %s54, %s57
    %p63 = scmp.eq.s32.totalorder %s18, 0
    %p64 = por %p62, %p63
    %p65 = scmp.ne.s32.totalorder %s54, %s57
    %p66 = scmp.eq.s32.totalorder %s23, 1
    %p67 = por %p65, %p66
    %p68 = scmp.ne.s32.totalorder %s57, %s58
    %p69 = scmp.eq.s32.totalorder %s23, 0
    %p70 = por %p68, %p69
    %p71 = scmp.ne.s32.totalorder %s57, %s58
    %p72 = scmp.eq.s32.totalorder %s24, 1
    %p73 = por %p71, %p72
    %p75 = scmp.ne.s32.totalorder %s58, %s74
    %p76 = scmp.eq.s32.totalorder %s24, 0
    %p77 = por %p75, %p76
    %s78 = ssub.s32 %s18, %s25
    %p79 = scmp.eq.s32.totalorder %s78, 0
    %s81 = sadd.s32 %s80, 1
    %s82 = scalar_select %p79, %s80, %s81
    %p85 = pneg %p79
    %p86 = scmp.eq.s32.totalorder %s18, 1
    %p87 = por %p85, %p86
    %p88 = scmp.ne.s32.totalorder %s80, %s83
    %p89 = scmp.eq.s32.totalorder %s18, 0
    %p90 = por %p88, %p89
    %p91 = scmp.ne.s32.totalorder %s80, %s83
    %p92 = scmp.eq.s32.totalorder %s23, 1
    %p93 = por %p91, %p92
    %p94 = scmp.ne.s32.totalorder %s83, %s84
    %p95 = scmp.eq.s32.totalorder %s23, 0
    %p96 = por %p94, %p95
    %p97 = scmp.ne.s32.totalorder %s83, %s84
    %p98 = scmp.eq.s32.totalorder %s24, 1
    %p99 = por %p97, %p98
    %p101 = scmp.ne.s32.totalorder %s84, %s100
    %p102 = scmp.eq.s32.totalorder %s24, 0
    %p103 = por %p101, %p102
    %s105 = sadd.s32 %s104, 1
    %p108 = scmp.eq.s32.totalorder %s18, 1
    %p109 = scmp.ne.s32.totalorder %s104, %s106
    %p110 = scmp.eq.s32.totalorder %s18, 0
    %p111 = por %p109, %p110
    %p112 = scmp.ne.s32.totalorder %s104, %s106
    %p113 = scmp.eq.s32.totalorder %s23, 1
    %p114 = por %p112, %p113
    %p115 = scmp.ne.s32.totalorder %s106, %s107
    %p116 = scmp.eq.s32.totalorder %s23, 0
    %p117 = por %p115, %p116
    %p118 = scmp.ne.s32.totalorder %s106, %s107
    %p119 = scmp.eq.s32.totalorder %s24, 1
    %p120 = por %p118, %p119
    %p122 = scmp.ne.s32.totalorder %s107, %s121
    %p123 = scmp.eq.s32.totalorder %s24, 0
    %p124 = por %p122, %p123
    %s126 = sadd.s32 %s125, 1
    %p129 = scmp.eq.s32.totalorder %s18, 1
    %p130 = scmp.ne.s32.totalorder %s125, %s127
    %p131 = scmp.eq.s32.totalorder %s18, 0
    %p132 = por %p130, %p131
    %p133 = scmp.ne.s32.totalorder %s125, %s127
    %p134 = scmp.eq.s32.totalorder %s23, 1
    %p135 = por %p133, %p134
    %p136 = scmp.ne.s32.totalorder %s127, %s128
    %p137 = scmp.eq.s32.totalorder %s23, 0
    %p138 = por %p136, %p137
    %p139 = scmp.ne.s32.totalorder %s127, %s128
    %p140 = scmp.eq.s32.totalorder %s24, 1
    %p141 = por %p139, %p140
    %p143 = scmp.ne.s32.totalorder %s128, %s142
    %p144 = scmp.eq.s32.totalorder %s24, 0
    %p145 = por %p143, %p144
    %s146 = ssub.s32 %s18, %s25
    %p147 = scmp.eq.s32.totalorder %s146, 0
    %s149 = sadd.s32 %s148, 1
    %s150 = scalar_select %p147, %s148, %s149
    %p153 = pneg %p147
    %p154 = scmp.eq.s32.totalorder %s18, 1
    %p155 = por %p153, %p154
    %p156 = scmp.ne.s32.totalorder %s148, %s151
    %p157 = scmp.eq.s32.totalorder %s18, 0
    %p158 = por %p156, %p157
    %p159 = scmp.ne.s32.totalorder %s148, %s151
    %p160 = scmp.eq.s32.totalorder %s23, 1
    %p161 = por %p159, %p160
    %p162 = scmp.ne.s32.totalorder %s151, %s152
    %p163 = scmp.eq.s32.totalorder %s23, 0
    %p164 = por %p162, %p163
    %p165 = scmp.ne.s32.totalorder %s151, %s152
    %p166 = scmp.eq.s32.totalorder %s24, 1
    %p167 = por %p165, %p166
    %p169 = scmp.ne.s32.totalorder %s152, %s168
    %p170 = scmp.eq.s32.totalorder %s24, 0
    %p171 = por %p169, %p170
    %p172 = scmp.le.s32.totalorder 1, %s18
    %p173 = scmp.lt.s32.totalorder %s18, 3
    %p174 = pnand %p172, %p173
    %p175 = pneg %p174
    // Predicated region
    $region9: #{gfmdiff_forward.1} parent=5 // pred_check
      _
    $region10: #{gfmdiff_forward.1} parent=5 // pred_check_branch
      %177 = sbr.rel (%p174) target = $region12
    $region11: #{gfmdiff_forward.1} parent=5 // pred_region
      %s178 = ssub.s32 %s18, 1
      // Predicated region
      $region13: #{gfmdiff_forward.1} parent=11 // pred_check
        %p179 = pneg %p117
      $region14: #{gfmdiff_forward.1} parent=11 // pred_check_branch
        %181 = sbr.rel (%p179) target = $region16
      $region15: #{gfmdiff_forward.1} parent=11 // pred_region
        _
      $region16: #{gfmdiff_forward.1} parent=11 // pred_fallthru
        _
      // Predicated region
      $region17: #{gfmdiff_forward.1} parent=11 // pred_check
        %p182 = pneg %p138
      $region18: #{gfmdiff_forward.1} parent=11 // pred_check_branch
        %184 = sbr.rel (%p182) target = $region20
      $region19: #{gfmdiff_forward.1} parent=11 // pred_region
        _
      $region20: #{gfmdiff_forward.1} parent=11 // pred_fallthru
        _
    $region12: #{gfmdiff_forward.1} parent=5 // pred_fallthru
      _
    %p185 = scmp.lt.s32.totalorder %s18, 2
    // Predicated region
    $region21: #{gfmdiff_forward.1} parent=5 // pred_check
      %p186 = pneg %p185
    $region22: #{gfmdiff_forward.1} parent=5 // pred_check_branch
      %188 = sbr.rel (%p186) target = $region24
    $region23: #{gfmdiff_forward.1} parent=5 // pred_region
      // Predicated region
      $region25: #{gfmdiff_forward.1} parent=23 // pred_check
        %p189 = pneg %p38
      $region26: #{gfmdiff_forward.1} parent=23 // pred_check_branch
        %191 = sbr.rel (%p189) target = $region28
      $region27: #{gfmdiff_forward.1} parent=23 // pred_region
        %s192 = smul.u32 8, %s18
        %p193 = scmp.lt.s32.totalorder %s192, 15
        %s194 = scalar_select %p193, %s192, 15
        %s195 = smul.addr %s194, 8
        %s196 = scalar_lea.vmem %s1, %s195
        %s197 = smul.u32 8, %s18
      $region28: #{gfmdiff_forward.1} parent=23 // pred_fallthru
        _
      // Predicated region
      $region29: #{gfmdiff_forward.1} parent=23 // pred_check
        %p198 = pneg %p64
      $region30: #{gfmdiff_forward.1} parent=23 // pred_check_branch
        %200 = sbr.rel (%p198) target = $region32
      $region31: #{gfmdiff_forward.1} parent=23 // pred_region
        %s201 = smul.u32 8, %s18
        %p202 = scmp.lt.s32.totalorder %s201, 15
        %s203 = scalar_select %p202, %s201, 15
        %s204 = smul.addr %s203, 8
        %s205 = scalar_lea.vmem %s2, %s204
        %s206 = smul.u32 8, %s18
      $region32: #{gfmdiff_forward.1} parent=23 // pred_fallthru
        _
      // Predicated region
      $region33: #{gfmdiff_forward.1} parent=23 // pred_check
        %p207 = pneg %p90
      $region34: #{gfmdiff_forward.1} parent=23 // pred_check_branch
        %209 = sbr.rel (%p207) target = $region36
      $region35: #{gfmdiff_forward.1} parent=23 // pred_region
        %p210 = scmp.lt.s32.totalorder %s18, 1
        %s211 = scalar_select %p210, %s18, 1
        %s212 = smul.addr %s211, 8
        %s213 = scalar_lea.vmem %s3, %s212
      $region36: #{gfmdiff_forward.1} parent=23 // pred_fallthru
        _
    $region24: #{gfmdiff_forward.1} parent=5 // pred_fallthru
      _
    %p214 = scmp.le.s32.totalorder 1, %s18
    %p215 = scmp.lt.s32.totalorder %s18, 3
    %p216 = pnand %p214, %p215
    %p217 = pneg %p216
    // Predicated region
    $region37: #{gfmdiff_forward.1} parent=5 // pred_check
      _
    $region38: #{gfmdiff_forward.1} parent=5 // pred_check_branch
      %219 = sbr.rel (%p216) target = $region40
    $region39: #{gfmdiff_forward.1} parent=5 // pred_region
      %s220 = ssub.s32 %s18, 1
      %s221 = smul.u32 8, %s23
      %p222 = scmp.lt.s32.totalorder %s221, 15
      %s223 = scalar_select %p222, %s221, 15
      %s224 = smul.addr %s223, 8
      %s225 = scalar_lea.vmem %s1, %s224
      %p226 = pneg %p44
      %p227 = pneg %p41
      %s228 = smul.u32 8, %s23
      %p229 = scmp.lt.s32.totalorder %s228, 15
      %s230 = scalar_select %p229, %s228, 15
      %s231 = smul.addr %s230, 8
      %s232 = scalar_lea.vmem %s2, %s231
      %p233 = pneg %p70
      %p234 = pneg %p67
      %p235 = scmp.lt.s32.totalorder %s23, 1
      %s236 = scalar_select %p235, %s23, 1
      %s237 = smul.addr %s236, 8
      %s238 = scalar_lea.vmem %s3, %s237
      %p239 = pneg %p96
      %p240 = pneg %p93
      %p241 = pneg %p117
      %p242 = pneg %p114
      %p243 = pneg %p138
      %p244 = pneg %p135
      %p245 = pneg %p164
      %p246 = pneg %p161
      %p247 = scmp.lt.s32.totalorder %s23, 1
      %s248 = scalar_select %p247, %s23, 1
      %s249 = smul.addr %s248, 8
      %s250 = scalar_lea.vmem %s6, %s249
      %s251 = smul.u32 8, %s23
      %p252 = scmp.lt.s32.totalorder %s251, 15
      %s253 = scalar_select %p252, %s251, 15
      %s254 = smul.addr %s253, 8
      %s255 = scalar_lea.vmem %s1, %s254
      %s256 = smul.u32 8, %s23
      %s257 = smul.u32 8, %s23
      %p258 = scmp.lt.s32.totalorder %s257, 15
      %s259 = scalar_select %p258, %s257, 15
      %s260 = smul.addr %s259, 8
      %s261 = scalar_lea.vmem %s2, %s260
      %s262 = smul.u32 8, %s23
      %p263 = scmp.lt.s32.totalorder %s23, 1
      %s264 = scalar_select %p263, %s23, 1
      %s265 = smul.addr %s264, 8
      %s266 = scalar_lea.vmem %s3, %s265
      %p267 = scmp.lt.s32.totalorder %s23, 1
      %s268 = scalar_select %p267, %s23, 1
      %s269 = smul.addr %s268, 8
      %s270 = scalar_lea.vmem %s6, %s269
      %v271 = vlaneseq
      %v272 = vand.u32 %v271, 127
      %vm273 = vcmp.ge.s32.totalorder %v272, 3
      %vm274 = vcmp.lt.s32.totalorder %v272, 8
      %vm275 = vmand %vm273, %vm274
      %vm276 = vcmp.eq.s32.totalorder %v272, 8
      %vm277 = vcmp.eq.s32.totalorder %v272, 9
      %v278 = vsel %vm277, 0.25, 1.0
      %v279 = vsel %vm276, 0.11111111, %v278
      %v280 = vsel %vm275, 0.25, %v279
      %vm281 = vcmp.lt.s32.totalorder %v272, 3
      %vm282 = vcmp.ge.s32.totalorder %v272, 12
      %vm283 = vcmp.lt.s32.totalorder %v272, 15
      %vm284 = vmand %vm282, %vm283
      %vm285 = vmor %vm281, %vm284
      %v286 = vsel %vm285, 1, 0
      %v287 = vcvt.s32.f32 %v286
      %vm288 = vcmp.lt.s32.totalorder %v272, 10
      %v289 = vsel %vm288, 1, 0
      %v290 = vcvt.s32.f32 %v289
      %vm291 = vcmp.lt.s32.totalorder %v272, 22
      %vm292 = vmand %vm282, %vm291
      %v293 = vsel %vm292, 1, 0
      %v294 = vcvt.s32.f32 %v293
      %vm295 = vcmp.eq.s32.totalorder %v272, 10
      %v296 = vsel %vm295, 1, 0
      %v297 = vcvt.s32.f32 %v296
      %vm298 = vcmp.eq.s32.totalorder %v272, 11
      %v299 = vsel %vm298, 1, 0
      %v300 = vcvt.s32.f32 %v299
      %v301 = vlaneseq
      %v302 = vshrl.u32 %v301, 7
      %v303 = vmul.u32 %v302, 8
      %vm304 = vcmp.ge.s32.totalorder %v272, %v303
      %v305 = vadd.s32 %v302, 1
      %v306 = vmul.u32 %v305, 8
      %vm307 = vcmp.lt.s32.totalorder %v272, %v306
      %vm308 = vmand %vm304, %vm307
      %v309 = vsel %vm308, 1, 0
      %v310 = vcvt.s32.f32 %v309
      %v311 = vadd.s32 %v302, 8
      %v312 = vadd.s32 %v302, 16
      %v313 = vadd.s32 %v302, 24
      %v314 = vadd.s32 %v302, 32
      %v315 = vadd.s32 %v302, 40
      %v316 = vadd.s32 %v302, 48
      %v317 = vadd.s32 %v302, 56
      %v318 = vmul.u32 %v272, 8
      %vm319 = vcmp.ge.s32.totalorder %v302, %v318
      %vm320 = vcmp.ge.s32.totalorder %v311, %v318
      %vm321 = vcmp.ge.s32.totalorder %v312, %v318
      %vm322 = vcmp.ge.s32.totalorder %v313, %v318
      %vm323 = vcmp.ge.s32.totalorder %v314, %v318
      %vm324 = vcmp.ge.s32.totalorder %v315, %v318
      %vm325 = vcmp.ge.s32.totalorder %v316, %v318
      %vm326 = vcmp.ge.s32.totalorder %v317, %v318
      %v327 = vadd.s32 %v272, 1
      %v328 = vmul.u32 %v327, 8
      %vm329 = vcmp.lt.s32.totalorder %v302, %v328
      %vm330 = vcmp.lt.s32.totalorder %v311, %v328
      %vm331 = vcmp.lt.s32.totalorder %v312, %v328
      %vm332 = vcmp.lt.s32.totalorder %v313, %v328
      %vm333 = vcmp.lt.s32.totalorder %v314, %v328
      %vm334 = vcmp.lt.s32.totalorder %v315, %v328
      %vm335 = vcmp.lt.s32.totalorder %v316, %v328
      %vm336 = vcmp.lt.s32.totalorder %v317, %v328
      %vm337 = vmand %vm319, %vm329
      %vm338 = vmand %vm320, %vm330
      %vm339 = vmand %vm321, %vm331
      %vm340 = vmand %vm322, %vm332
      %vm341 = vmand %vm323, %vm333
      %vm342 = vmand %vm324, %vm334
      %vm343 = vmand %vm325, %vm335
      %vm344 = vmand %vm326, %vm336
      %v345 = vsel %vm337, 1, 0
      %v346 = vsel %vm338, 1, 0
      %v347 = vsel %vm339, 1, 0
      %v348 = vsel %vm340, 1, 0
      %v349 = vsel %vm341, 1, 0
      %v350 = vsel %vm342, 1, 0
      %v351 = vsel %vm343, 1, 0
      %v352 = vsel %vm344, 1, 0
      %v353 = vcvt.s32.f32 %v345
      %v354 = vcvt.s32.f32 %v346
      %v355 = vcvt.s32.f32 %v347
      %v356 = vcvt.s32.f32 %v348
      %v357 = vcvt.s32.f32 %v349
      %v358 = vcvt.s32.f32 %v350
      %v359 = vcvt.s32.f32 %v351
      %v360 = vcvt.s32.f32 %v352
      %vm361 = vcmp.eq.s32.totalorder %v272, 0
      %vm362 = vcmp.ge.s32.totalorder %v302, 12
      %vm363 = vcmp.ge.s32.totalorder %v311, 12
      %vm364 = vcmp.ge.s32.totalorder %v312, 12
      %vm365 = vmand %vm361, %vm362
      %vm366 = vmand %vm361, %vm363
      %vm367 = vmand %vm361, %vm364
      %vm368 = vcmp.lt.s32.totalorder %v302, 22
      %vm369 = vcmp.lt.s32.totalorder %v311, 22
      %vm370 = vcmp.lt.s32.totalorder %v312, 22
      %vm371 = vmand %vm365, %vm368
      %vm372 = vmand %vm366, %vm369
      %vm373 = vmand %vm367, %vm370
      %vm374 = vcmp.eq.s32.totalorder %v272, 1
      %vm375 = vmand %vm374, %vm362
      %vm376 = vmand %vm374, %vm363
      %vm377 = vmand %vm374, %vm364
      %vm378 = vcmp.lt.s32.totalorder %v302, 15
      %vm379 = vcmp.lt.s32.totalorder %v311, 15
      %vm380 = vcmp.lt.s32.totalorder %v312, 15
      %vm381 = vmand %vm375, %vm378
      %vm382 = vmand %vm376, %vm379
      %vm383 = vmand %vm377, %vm380
      %vm384 = vmor %vm371, %vm381
      %vm385 = vmor %vm372, %vm382
      %vm386 = vmor %vm373, %vm383
      %vm387 = vcmp.eq.s32.totalorder %v272, 2
      %vm388 = vcmp.lt.s32.totalorder %v302, 10
      %vm389 = vcmp.lt.s32.totalorder %v311, 10
      %vm390 = vcmp.lt.s32.totalorder %v312, 10
      %vm391 = vmand %vm387, %vm388
      %vm392 = vmand %vm387, %vm389
      %vm393 = vmand %vm387, %vm390
      %vm394 = vmor %vm384, %vm391
      %vm395 = vmor %vm385, %vm392
      %vm396 = vmor %vm386, %vm393
      %v397 = vsel %vm394, 1, 0
      %v398 = vsel %vm395, 1, 0
      %v399 = vsel %vm396, 1, 0
      %v400 = vcvt.s32.f32 %v397
      %v401 = vcvt.s32.f32 %v398
      %v402 = vcvt.s32.f32 %v399
      %v403 = vld [vmem:[%s261] sm:$0xff]
      %v404 = vld [vmem:[%s261 + $0x8] sm:$0xff]
      %v405 = vld [vmem:[%s261 + $0x10] sm:$0xff]
      %v406 = vld [vmem:[%s261 + $0x18] sm:$0xff]
      %v407 = vld [vmem:[%s261 + $0x20] sm:$0xff]
      %v408 = vld [vmem:[%s261 + $0x28] sm:$0xff]
      %v409 = vld [vmem:[%s261 + $0x30] sm:$0xff]
      %v410 = vld [vmem:[%s261 + $0x38] sm:$0xff]
      %v411 = vld [vmem:[%s266] sm:$0xff]
      %v412 = vmax.f32 %v411, 1.0
      %v413 = vrcp.pop %v412
      %v414 = vand.u32 2147483647, %v411
      %v415 = vsub.f32 0.0, %v414
      %v416 = vmul.f32 %v415, 1.442695
      %v417 = vpow.pop %v416
      %v418 = vadd.f32 %v417, 1.0
      %v419 = vrcp.pop %v418
      %v420 = vmul.f32 1.0, %v419
      %vm421 = vcmp.ge.f32.partialorder %v411, 0.0
      %v422 = vmul.f32 %v417, %v420
      %v423 = vsel %vm421, %v420, %v422
      %v424 = vsel %vm421, %v422, %v420
      %v425 = vrsqrt.pop %v423
      %v426 = vmul.f32 %v423, %v425
      %vm427 = vcmp.eq.f32.partialorder %v423, inf
      %v428 = vsel %vm427, %v423, %v426
      %vm429 = vcmp.eq.f32.partialorder %v423, 0.0
      %v430 = vand.u32 %v423, 2147483648
      %v431 = vsel %vm429, %v430, %v428
      %v432 = vrsqrt.pop %v424
      %v433 = vmul.f32 %v424, %v432
      %vm434 = vcmp.eq.f32.partialorder %v424, inf
      %v435 = vsel %vm434, %v424, %v433
      %vm436 = vcmp.eq.f32.partialorder %v424, 0.0
      %v437 = vand.u32 %v424, 2147483648
      %v438 = vsel %vm436, %v437, %v435
      %v439 = vld [vmem:[%s255] sm:$0xff]
      %v440 = vld [vmem:[%s255 + $0x8] sm:$0xff]
      %v441 = vld [vmem:[%s255 + $0x10] sm:$0xff]
      %v442 = vld [vmem:[%s255 + $0x18] sm:$0xff]
      %v443 = vld [vmem:[%s255 + $0x20] sm:$0xff]
      %v444 = vld [vmem:[%s255 + $0x28] sm:$0xff]
      %v445 = vld [vmem:[%s255 + $0x30] sm:$0xff]
      %v446 = vld [vmem:[%s255 + $0x38] sm:$0xff]
      %v447 = vmul.f32 %v439, %v280
      %v448 = vmul.f32 %v440, %v280
      %v449 = vmul.f32 %v441, %v280
      %v450 = vmul.f32 %v442, %v280
      %v451 = vmul.f32 %v443, %v280
      %v452 = vmul.f32 %v444, %v280
      %v453 = vmul.f32 %v445, %v280
      %v454 = vmul.f32 %v446, %v280
      %456 = vset.pattern.permute.xlu0 0
      %457 = vperm.xlu0 %456, %v403
      %v458 = vpop.permute.xlu0 %457
      %461 = vset.pattern.permute.xlu0 0
      %462 = vperm.xlu0 %461, %v404
      %v463 = vpop.permute.xlu0 %462
      %466 = vset.pattern.permute.xlu0 0
      %467 = vperm.xlu0 %466, %v405
      %v468 = vpop.permute.xlu0 %467
      %471 = vset.pattern.permute.xlu0 0
      %472 = vperm.xlu0 %471, %v406
      %v473 = vpop.permute.xlu0 %472
      %476 = vset.pattern.permute.xlu0 0
      %477 = vperm.xlu0 %476, %v407
      %v478 = vpop.permute.xlu0 %477
      %481 = vset.pattern.permute.xlu0 0
      %482 = vperm.xlu0 %481, %v408
      %v483 = vpop.permute.xlu0 %482
      %486 = vset.pattern.permute.xlu0 0
      %487 = vperm.xlu0 %486, %v409
      %v488 = vpop.permute.xlu0 %487
      %491 = vset.pattern.permute.xlu0 0
      %492 = vperm.xlu0 %491, %v410
      %v493 = vpop.permute.xlu0 %492
      %v495 = vmul.f32 %v447, %v458
      %v496 = vmul.f32 %v448, %v463
      %v497 = vmul.f32 %v449, %v468
      %v498 = vmul.f32 %v450, %v473
      %v499 = vmul.f32 %v451, %v478
      %v500 = vmul.f32 %v452, %v483
      %v501 = vmul.f32 %v453, %v488
      %v502 = vmul.f32 %v454, %v493
      %vm503 = vcmask 523264
      %v505 = vsel %vm503, %v310, 0
      %507 = vmatprep.subr.mxu0 0.0
      %508 = vmatpush1.msra.mxu0 %v495
      %509 = vmatprep.subr.mxu0 0.0
      %510 = vmatpush1.msra.mxu0 %v496
      %511 = vmatprep.subr.mxu0 0.0
      %512 = vmatpush1.msra.mxu0 %v497
      %513 = vmatprep.subr.mxu0 0.0
      %514 = vmatpush1.msra.mxu0 %v498
      %515 = vmatprep.subr.mxu0 0.0
      %516 = vmatpush1.msra.mxu0 %v499
      %517 = vmatprep.subr.mxu0 0.0
      %518 = vmatpush1.msra.mxu0 %v500
      %519 = vmatprep.subr.mxu0 0.0
      %520 = vmatpush1.msra.mxu0 %v501
      %521 = vmatprep.subr.mxu0 0.0
      %522 = vmatpush1.msra.mxu0 %v502
      %523 = vmatprep.subr.mxu0 0.0
      %524 = vmatpush1.msra.mxu0 0.0
      %525 = vmatprep.subr.mxu0 0.0
      %526 = vmatpush1.msra.mxu0 0.0
      %527 = vmatprep.subr.mxu0 0.0
      %528 = vmatpush1.msra.mxu0 0.0
      %529 = vmatprep.subr.mxu0 0.0
      %530 = vmatpush1.msra.mxu0 0.0
      %531 = vmatprep.subr.mxu0 0.0
      %532 = vmatpush1.msra.mxu0 0.0
      %533 = vmatprep.subr.mxu0 0.0
      %534 = vmatpush1.msra.mxu0 0.0
      %535 = vmatprep.subr.mxu0 0.0
      %536 = vmatpush1.msra.mxu0 0.0
      %537 = vmatprep.subr.mxu0 0.0
      %538 = vmatpush1.msra.mxu0 0.0
      %539 = vmatprep.subr.mxu0 0.0
      %540 = vmatpush1.msra.mxu0 0.0
      %541 = vmatprep.subr.mxu0 0.0
      %542 = vmatpush1.msra.mxu0 0.0
      %543 = vmatprep.subr.mxu0 0.0
      %544 = vmatpush1.msra.mxu0 0.0
      %545 = vmatprep.subr.mxu0 0.0
      %546 = vmatpush1.msra.mxu0 0.0
      %547 = vmatprep.subr.mxu0 0.0
      %548 = vmatpush1.msra.mxu0 0.0
      %549 = vmatprep.subr.mxu0 0.0
      %550 = vmatpush1.msra.mxu0 0.0
      %551 = vmatprep.subr.mxu0 0.0
      %552 = vmatpush1.msra.mxu0 0.0
      %553 = vmatprep.subr.mxu0 0.0
      %554 = vmatpush1.msra.mxu0 0.0
      %555 = vmatprep.subr.mxu0 0.0
      %556 = vmatpush1.msra.mxu0 0.0
      %557 = vmatprep.subr.mxu0 0.0
      %558 = vmatpush1.msra.mxu0 0.0
      %559 = vmatprep.subr.mxu0 0.0
      %560 = vmatpush1.msra.mxu0 0.0
      %561 = vmatprep.subr.mxu0 0.0
      %562 = vmatpush1.msra.mxu0 0.0
      %563 = vmatprep.subr.mxu0 0.0
      %564 = vmatpush1.msra.mxu0 0.0
      %565 = vmatprep.subr.mxu0 0.0
      %566 = vmatpush1.msra.mxu0 0.0
      %567 = vmatprep.subr.mxu0 0.0
      %568 = vmatpush1.msra.mxu0 0.0
      %569 = vmatprep.subr.mxu0 0.0
      %570 = vmatpush1.msra.mxu0 0.0
      %571 = vmatprep.mubr.f32.mxu0 0.0
      %572 = vmatmul.mubr.f32.gmra.mrb[0].mxu0 %v505
      %v573 = vpop.f32.mrb[0].mxu0
      %v574 = vadd.f32 0.0, %v573
      %v575 = vpop.f32.mrb[0].mxu0
      %576 = vdwg.mxu0
      %578 = vset.pattern.permute.xlu0 4
      %579 = vperm.xlu0 %578, %v413
      %v580 = vpop.permute.xlu0 %579
      %v582 = vmul.f32 %v574, %v580
      %vm583 = vcmask 64512
      %v585 = vsel %vm583, %v353, 0
      %v588 = vsel %vm583, %v354, 0
      %v591 = vsel %vm583, %v355, 0
      %v594 = vsel %vm583, %v356, 0
      %v597 = vsel %vm583, %v357, 0
      %v600 = vsel %vm583, %v358, 0
      %v603 = vsel %vm583, %v359, 0
      %v606 = vsel %vm583, %v360, 0
      %608 = vmatprep.subr.mxu0 0.0
      %609 = vmatpush1.msra.mxu0 %v582
      %610 = vmatprep.subr.mxu0 0.0
      %611 = vmatpush1.msra.mxu0 0.0
      %612 = vmatprep.subr.mxu0 0.0
      %613 = vmatpush1.msra.mxu0 0.0
      %614 = vmatprep.subr.mxu0 0.0
      %615 = vmatpush1.msra.mxu0 0.0
      %616 = vmatprep.subr.mxu0 0.0
      %617 = vmatpush1.msra.mxu0 0.0
      %618 = vmatprep.subr.mxu0 0.0
      %619 = vmatpush1.msra.mxu0 0.0
      %620 = vmatprep.subr.mxu0 0.0
      %621 = vmatpush1.msra.mxu0 0.0
      %622 = vmatprep.subr.mxu0 0.0
      %623 = vmatpush1.msra.mxu0 0.0
      %624 = vmatprep.subr.mxu0 0.0
      %625 = vmatpush1.msra.mxu0 0.0
      %626 = vmatprep.subr.mxu0 0.0
      %627 = vmatpush1.msra.mxu0 0.0
      %628 = vmatprep.subr.mxu0 0.0
      %629 = vmatpush1.msra.mxu0 0.0
      %630 = vmatprep.subr.mxu0 0.0
      %631 = vmatpush1.msra.mxu0 0.0
      %632 = vmatprep.subr.mxu0 0.0
      %633 = vmatpush1.msra.mxu0 0.0
      %634 = vmatprep.subr.mxu0 0.0
      %635 = vmatpush1.msra.mxu0 0.0
      %636 = vmatprep.subr.mxu0 0.0
      %637 = vmatpush1.msra.mxu0 0.0
      %638 = vmatprep.subr.mxu0 0.0
      %639 = vmatpush1.msra.mxu0 0.0
      %640 = vmatprep.subr.mxu0 0.0
      %641 = vmatpush1.msra.mxu0 0.0
      %642 = vmatprep.subr.mxu0 0.0
      %643 = vmatpush1.msra.mxu0 0.0
      %644 = vmatprep.subr.mxu0 0.0
      %645 = vmatpush1.msra.mxu0 0.0
      %646 = vmatprep.subr.mxu0 0.0
      %647 = vmatpush1.msra.mxu0 0.0
      %648 = vmatprep.subr.mxu0 0.0
      %649 = vmatpush1.msra.mxu0 0.0
      %650 = vmatprep.subr.mxu0 0.0
      %651 = vmatpush1.msra.mxu0 0.0
      %652 = vmatprep.subr.mxu0 0.0
      %653 = vmatpush1.msra.mxu0 0.0
      %654 = vmatprep.subr.mxu0 0.0
      %655 = vmatpush1.msra.mxu0 0.0
      %656 = vmatprep.subr.mxu0 0.0
      %657 = vmatpush1.msra.mxu0 0.0
      %658 = vmatprep.subr.mxu0 0.0
      %659 = vmatpush1.msra.mxu0 0.0
      %660 = vmatprep.subr.mxu0 0.0
      %661 = vmatpush1.msra.mxu0 0.0
      %662 = vmatprep.subr.mxu0 0.0
      %663 = vmatpush1.msra.mxu0 0.0
      %664 = vmatprep.subr.mxu0 0.0
      %665 = vmatpush1.msra.mxu0 0.0
      %666 = vmatprep.subr.mxu0 0.0
      %667 = vmatpush1.msra.mxu0 0.0
      %668 = vmatprep.subr.mxu0 0.0
      %669 = vmatpush1.msra.mxu0 0.0
      %670 = vmatprep.subr.mxu0 0.0
      %671 = vmatpush1.msra.mxu0 0.0
      %672 = vmatprep.mubr.f32.mxu0 0.0
      %673 = vmatmul.mubr.f32.gmra.mrb[0].mxu0 %v585
      %v674 = vpop.f32.mrb[0].mxu0
      %v675 = vadd.f32 0.0, %v674
      %v676 = vpop.f32.mrb[0].mxu0
      %677 = vmatprep.mubr.f32.mxu0 0.0
      %678 = vmatmul.mubr.f32.gmra.mrb[0].mxu0 %v588
      %v679 = vpop.f32.mrb[0].mxu0
      %v680 = vadd.f32 0.0, %v679
      %v681 = vpop.f32.mrb[0].mxu0
      %682 = vmatprep.mubr.f32.mxu0 0.0
      %683 = vmatmul.mubr.f32.gmra.mrb[0].mxu0 %v591
      %v684 = vpop.f32.mrb[0].mxu0
      %v685 = vadd.f32 0.0, %v684
      %v686 = vpop.f32.mrb[0].mxu0
      %687 = vmatprep.mubr.f32.mxu0 0.0
      %688 = vmatmul.mubr.f32.gmra.mrb[0].mxu0 %v594
      %v689 = vpop.f32.mrb[0].mxu0
      %v690 = vadd.f32 0.0, %v689
      %v691 = vpop.f32.mrb[0].mxu0
      %692 = vmatprep.mubr.f32.mxu0 0.0
      %693 = vmatmul.mubr.f32.gmra.mrb[0].mxu0 %v597
      %v694 = vpop.f32.mrb[0].mxu0
      %v695 = vadd.f32 0.0, %v694
      %v696 = vpop.f32.mrb[0].mxu0
      %697 = vmatprep.mubr.f32.mxu0 0.0
      %698 = vmatmul.mubr.f32.gmra.mrb[0].mxu0 %v600
      %v699 = vpop.f32.mrb[0].mxu0
      %v700 = vadd.f32 0.0, %v699
      %v701 = vpop.f32.mrb[0].mxu0
      %702 = vmatprep.mubr.f32.mxu0 0.0
      %703 = vmatmul.mubr.f32.gmra.mrb[0].mxu0 %v603
      %v704 = vpop.f32.mrb[0].mxu0
      %v705 = vadd.f32 0.0, %v704
      %v706 = vpop.f32.mrb[0].mxu0
      %707 = vmatprep.mubr.f32.mxu0 0.0
      %708 = vmatmul.mubr.f32.gmra.mrb[0].mxu0 %v606
      %v709 = vpop.f32.mrb[0].mxu0
      %v710 = vadd.f32 0.0, %v709
      %v711 = vpop.f32.mrb[0].mxu0
      %712 = vdwg.mxu0
      %v713 = vmul.f32 %v675, %v287
      %v714 = vmul.f32 %v680, %v287
      %v715 = vmul.f32 %v685, %v287
      %v716 = vmul.f32 %v690, %v287
      %v717 = vmul.f32 %v695, %v287
      %v718 = vmul.f32 %v700, %v287
      %v719 = vmul.f32 %v705, %v287
      %v720 = vmul.f32 %v710, %v287
      %v721 = vsub.f32 %v495, %v713
      %v722 = vsub.f32 %v496, %v714
      %v723 = vsub.f32 %v497, %v715
      %v724 = vsub.f32 %v498, %v716
      %v725 = vsub.f32 %v499, %v717
      %v726 = vsub.f32 %v500, %v718
      %v727 = vsub.f32 %v501, %v719
      %v728 = vsub.f32 %v502, %v720
      %v729 = vmul.f32 %v721, %v458
      %v730 = vmul.f32 %v722, %v463
      %v731 = vmul.f32 %v723, %v468
      %v732 = vmul.f32 %v724, %v473
      %v733 = vmul.f32 %v725, %v478
      %v734 = vmul.f32 %v726, %v483
      %v735 = vmul.f32 %v727, %v488
      %v736 = vmul.f32 %v728, %v493
      %738 = vset.pattern.permute.xlu0 0
      %739 = vperm.xlu0 %738, %v438
      %v740 = vpop.permute.xlu0 %739
      %v742 = vmul.f32 %v740, %v290
      %744 = vset.pattern.permute.xlu0 0
      %745 = vperm.xlu0 %744, %v431
      %v746 = vpop.permute.xlu0 %745
      %v748 = vmul.f32 %v746, %v294
      %v749 = vadd.f32 %v742, %v748
      %751 = vset.pattern.permute.xlu0 2
      %752 = vperm.xlu0 %751, %v411
      %v753 = vpop.permute.xlu0 %752
      %v755 = vmul.f32 %v753, %v297
      %v756 = vadd.f32 %v749, %v755
      %v757 = vadd.f32 %v756, %v300
      %758 = vmatprep.subr.mxu0 0.0
      %759 = vmatpush1.msra.mxu0 %v757
      %760 = vmatprep.subr.mxu0 0.0
      %761 = vmatpush1.msra.mxu0 0.0
      %762 = vmatprep.subr.mxu0 0.0
      %763 = vmatpush1.msra.mxu0 0.0
      %764 = vmatprep.subr.mxu0 0.0
      %765 = vmatpush1.msra.mxu0 0.0
      %766 = vmatprep.subr.mxu0 0.0
      %767 = vmatpush1.msra.mxu0 0.0
      %768 = vmatprep.subr.mxu0 0.0
      %769 = vmatpush1.msra.mxu0 0.0
      %770 = vmatprep.subr.mxu0 0.0
      %771 = vmatpush1.msra.mxu0 0.0
      %772 = vmatprep.subr.mxu0 0.0
      %773 = vmatpush1.msra.mxu0 0.0
      %774 = vmatprep.subr.mxu0 0.0
      %775 = vmatpush1.msra.mxu0 0.0
      %776 = vmatprep.subr.mxu0 0.0
      %777 = vmatpush1.msra.mxu0 0.0
      %778 = vmatprep.subr.mxu0 0.0
      %779 = vmatpush1.msra.mxu0 0.0
      %780 = vmatprep.subr.mxu0 0.0
      %781 = vmatpush1.msra.mxu0 0.0
      %782 = vmatprep.subr.mxu0 0.0
      %783 = vmatpush1.msra.mxu0 0.0
      %784 = vmatprep.subr.mxu0 0.0
      %785 = vmatpush1.msra.mxu0 0.0
      %786 = vmatprep.subr.mxu0 0.0
      %787 = vmatpush1.msra.mxu0 0.0
      %788 = vmatprep.subr.mxu0 0.0
      %789 = vmatpush1.msra.mxu0 0.0
      %790 = vmatprep.subr.mxu0 0.0
      %791 = vmatpush1.msra.mxu0 0.0
      %792 = vmatprep.subr.mxu0 0.0
      %793 = vmatpush1.msra.mxu0 0.0
      %794 = vmatprep.subr.mxu0 0.0
      %795 = vmatpush1.msra.mxu0 0.0
      %796 = vmatprep.subr.mxu0 0.0
      %797 = vmatpush1.msra.mxu0 0.0
      %798 = vmatprep.subr.mxu0 0.0
      %799 = vmatpush1.msra.mxu0 0.0
      %800 = vmatprep.subr.mxu0 0.0
      %801 = vmatpush1.msra.mxu0 0.0
      %802 = vmatprep.subr.mxu0 0.0
      %803 = vmatpush1.msra.mxu0 0.0
      %804 = vmatprep.subr.mxu0 0.0
      %805 = vmatpush1.msra.mxu0 0.0
      %806 = vmatprep.subr.mxu0 0.0
      %807 = vmatpush1.msra.mxu0 0.0
      %808 = vmatprep.subr.mxu0 0.0
      %809 = vmatpush1.msra.mxu0 0.0
      %810 = vmatprep.subr.mxu0 0.0
      %811 = vmatpush1.msra.mxu0 0.0
      %812 = vmatprep.subr.mxu0 0.0
      %813 = vmatpush1.msra.mxu0 0.0
      %814 = vmatprep.subr.mxu0 0.0
      %815 = vmatpush1.msra.mxu0 0.0
      %816 = vmatprep.subr.mxu0 0.0
      %817 = vmatpush1.msra.mxu0 0.0
      %818 = vmatprep.subr.mxu0 0.0
      %819 = vmatpush1.msra.mxu0 0.0
      %820 = vmatprep.subr.mxu0 0.0
      %821 = vmatpush1.msra.mxu0 0.0
      %822 = vmatprep.mubr.f32.mxu0 0.0
      %823 = vmatmul.mubr.f32.gmra.mrb[0].mxu0 %v585
      %v824 = vpop.f32.mrb[0].mxu0
      %v825 = vadd.f32 0.0, %v824
      %v826 = vpop.f32.mrb[0].mxu0
      %827 = vmatprep.mubr.f32.mxu0 0.0
      %828 = vmatmul.mubr.f32.gmra.mrb[0].mxu0 %v588
      %v829 = vpop.f32.mrb[0].mxu0
      %v830 = vadd.f32 0.0, %v829
      %v831 = vpop.f32.mrb[0].mxu0
      %832 = vmatprep.mubr.f32.mxu0 0.0
      %833 = vmatmul.mubr.f32.gmra.mrb[0].mxu0 %v591
      %v834 = vpop.f32.mrb[0].mxu0
      %v835 = vadd.f32 0.0, %v834
      %v836 = vpop.f32.mrb[0].mxu0
      %837 = vmatprep.mubr.f32.mxu0 0.0
      %838 = vmatmul.mubr.f32.gmra.mrb[0].mxu0 %v594
      %v839 = vpop.f32.mrb[0].mxu0
      %v840 = vadd.f32 0.0, %v839
      %v841 = vpop.f32.mrb[0].mxu0
      %842 = vmatprep.mubr.f32.mxu0 0.0
      %843 = vmatmul.mubr.f32.gmra.mrb[0].mxu0 %v597
      %v844 = vpop.f32.mrb[0].mxu0
      %v845 = vadd.f32 0.0, %v844
      %v846 = vpop.f32.mrb[0].mxu0
      %847 = vmatprep.mubr.f32.mxu0 0.0
      %848 = vmatmul.mubr.f32.gmra.mrb[0].mxu0 %v600
      %v849 = vpop.f32.mrb[0].mxu0
      %v850 = vadd.f32 0.0, %v849
      %v851 = vpop.f32.mrb[0].mxu0
      %852 = vmatprep.mubr.f32.mxu0 0.0
      %853 = vmatmul.mubr.f32.gmra.mrb[0].mxu0 %v603
      %v854 = vpop.f32.mrb[0].mxu0
      %v855 = vadd.f32 0.0, %v854
      %v856 = vpop.f32.mrb[0].mxu0
      %857 = vmatprep.mubr.f32.mxu0 0.0
      %858 = vmatmul.mubr.f32.gmra.mrb[0].mxu0 %v606
      %v859 = vpop.f32.mrb[0].mxu0
      %v860 = vadd.f32 0.0, %v859
      %v861 = vpop.f32.mrb[0].mxu0
      %862 = vdwg.mxu0
      %v863 = vmul.f32 %v729, %v825
      %v864 = vmul.f32 %v730, %v830
      %v865 = vmul.f32 %v731, %v835
      %v866 = vmul.f32 %v732, %v840
      %v867 = vmul.f32 %v733, %v845
      %v868 = vmul.f32 %v734, %v850
      %v869 = vmul.f32 %v735, %v855
      %v870 = vmul.f32 %v736, %v860
      %v871 = vld [vmem:[%s4] sm:$0xff]
      %v872 = vld [vmem:[%s4 + $0x8] sm:$0xff]
      %v873 = vld [vmem:[%s4 + $0x10] sm:$0xff]
      %vm874 = vcmask 195584
      %v876 = vsel %vm874, %v863, 0
      %v879 = vsel %vm874, %v864, 0
      %v882 = vsel %vm874, %v865, 0
      %v885 = vsel %vm874, %v866, 0
      %v888 = vsel %vm874, %v867, 0
      %v891 = vsel %vm874, %v868, 0
      %v894 = vsel %vm874, %v869, 0
      %v897 = vsel %vm874, %v870, 0
      %899 = vmatprep.subr.mxu0 0.0
      %900 = vmatpush1.msra.mxu0 %v871
      %901 = vmatprep.subr.mxu0 0.0
      %902 = vmatpush1.msra.mxu0 %v872
      %903 = vmatprep.subr.mxu0 0.0
      %904 = vmatpush1.msra.mxu0 %v873
      %905 = vmatprep.subr.mxu0 0.0
      %906 = vmatpush1.msra.mxu0 0.0
      %907 = vmatprep.subr.mxu0 0.0
      %908 = vmatpush1.msra.mxu0 0.0
      %909 = vmatprep.subr.mxu0 0.0
      %910 = vmatpush1.msra.mxu0 0.0
      %911 = vmatprep.subr.mxu0 0.0
      %912 = vmatpush1.msra.mxu0 0.0
      %913 = vmatprep.subr.mxu0 0.0
      %914 = vmatpush1.msra.mxu0 0.0
      %915 = vmatprep.subr.mxu0 0.0
      %916 = vmatpush1.msra.mxu0 0.0
      %917 = vmatprep.subr.mxu0 0.0
      %918 = vmatpush1.msra.mxu0 0.0
      %919 = vmatprep.subr.mxu0 0.0
      %920 = vmatpush1.msra.mxu0 0.0
      %921 = vmatprep.subr.mxu0 0.0
      %922 = vmatpush1.msra.mxu0 0.0
      %923 = vmatprep.subr.mxu0 0.0
      %924 = vmatpush1.msra.mxu0 0.0
      %925 = vmatprep.subr.mxu0 0.0
      %926 = vmatpush1.msra.mxu0 0.0
      %927 = vmatprep.subr.mxu0 0.0
      %928 = vmatpush1.msra.mxu0 0.0
      %929 = vmatprep.subr.mxu0 0.0
      %930 = vmatpush1.msra.mxu0 0.0
      %931 = vmatprep.subr.mxu0 0.0
      %932 = vmatpush1.msra.mxu0 0.0
      %933 = vmatprep.subr.mxu0 0.0
      %934 = vmatpush1.msra.mxu0 0.0
      %935 = vmatprep.subr.mxu0 0.0
      %936 = vmatpush1.msra.mxu0 0.0
      %937 = vmatprep.subr.mxu0 0.0
      %938 = vmatpush1.msra.mxu0 0.0
      %939 = vmatprep.subr.mxu0 0.0
      %940 = vmatpush1.msra.mxu0 0.0
      %941 = vmatprep.subr.mxu0 0.0
      %942 = vmatpush1.msra.mxu0 0.0
      %943 = vmatprep.subr.mxu0 0.0
      %944 = vmatpush1.msra.mxu0 0.0
      %945 = vmatprep.subr.mxu0 0.0
      %946 = vmatpush1.msra.mxu0 0.0
      %947 = vmatprep.subr.mxu0 0.0
      %948 = vmatpush1.msra.mxu0 0.0
      %949 = vmatprep.subr.mxu0 0.0
      %950 = vmatpush1.msra.mxu0 0.0
      %951 = vmatprep.subr.mxu0 0.0
      %952 = vmatpush1.msra.mxu0 0.0
      %953 = vmatprep.subr.mxu0 0.0
      %954 = vmatpush1.msra.mxu0 0.0
      %955 = vmatprep.subr.mxu0 0.0
      %956 = vmatpush1.msra.mxu0 0.0
      %957 = vmatprep.subr.mxu0 0.0
      %958 = vmatpush1.msra.mxu0 0.0
      %959 = vmatprep.subr.mxu0 0.0
      %960 = vmatpush1.msra.mxu0 0.0
      %961 = vmatprep.subr.mxu0 0.0
      %962 = vmatpush1.msra.mxu0 0.0
      %963 = vmatprep.mubr.f32.mxu0 0.0
      %964 = vmatmul.mubr.f32.gmra.mrb[0].mxu0 %v876
      %v965 = vpop.f32.mrb[0].mxu0
      %v966 = vadd.f32 0.0, %v965
      %v967 = vpop.f32.mrb[0].mxu0
      %968 = vmatprep.mubr.f32.mxu0 0.0
      %969 = vmatmul.mubr.f32.gmra.mrb[0].mxu0 %v879
      %v970 = vpop.f32.mrb[0].mxu0
      %v971 = vadd.f32 0.0, %v970
      %v972 = vpop.f32.mrb[0].mxu0
      %973 = vmatprep.mubr.f32.mxu0 0.0
      %974 = vmatmul.mubr.f32.gmra.mrb[0].mxu0 %v882
      %v975 = vpop.f32.mrb[0].mxu0
      %v976 = vadd.f32 0.0, %v975
      %v977 = vpop.f32.mrb[0].mxu0
      %978 = vmatprep.mubr.f32.mxu0 0.0
      %979 = vmatmul.mubr.f32.gmra.mrb[0].mxu0 %v885
      %v980 = vpop.f32.mrb[0].mxu0
      %v981 = vadd.f32 0.0, %v980
      %v982 = vpop.f32.mrb[0].mxu0
      %983 = vmatprep.mubr.f32.mxu0 0.0
      %984 = vmatmul.mubr.f32.gmra.mrb[0].mxu0 %v888
      %v985 = vpop.f32.mrb[0].mxu0
      %v986 = vadd.f32 0.0, %v985
      %v987 = vpop.f32.mrb[0].mxu0
      %988 = vmatprep.mubr.f32.mxu0 0.0
      %989 = vmatmul.mubr.f32.gmra.mrb[0].mxu0 %v891
      %v990 = vpop.f32.mrb[0].mxu0
      %v991 = vadd.f32 0.0, %v990
      %v992 = vpop.f32.mrb[0].mxu0
      %993 = vmatprep.mubr.f32.mxu0 0.0
      %994 = vmatmul.mubr.f32.gmra.mrb[0].mxu0 %v894
      %v995 = vpop.f32.mrb[0].mxu0
      %v996 = vadd.f32 0.0, %v995
      %v997 = vpop.f32.mrb[0].mxu0
      %998 = vmatprep.mubr.f32.mxu0 0.0
      %999 = vmatmul.mubr.f32.gmra.mrb[0].mxu0 %v897
      %v1000 = vpop.f32.mrb[0].mxu0
      %v1001 = vadd.f32 0.0, %v1000
      %v1002 = vpop.f32.mrb[0].mxu0
      %1003 = vdwg.mxu0
      %v1004 = vmax.f32 %v966, 0.0
      %v1005 = vmax.f32 %v971, 0.0
      %v1006 = vmax.f32 %v976, 0.0
      %v1007 = vmax.f32 %v981, 0.0
      %v1008 = vmax.f32 %v986, 0.0
      %v1009 = vmax.f32 %v991, 0.0
      %v1010 = vmax.f32 %v996, 0.0
      %v1011 = vmax.f32 %v1001, 0.0
      %v1012 = vld [vmem:[%s5] sm:$0xff]
      %v1013 = vld [vmem:[%s5 + $0x8] sm:$0xff]
      %v1014 = vld [vmem:[%s5 + $0x10] sm:$0xff]
      %v1015 = vld [vmem:[%s5 + $0x18] sm:$0xff]
      %v1016 = vld [vmem:[%s5 + $0x20] sm:$0x1]
      %vm1017 = vcmask 269312
      %v1019 = vsel %vm1017, %v1004, 0
      %v1022 = vsel %vm1017, %v1005, 0
      %v1025 = vsel %vm1017, %v1006, 0
      %v1028 = vsel %vm1017, %v1007, 0
      %v1031 = vsel %vm1017, %v1008, 0
      %v1034 = vsel %vm1017, %v1009, 0
      %v1037 = vsel %vm1017, %v1010, 0
      %v1040 = vsel %vm1017, %v1011, 0
      %vm1042 = vcmask 1040384
      %v1044 = vsel %vm1042, %v1016, 0
      %1046 = vmatprep.subr.mxu0 0.0
      %1047 = vmatpush1.msra.mxu0 %v1012
      %1048 = vmatprep.subr.mxu0 0.0
      %1049 = vmatpush1.msra.mxu0 %v1013
      %1050 = vmatprep.subr.mxu0 0.0
      %1051 = vmatpush1.msra.mxu0 %v1014
      %1052 = vmatprep.subr.mxu0 0.0
      %1053 = vmatpush1.msra.mxu0 %v1015
      %1054 = vmatprep.subr.mxu0 0.0
      %1055 = vmatpush1.msra.mxu0 %v1044
      %1056 = vmatprep.subr.mxu0 0.0
      %1057 = vmatpush1.msra.mxu0 0.0
      %1058 = vmatprep.subr.mxu0 0.0
      %1059 = vmatpush1.msra.mxu0 0.0
      %1060 = vmatprep.subr.mxu0 0.0
      %1061 = vmatpush1.msra.mxu0 0.0
      %1062 = vmatprep.subr.mxu0 0.0
      %1063 = vmatpush1.msra.mxu0 0.0
      %1064 = vmatprep.subr.mxu0 0.0
      %1065 = vmatpush1.msra.mxu0 0.0
      %1066 = vmatprep.subr.mxu0 0.0
      %1067 = vmatpush1.msra.mxu0 0.0
      %1068 = vmatprep.subr.mxu0 0.0
      %1069 = vmatpush1.msra.mxu0 0.0
      %1070 = vmatprep.subr.mxu0 0.0
      %1071 = vmatpush1.msra.mxu0 0.0
      %1072 = vmatprep.subr.mxu0 0.0
      %1073 = vmatpush1.msra.mxu0 0.0
      %1074 = vmatprep.subr.mxu0 0.0
      %1075 = vmatpush1.msra.mxu0 0.0
      %1076 = vmatprep.subr.mxu0 0.0
      %1077 = vmatpush1.msra.mxu0 0.0
      %1078 = vmatprep.subr.mxu0 0.0
      %1079 = vmatpush1.msra.mxu0 0.0
      %1080 = vmatprep.subr.mxu0 0.0
      %1081 = vmatpush1.msra.mxu0 0.0
      %1082 = vmatprep.subr.mxu0 0.0
      %1083 = vmatpush1.msra.mxu0 0.0
      %1084 = vmatprep.subr.mxu0 0.0
      %1085 = vmatpush1.msra.mxu0 0.0
      %1086 = vmatprep.subr.mxu0 0.0
      %1087 = vmatpush1.msra.mxu0 0.0
      %1088 = vmatprep.subr.mxu0 0.0
      %1089 = vmatpush1.msra.mxu0 0.0
      %1090 = vmatprep.subr.mxu0 0.0
      %1091 = vmatpush1.msra.mxu0 0.0
      %1092 = vmatprep.subr.mxu0 0.0
      %1093 = vmatpush1.msra.mxu0 0.0
      %1094 = vmatprep.subr.mxu0 0.0
      %1095 = vmatpush1.msra.mxu0 0.0
      %1096 = vmatprep.subr.mxu0 0.0
      %1097 = vmatpush1.msra.mxu0 0.0
      %1098 = vmatprep.subr.mxu0 0.0
      %1099 = vmatpush1.msra.mxu0 0.0
      %1100 = vmatprep.subr.mxu0 0.0
      %1101 = vmatpush1.msra.mxu0 0.0
      %1102 = vmatprep.subr.mxu0 0.0
      %1103 = vmatpush1.msra.mxu0 0.0
      %1104 = vmatprep.subr.mxu0 0.0
      %1105 = vmatpush1.msra.mxu0 0.0
      %1106 = vmatprep.subr.mxu0 0.0
      %1107 = vmatpush1.msra.mxu0 0.0
      %1108 = vmatprep.subr.mxu0 0.0
      %1109 = vmatpush1.msra.mxu0 0.0
      %1110 = vmatprep.mubr.f32.mxu0 0.0
      %1111 = vmatmul.mubr.f32.gmra.mrb[0].mxu0 %v1019
      %v1112 = vpop.f32.mrb[0].mxu0
      %v1113 = vadd.f32 0.0, %v1112
      %v1114 = vpop.f32.mrb[0].mxu0
      %1115 = vmatprep.mubr.f32.mxu0 0.0
      %1116 = vmatmul.mubr.f32.gmra.mrb[0].mxu0 %v1022
      %v1117 = vpop.f32.mrb[0].mxu0
      %v1118 = vadd.f32 0.0, %v1117
      %v1119 = vpop.f32.mrb[0].mxu0
      %1120 = vmatprep.mubr.f32.mxu0 0.0
      %1121 = vmatmul.mubr.f32.gmra.mrb[0].mxu0 %v1025
      %v1122 = vpop.f32.mrb[0].mxu0
      %v1123 = vadd.f32 0.0, %v1122
      %v1124 = vpop.f32.mrb[0].mxu0
      %1125 = vmatprep.mubr.f32.mxu0 0.0
      %1126 = vmatmul.mubr.f32.gmra.mrb[0].mxu0 %v1028
      %v1127 = vpop.f32.mrb[0].mxu0
      %v1128 = vadd.f32 0.0, %v1127
      %v1129 = vpop.f32.mrb[0].mxu0
      %1130 = vmatprep.mubr.f32.mxu0 0.0
      %1131 = vmatmul.mubr.f32.gmra.mrb[0].mxu0 %v1031
      %v1132 = vpop.f32.mrb[0].mxu0
      %v1133 = vadd.f32 0.0, %v1132
      %v1134 = vpop.f32.mrb[0].mxu0
      %1135 = vmatprep.mubr.f32.mxu0 0.0
      %1136 = vmatmul.mubr.f32.gmra.mrb[0].mxu0 %v1034
      %v1137 = vpop.f32.mrb[0].mxu0
      %v1138 = vadd.f32 0.0, %v1137
      %v1139 = vpop.f32.mrb[0].mxu0
      %1140 = vmatprep.mubr.f32.mxu0 0.0
      %1141 = vmatmul.mubr.f32.gmra.mrb[0].mxu0 %v1037
      %v1142 = vpop.f32.mrb[0].mxu0
      %v1143 = vadd.f32 0.0, %v1142
      %v1144 = vpop.f32.mrb[0].mxu0
      %1145 = vmatprep.mubr.f32.mxu0 0.0
      %1146 = vmatmul.mubr.f32.gmra.mrb[0].mxu0 %v1040
      %v1147 = vpop.f32.mrb[0].mxu0
      %v1148 = vadd.f32 0.0, %v1147
      %v1149 = vpop.f32.mrb[0].mxu0
      %1150 = vdwg.mxu0
      %v1151 = vmul.f32 %v1113, %v458
      %v1152 = vmul.f32 %v1118, %v463
      %v1153 = vmul.f32 %v1123, %v468
      %v1154 = vmul.f32 %v1128, %v473
      %v1155 = vmul.f32 %v1133, %v478
      %v1156 = vmul.f32 %v1138, %v483
      %v1157 = vmul.f32 %v1143, %v488
      %v1158 = vmul.f32 %v1148, %v493
      %v1159 = vmul.f32 %v729, %v294
      %v1160 = vmul.f32 %v730, %v294
      %v1161 = vmul.f32 %v731, %v294
      %v1162 = vmul.f32 %v732, %v294
      %v1163 = vmul.f32 %v733, %v294
      %v1164 = vmul.f32 %v734, %v294
      %v1165 = vmul.f32 %v735, %v294
      %v1166 = vmul.f32 %v736, %v294
      %v1167 = vsub.f32 %v1159, %v1151
      %v1168 = vsub.f32 %v1160, %v1152
      %v1169 = vsub.f32 %v1161, %v1153
      %v1170 = vsub.f32 %v1162, %v1154
      %v1171 = vsub.f32 %v1163, %v1155
      %v1172 = vsub.f32 %v1164, %v1156
      %v1173 = vsub.f32 %v1165, %v1157
      %v1174 = vsub.f32 %v1166, %v1158
      %v1175 = vmul.f32 %v729, %v290
      %v1176 = vmul.f32 %v730, %v290
      %v1177 = vmul.f32 %v731, %v290
      %v1178 = vmul.f32 %v732, %v290
      %v1179 = vmul.f32 %v733, %v290
      %v1180 = vmul.f32 %v734, %v290
      %v1181 = vmul.f32 %v735, %v290
      %v1182 = vmul.f32 %v736, %v290
      %v1183 = vadd.f32 %v1175, %v1167
      %v1184 = vadd.f32 %v1176, %v1168
      %v1185 = vadd.f32 %v1177, %v1169
      %v1186 = vadd.f32 %v1178, %v1170
      %v1187 = vadd.f32 %v1179, %v1171
      %v1188 = vadd.f32 %v1180, %v1172
      %v1189 = vadd.f32 %v1181, %v1173
      %v1190 = vadd.f32 %v1182, %v1174
      %v1191 = vmul.f32 %v1183, %v1183
      %v1192 = vmul.f32 %v1184, %v1184
      %v1193 = vmul.f32 %v1185, %v1185
      %v1194 = vmul.f32 %v1186, %v1186
      %v1195 = vmul.f32 %v1187, %v1187
      %v1196 = vmul.f32 %v1188, %v1188
      %v1197 = vmul.f32 %v1189, %v1189
      %v1198 = vmul.f32 %v1190, %v1190
      %v1200 = vsel %vm874, %v1191, 0
      %v1203 = vsel %vm874, %v1192, 0
      %v1206 = vsel %vm874, %v1193, 0
      %v1209 = vsel %vm874, %v1194, 0
      %v1212 = vsel %vm874, %v1195, 0
      %v1215 = vsel %vm874, %v1196, 0
      %v1218 = vsel %vm874, %v1197, 0
      %v1221 = vsel %vm874, %v1198, 0
      %1223 = vmatprep.subr.mxu0 0.0
      %1224 = vmatpush1.msra.mxu0 %v400
      %1225 = vmatprep.subr.mxu0 0.0
      %1226 = vmatpush1.msra.mxu0 %v401
      %1227 = vmatprep.subr.mxu0 0.0
      %1228 = vmatpush1.msra.mxu0 %v402
      %1229 = vmatprep.subr.mxu0 0.0
      %1230 = vmatpush1.msra.mxu0 0.0
      %1231 = vmatprep.subr.mxu0 0.0
      %1232 = vmatpush1.msra.mxu0 0.0
      %1233 = vmatprep.subr.mxu0 0.0
      %1234 = vmatpush1.msra.mxu0 0.0
      %1235 = vmatprep.subr.mxu0 0.0
      %1236 = vmatpush1.msra.mxu0 0.0
      %1237 = vmatprep.subr.mxu0 0.0
      %1238 = vmatpush1.msra.mxu0 0.0
      %1239 = vmatprep.subr.mxu0 0.0
      %1240 = vmatpush1.msra.mxu0 0.0
      %1241 = vmatprep.subr.mxu0 0.0
      %1242 = vmatpush1.msra.mxu0 0.0
      %1243 = vmatprep.subr.mxu0 0.0
      %1244 = vmatpush1.msra.mxu0 0.0
      %1245 = vmatprep.subr.mxu0 0.0
      %1246 = vmatpush1.msra.mxu0 0.0
      %1247 = vmatprep.subr.mxu0 0.0
      %1248 = vmatpush1.msra.mxu0 0.0
      %1249 = vmatprep.subr.mxu0 0.0
      %1250 = vmatpush1.msra.mxu0 0.0
      %1251 = vmatprep.subr.mxu0 0.0
      %1252 = vmatpush1.msra.mxu0 0.0
      %1253 = vmatprep.subr.mxu0 0.0
      %1254 = vmatpush1.msra.mxu0 0.0
      %1255 = vmatprep.subr.mxu0 0.0
      %1256 = vmatpush1.msra.mxu0 0.0
      %1257 = vmatprep.subr.mxu0 0.0
      %1258 = vmatpush1.msra.mxu0 0.0
      %1259 = vmatprep.subr.mxu0 0.0
      %1260 = vmatpush1.msra.mxu0 0.0
      %1261 = vmatprep.subr.mxu0 0.0
      %1262 = vmatpush1.msra.mxu0 0.0
      %1263 = vmatprep.subr.mxu0 0.0
      %1264 = vmatpush1.msra.mxu0 0.0
      %1265 = vmatprep.subr.mxu0 0.0
      %1266 = vmatpush1.msra.mxu0 0.0
      %1267 = vmatprep.subr.mxu0 0.0
      %1268 = vmatpush1.msra.mxu0 0.0
      %1269 = vmatprep.subr.mxu0 0.0
      %1270 = vmatpush1.msra.mxu0 0.0
      %1271 = vmatprep.subr.mxu0 0.0
      %1272 = vmatpush1.msra.mxu0 0.0
      %1273 = vmatprep.subr.mxu0 0.0
      %1274 = vmatpush1.msra.mxu0 0.0
      %1275 = vmatprep.subr.mxu0 0.0
      %1276 = vmatpush1.msra.mxu0 0.0
      %1277 = vmatprep.subr.mxu0 0.0
      %1278 = vmatpush1.msra.mxu0 0.0
      %1279 = vmatprep.subr.mxu0 0.0
      %1280 = vmatpush1.msra.mxu0 0.0
      %1281 = vmatprep.subr.mxu0 0.0
      %1282 = vmatpush1.msra.mxu0 0.0
      %1283 = vmatprep.subr.mxu0 0.0
      %1284 = vmatpush1.msra.mxu0 0.0
      %1285 = vmatprep.subr.mxu0 0.0
      %1286 = vmatpush1.msra.mxu0 0.0
      %1287 = vmatprep.mubr.f32.mxu0 0.0
      %1288 = vmatmul.mubr.f32.gmra.mrb[0].mxu0 %v1200
      %v1289 = vpop.f32.mrb[0].mxu0
      %v1290 = vadd.f32 0.0, %v1289
      %v1291 = vpop.f32.mrb[0].mxu0
      %1292 = vmatprep.mubr.f32.mxu0 0.0
      %1293 = vmatmul.mubr.f32.gmra.mrb[0].mxu0 %v1203
      %v1294 = vpop.f32.mrb[0].mxu0
      %v1295 = vadd.f32 0.0, %v1294
      %v1296 = vpop.f32.mrb[0].mxu0
      %1297 = vmatprep.mubr.f32.mxu0 0.0
      %1298 = vmatmul.mubr.f32.gmra.mrb[0].mxu0 %v1206
      %v1299 = vpop.f32.mrb[0].mxu0
      %v1300 = vadd.f32 0.0, %v1299
      %v1301 = vpop.f32.mrb[0].mxu0
      %1302 = vmatprep.mubr.f32.mxu0 0.0
      %1303 = vmatmul.mubr.f32.gmra.mrb[0].mxu0 %v1209
      %v1304 = vpop.f32.mrb[0].mxu0
      %v1305 = vadd.f32 0.0, %v1304
      %v1306 = vpop.f32.mrb[0].mxu0
      %1307 = vmatprep.mubr.f32.mxu0 0.0
      %1308 = vmatmul.mubr.f32.gmra.mrb[0].mxu0 %v1212
      %v1309 = vpop.f32.mrb[0].mxu0
      %v1310 = vadd.f32 0.0, %v1309
      %v1311 = vpop.f32.mrb[0].mxu0
      %1312 = vmatprep.mubr.f32.mxu0 0.0
      %1313 = vmatmul.mubr.f32.gmra.mrb[0].mxu0 %v1215
      %v1314 = vpop.f32.mrb[0].mxu0
      %v1315 = vadd.f32 0.0, %v1314
      %v1316 = vpop.f32.mrb[0].mxu0
      %1317 = vmatprep.mubr.f32.mxu0 0.0
      %1318 = vmatmul.mubr.f32.gmra.mrb[0].mxu0 %v1218
      %v1319 = vpop.f32.mrb[0].mxu0
      %v1320 = vadd.f32 0.0, %v1319
      %v1321 = vpop.f32.mrb[0].mxu0
      %1322 = vmatprep.mubr.f32.mxu0 0.0
      %1323 = vmatmul.mubr.f32.gmra.mrb[0].mxu0 %v1221
      %v1324 = vpop.f32.mrb[0].mxu0
      %v1325 = vadd.f32 0.0, %v1324
      %v1326 = vpop.f32.mrb[0].mxu0
      %1327 = vdwg.mxu0
      %1328 = vmatprep.subr.mxu0 0.0
      %1329 = vmatpush1.msra.mxu0 %v1290
      %1330 = vmatprep.subr.mxu0 0.0
      %1331 = vmatpush1.msra.mxu0 %v1295
      %1332 = vmatprep.subr.mxu0 0.0
      %1333 = vmatpush1.msra.mxu0 %v1300
      %1334 = vmatprep.subr.mxu0 0.0
      %1335 = vmatpush1.msra.mxu0 %v1305
      %1336 = vmatprep.subr.mxu0 0.0
      %1337 = vmatpush1.msra.mxu0 %v1310
      %1338 = vmatprep.subr.mxu0 0.0
      %1339 = vmatpush1.msra.mxu0 %v1315
      %1340 = vmatprep.subr.mxu0 0.0
      %1341 = vmatpush1.msra.mxu0 %v1320
      %1342 = vmatprep.subr.mxu0 0.0
      %1343 = vmatpush1.msra.mxu0 %v1325
      %1344 = vmatprep.subr.mxu0 0.0
      %1345 = vmatpush1.msra.mxu0 0.0
      %1346 = vmatprep.subr.mxu0 0.0
      %1347 = vmatpush1.msra.mxu0 0.0
      %1348 = vmatprep.subr.mxu0 0.0
      %1349 = vmatpush1.msra.mxu0 0.0
      %1350 = vmatprep.subr.mxu0 0.0
      %1351 = vmatpush1.msra.mxu0 0.0
      %1352 = vmatprep.subr.mxu0 0.0
      %1353 = vmatpush1.msra.mxu0 0.0
      %1354 = vmatprep.subr.mxu0 0.0
      %1355 = vmatpush1.msra.mxu0 0.0
      %1356 = vmatprep.subr.mxu0 0.0
      %1357 = vmatpush1.msra.mxu0 0.0
      %1358 = vmatprep.subr.mxu0 0.0
      %1359 = vmatpush1.msra.mxu0 0.0
      %1360 = vmatprep.subr.mxu0 0.0
      %1361 = vmatpush1.msra.mxu0 0.0
      %1362 = vmatprep.subr.mxu0 0.0
      %1363 = vmatpush1.msra.mxu0 0.0
      %1364 = vmatprep.subr.mxu0 0.0
      %1365 = vmatpush1.msra.mxu0 0.0
      %1366 = vmatprep.subr.mxu0 0.0
      %1367 = vmatpush1.msra.mxu0 0.0
      %1368 = vmatprep.subr.mxu0 0.0
      %1369 = vmatpush1.msra.mxu0 0.0
      %1370 = vmatprep.subr.mxu0 0.0
      %1371 = vmatpush1.msra.mxu0 0.0
      %1372 = vmatprep.subr.mxu0 0.0
      %1373 = vmatpush1.msra.mxu0 0.0
      %1374 = vmatprep.subr.mxu0 0.0
      %1375 = vmatpush1.msra.mxu0 0.0
      %1376 = vmatprep.subr.mxu0 0.0
      %1377 = vmatpush1.msra.mxu0 0.0
      %1378 = vmatprep.subr.mxu0 0.0
      %1379 = vmatpush1.msra.mxu0 0.0
      %1380 = vmatprep.subr.mxu0 0.0
      %1381 = vmatpush1.msra.mxu0 0.0
      %1382 = vmatprep.subr.mxu0 0.0
      %1383 = vmatpush1.msra.mxu0 0.0
      %1384 = vmatprep.subr.mxu0 0.0
      %1385 = vmatpush1.msra.mxu0 0.0
      %1386 = vmatprep.subr.mxu0 0.0
      %1387 = vmatpush1.msra.mxu0 0.0
      %1388 = vmatprep.subr.mxu0 0.0
      %1389 = vmatpush1.msra.mxu0 0.0
      %1390 = vmatprep.subr.mxu0 0.0
      %1391 = vmatpush1.msra.mxu0 0.0
      %1392 = vmatprep.mubr.f32.mxu0 0.0
      %1393 = vmatmul.mubr.f32.gmra.mrb[0].mxu0 %v505
      %v1394 = vpop.f32.mrb[0].mxu0
      %v1395 = vadd.f32 0.0, %v1394
      %v1396 = vpop.f32.mrb[0].mxu0
      %1397 = vdwg.mxu0
      %v1398 = vmul.f32 %v1395, 0.00625
      %v1399 = vlog2.pop %v423
      %v1400 = vmul.f32 %v1399, 0.6931472
      %v1401 = vmul.f32 %v1400, 0.5
      %v1402 = vsub.f32 0.0, %v1401
      %v1403 = vmul.f32 %v423, 0.5
      %v1404 = vadd.f32 %v1402, %v1403
      %v1405 = vsub.f32 %v1404, 0.5
      %v1406 = vmul.f32 %v411, 7.0
      %v1407 = vsub.f32 %v411, 1.0
      %v1408 = vmul.f32 %v1407, 3.0
      %v1409 = vadd.f32 %v1406, %v1408
      %v1410 = vmax.f32 %v1409, 0.0
      %1412 = vrot.lane.b32.xlu0 %v1410, 125
      %v1413 = vpop.permute.xlu0 %1412
      %v1415 = vmul.f32 %v1405, %v1413
      %v1416 = vmul.f32 %v424, 0.5
      %1418 = vrot.lane.b32.xlu0 %v1395, 127
      %v1419 = vpop.permute.xlu0 %1418
      %v1421 = vmul.f32 %v1416, %v1419
      %v1422 = vadd.f32 %v1415, %v1421
      %vm1423 = vcmp.gt.f32.partialorder %v411, 0.5
      %1425 = vrot.lane.b32.xlu0 %v1398, 3
      %v1426 = vpop.permute.xlu0 %1425
      %v1428 = vsel %vm1423, 0.0, %v1426
      %1430 = vrot.lane.b32.xlu0 %v1428, 126
      %v1431 = vpop.permute.xlu0 %1430
      %v1433 = vadd.f32 %v1422, %v1431
      %1435 = vset.pattern.permute.xlu0 1
      %1436 = vperm.xlu0 %1435, %v1433
      %v1437 = vpop.permute.xlu0 %1436
      %1439 = vst [vmem:[%s270] sm:$0xff] %v1437
      %s1440 = sld [smem:[#allocation3 + %s23]]
      %p1441 = scmp.gt.s32.totalorder %s1440, 0
      // Predicated region
      $region41: #{gfmdiff_forward.1} parent=39 // pred_check
        %p1442 = pneg %p1441
      $region42: #{gfmdiff_forward.1} parent=39 // pred_check_branch
        %1444 = sbr.rel (%p1442) target = $region44
      $region43: #{gfmdiff_forward.1} parent=39 // pred_region
        %vm1445 = vcmp.eq.s32.totalorder %v272, 5
        %v1446 = vsel %vm1445, 9.0, 4.0
        %vm1447 = vcmp.lt.s32.totalorder %v272, 7
        %v1448 = vadd.s32 %v272, 3
        %vm1449 = vcmp.eq.s32.totalorder %v302, %v1448
        %vm1450 = vcmp.eq.s32.totalorder %v311, %v1448
        %vm1451 = vcmp.eq.s32.totalorder %v312, %v1448
        %vm1452 = vmand %vm1447, %vm1449
        %vm1453 = vmand %vm1447, %vm1450
        %vm1454 = vmand %vm1447, %vm1451
        %v1455 = vsel %vm1452, %v1446, 0.0
        %v1456 = vsel %vm1453, %v1446, 0.0
        %v1457 = vsel %vm1454, %v1446, 0.0
        %v1458 = vadd.s32 %v1448, 12
        %vm1459 = vcmp.eq.s32.totalorder %v302, %v1458
        %vm1460 = vcmp.eq.s32.totalorder %v311, %v1458
        %vm1461 = vcmp.eq.s32.totalorder %v312, %v1458
        %vm1462 = vmand %vm1447, %vm1459
        %vm1463 = vmand %vm1447, %vm1460
        %vm1464 = vmand %vm1447, %vm1461
        %vm1465 = vmor %vm1452, %vm1462
        %vm1466 = vmor %vm1453, %vm1463
        %vm1467 = vmor %vm1454, %vm1464
        %v1468 = vsel %vm1465, %v1446, 0.0
        %v1469 = vsel %vm1466, %v1446, 0.0
        %v1470 = vsel %vm1467, %v1446, 0.0
        %vm1471 = vcmp.lt.s32.totalorder %v272, 5
        %v1472 = vsel %vm1471, 1, 0
        %v1473 = vcvt.s32.f32 %v1472
        %vm1474 = vcmp.ge.s32.totalorder %v272, 5
        %vm1475 = vmand %vm1474, %vm1447
        %v1476 = vsel %vm1475, 1, 0
        %v1477 = vcvt.s32.f32 %v1476
        %vm1478 = vcmp.eq.s32.totalorder %v272, 6
        %v1479 = vsel %vm1471, 4.0, 1.0
        %v1480 = vsel %vm1478, 4.0, %v1479
        %v1481 = vsel %vm1445, 9.0, %v1480
        %v1482 = vmul.f32 %v1395, -0.020833334
        %1483 = vmatprep.subr.mxu0 0.0
        %1484 = vmatpush1.msra.mxu0 %v1468
        %1485 = vmatprep.subr.mxu0 0.0
        %1486 = vmatpush1.msra.mxu0 %v1469
        %1487 = vmatprep.subr.mxu0 0.0
        %1488 = vmatpush1.msra.mxu0 %v1470
        %1489 = vmatprep.subr.mxu0 0.0
        %1490 = vmatpush1.msra.mxu0 0.0
        %1491 = vmatprep.subr.mxu0 0.0
        %1492 = vmatpush1.msra.mxu0 0.0
        %1493 = vmatprep.subr.mxu0 0.0
        %1494 = vmatpush1.msra.mxu0 0.0
        %1495 = vmatprep.subr.mxu0 0.0
        %1496 = vmatpush1.msra.mxu0 0.0
        %1497 = vmatprep.subr.mxu0 0.0
        %1498 = vmatpush1.msra.mxu0 0.0
        %1499 = vmatprep.subr.mxu0 0.0
        %1500 = vmatpush1.msra.mxu0 0.0
        %1501 = vmatprep.subr.mxu0 0.0
        %1502 = vmatpush1.msra.mxu0 0.0
        %1503 = vmatprep.subr.mxu0 0.0
        %1504 = vmatpush1.msra.mxu0 0.0
        %1505 = vmatprep.subr.mxu0 0.0
        %1506 = vmatpush1.msra.mxu0 0.0
        %1507 = vmatprep.subr.mxu0 0.0
        %1508 = vmatpush1.msra.mxu0 0.0
        %1509 = vmatprep.subr.mxu0 0.0
        %1510 = vmatpush1.msra.mxu0 0.0
        %1511 = vmatprep.subr.mxu0 0.0
        %1512 = vmatpush1.msra.mxu0 0.0
        %1513 = vmatprep.subr.mxu0 0.0
        %1514 = vmatpush1.msra.mxu0 0.0
        %1515 = vmatprep.subr.mxu0 0.0
        %1516 = vmatpush1.msra.mxu0 0.0
        %1517 = vmatprep.subr.mxu0 0.0
        %1518 = vmatpush1.msra.mxu0 0.0
        %1519 = vmatprep.subr.mxu0 0.0
        %1520 = vmatpush1.msra.mxu0 0.0
        %1521 = vmatprep.subr.mxu0 0.0
        %1522 = vmatpush1.msra.mxu0 0.0
        %1523 = vmatprep.subr.mxu0 0.0
        %1524 = vmatpush1.msra.mxu0 0.0
        %1525 = vmatprep.subr.mxu0 0.0
        %1526 = vmatpush1.msra.mxu0 0.0
        %1527 = vmatprep.subr.mxu0 0.0
        %1528 = vmatpush1.msra.mxu0 0.0
        %1529 = vmatprep.subr.mxu0 0.0
        %1530 = vmatpush1.msra.mxu0 0.0
        %1531 = vmatprep.subr.mxu0 0.0
        %1532 = vmatpush1.msra.mxu0 0.0
        %1533 = vmatprep.subr.mxu0 0.0
        %1534 = vmatpush1.msra.mxu0 0.0
        %1535 = vmatprep.subr.mxu0 0.0
        %1536 = vmatpush1.msra.mxu0 0.0
        %1537 = vmatprep.subr.mxu0 0.0
        %1538 = vmatpush1.msra.mxu0 0.0
        %1539 = vmatprep.subr.mxu0 0.0
        %1540 = vmatpush1.msra.mxu0 0.0
        %1541 = vmatprep.subr.mxu0 0.0
        %1542 = vmatpush1.msra.mxu0 0.0
        %1543 = vmatprep.subr.mxu0 0.0
        %1544 = vmatpush1.msra.mxu0 0.0
        %1545 = vmatprep.subr.mxu0 0.0
        %1546 = vmatpush1.msra.mxu0 0.0
        %1547 = vmatprep.mubr.f32.mxu0 0.0
        %1548 = vmatmul.mubr.f32.gmra.mrb[0].mxu0 %v876
        %v1549 = vpop.f32.mrb[0].mxu0
        %v1550 = vadd.f32 0.0, %v1549
        %v1551 = vpop.f32.mrb[0].mxu0
        %1552 = vmatprep.mubr.f32.mxu0 0.0
        %1553 = vmatmul.mubr.f32.gmra.mrb[0].mxu0 %v879
        %v1554 = vpop.f32.mrb[0].mxu0
        %v1555 = vadd.f32 0.0, %v1554
        %v1556 = vpop.f32.mrb[0].mxu0
        %1557 = vmatprep.mubr.f32.mxu0 0.0
        %1558 = vmatmul.mubr.f32.gmra.mrb[0].mxu0 %v882
        %v1559 = vpop.f32.mrb[0].mxu0
        %v1560 = vadd.f32 0.0, %v1559
        %v1561 = vpop.f32.mrb[0].mxu0
        %1562 = vmatprep.mubr.f32.mxu0 0.0
        %1563 = vmatmul.mubr.f32.gmra.mrb[0].mxu0 %v885
        %v1564 = vpop.f32.mrb[0].mxu0
        %v1565 = vadd.f32 0.0, %v1564
        %v1566 = vpop.f32.mrb[0].mxu0
        %1567 = vmatprep.mubr.f32.mxu0 0.0
        %1568 = vmatmul.mubr.f32.gmra.mrb[0].mxu0 %v888
        %v1569 = vpop.f32.mrb[0].mxu0
        %v1570 = vadd.f32 0.0, %v1569
        %v1571 = vpop.f32.mrb[0].mxu0
        %1572 = vmatprep.mubr.f32.mxu0 0.0
        %1573 = vmatmul.mubr.f32.gmra.mrb[0].mxu0 %v891
        %v1574 = vpop.f32.mrb[0].mxu0
        %v1575 = vadd.f32 0.0, %v1574
        %v1576 = vpop.f32.mrb[0].mxu0
        %1577 = vmatprep.mubr.f32.mxu0 0.0
        %1578 = vmatmul.mubr.f32.gmra.mrb[0].mxu0 %v894
        %v1579 = vpop.f32.mrb[0].mxu0
        %v1580 = vadd.f32 0.0, %v1579
        %v1581 = vpop.f32.mrb[0].mxu0
        %1582 = vmatprep.mubr.f32.mxu0 0.0
        %1583 = vmatmul.mubr.f32.gmra.mrb[0].mxu0 %v897
        %v1584 = vpop.f32.mrb[0].mxu0
        %v1585 = vadd.f32 0.0, %v1584
        %v1586 = vpop.f32.mrb[0].mxu0
        %1587 = vdwg.mxu0
        %v1589 = vsel %vm874, %v729, 0
        %v1592 = vsel %vm874, %v730, 0
        %v1595 = vsel %vm874, %v731, 0
        %v1598 = vsel %vm874, %v732, 0
        %v1601 = vsel %vm874, %v733, 0
        %v1604 = vsel %vm874, %v734, 0
        %v1607 = vsel %vm874, %v735, 0
        %v1610 = vsel %vm874, %v736, 0
        %1612 = vmatprep.subr.mxu0 0.0
        %1613 = vmatpush1.msra.mxu0 %v1455
        %1614 = vmatprep.subr.mxu0 0.0
        %1615 = vmatpush1.msra.mxu0 %v1456
        %1616 = vmatprep.subr.mxu0 0.0
        %1617 = vmatpush1.msra.mxu0 %v1457
        %1618 = vmatprep.subr.mxu0 0.0
        %1619 = vmatpush1.msra.mxu0 0.0
        %1620 = vmatprep.subr.mxu0 0.0
        %1621 = vmatpush1.msra.mxu0 0.0
        %1622 = vmatprep.subr.mxu0 0.0
        %1623 = vmatpush1.msra.mxu0 0.0
        %1624 = vmatprep.subr.mxu0 0.0
        %1625 = vmatpush1.msra.mxu0 0.0
        %1626 = vmatprep.subr.mxu0 0.0
        %1627 = vmatpush1.msra.mxu0 0.0
        %1628 = vmatprep.subr.mxu0 0.0
        %1629 = vmatpush1.msra.mxu0 0.0
        %1630 = vmatprep.subr.mxu0 0.0
        %1631 = vmatpush1.msra.mxu0 0.0
        %1632 = vmatprep.subr.mxu0 0.0
        %1633 = vmatpush1.msra.mxu0 0.0
        %1634 = vmatprep.subr.mxu0 0.0
        %1635 = vmatpush1.msra.mxu0 0.0
        %1636 = vmatprep.subr.mxu0 0.0
        %1637 = vmatpush1.msra.mxu0 0.0
        %1638 = vmatprep.subr.mxu0 0.0
        %1639 = vmatpush1.msra.mxu0 0.0
        %1640 = vmatprep.subr.mxu0 0.0
        %1641 = vmatpush1.msra.mxu0 0.0
        %1642 = vmatprep.subr.mxu0 0.0
        %1643 = vmatpush1.msra.mxu0 0.0
        %1644 = vmatprep.subr.mxu0 0.0
        %1645 = vmatpush1.msra.mxu0 0.0
        %1646 = vmatprep.subr.mxu0 0.0
        %1647 = vmatpush1.msra.mxu0 0.0
        %1648 = vmatprep.subr.mxu0 0.0
        %1649 = vmatpush1.msra.mxu0 0.0
        %1650 = vmatprep.subr.mxu0 0.0
        %1651 = vmatpush1.msra.mxu0 0.0
        %1652 = vmatprep.subr.mxu0 0.0
        %1653 = vmatpush1.msra.mxu0 0.0
        %1654 = vmatprep.subr.mxu0 0.0
        %1655 = vmatpush1.msra.mxu0 0.0
        %1656 = vmatprep.subr.mxu0 0.0
        %1657 = vmatpush1.msra.mxu0 0.0
        %1658 = vmatprep.subr.mxu0 0.0
        %1659 = vmatpush1.msra.mxu0 0.0
        %1660 = vmatprep.subr.mxu0 0.0
        %1661 = vmatpush1.msra.mxu0 0.0
        %1662 = vmatprep.subr.mxu0 0.0
        %1663 = vmatpush1.msra.mxu0 0.0
        %1664 = vmatprep.subr.mxu0 0.0
        %1665 = vmatpush1.msra.mxu0 0.0
        %1666 = vmatprep.subr.mxu0 0.0
        %1667 = vmatpush1.msra.mxu0 0.0
        %1668 = vmatprep.subr.mxu0 0.0
        %1669 = vmatpush1.msra.mxu0 0.0
        %1670 = vmatprep.subr.mxu0 0.0
        %1671 = vmatpush1.msra.mxu0 0.0
        %1672 = vmatprep.subr.mxu0 0.0
        %1673 = vmatpush1.msra.mxu0 0.0
        %1674 = vmatprep.subr.mxu0 0.0
        %1675 = vmatpush1.msra.mxu0 0.0
        %1676 = vmatprep.mubr.f32.mxu0 0.0
        %1677 = vmatmul.mubr.f32.gmra.mrb[0].mxu0 %v1589
        %v1678 = vpop.f32.mrb[0].mxu0
        %v1679 = vadd.f32 0.0, %v1678
        %v1680 = vpop.f32.mrb[0].mxu0
        %1681 = vmatprep.mubr.f32.mxu0 0.0
        %1682 = vmatmul.mubr.f32.gmra.mrb[0].mxu0 %v1592
        %v1683 = vpop.f32.mrb[0].mxu0
        %v1684 = vadd.f32 0.0, %v1683
        %v1685 = vpop.f32.mrb[0].mxu0
        %1686 = vmatprep.mubr.f32.mxu0 0.0
        %1687 = vmatmul.mubr.f32.gmra.mrb[0].mxu0 %v1595
        %v1688 = vpop.f32.mrb[0].mxu0
        %v1689 = vadd.f32 0.0, %v1688
        %v1690 = vpop.f32.mrb[0].mxu0
        %1691 = vmatprep.mubr.f32.mxu0 0.0
        %1692 = vmatmul.mubr.f32.gmra.mrb[0].mxu0 %v1598
        %v1693 = vpop.f32.mrb[0].mxu0
        %v1694 = vadd.f32 0.0, %v1693
        %v1695 = vpop.f32.mrb[0].mxu0
        %1696 = vmatprep.mubr.f32.mxu0 0.0
        %1697 = vmatmul.mubr.f32.gmra.mrb[0].mxu0 %v1601
        %v1698 = vpop.f32.mrb[0].mxu0
        %v1699 = vadd.f32 0.0, %v1698
        %v1700 = vpop.f32.mrb[0].mxu0
        %1701 = vmatprep.mubr.f32.mxu0 0.0
        %1702 = vmatmul.mubr.f32.gmra.mrb[0].mxu0 %v1604
        %v1703 = vpop.f32.mrb[0].mxu0
        %v1704 = vadd.f32 0.0, %v1703
        %v1705 = vpop.f32.mrb[0].mxu0
        %1706 = vmatprep.mubr.f32.mxu0 0.0
        %1707 = vmatmul.mubr.f32.gmra.mrb[0].mxu0 %v1607
        %v1708 = vpop.f32.mrb[0].mxu0
        %v1709 = vadd.f32 0.0, %v1708
        %v1710 = vpop.f32.mrb[0].mxu0
        %1711 = vmatprep.mubr.f32.mxu0 0.0
        %1712 = vmatmul.mubr.f32.gmra.mrb[0].mxu0 %v1610
        %v1713 = vpop.f32.mrb[0].mxu0
        %v1714 = vadd.f32 0.0, %v1713
        %v1715 = vpop.f32.mrb[0].mxu0
        %1716 = vdwg.mxu0
        %1717 = vmatprep.subr.mxu0 0.0
        %1718 = vmatpush1.msra.mxu0 %v431
        %1719 = vmatprep.subr.mxu0 0.0
        %1720 = vmatpush1.msra.mxu0 0.0
        %1721 = vmatprep.subr.mxu0 0.0
        %1722 = vmatpush1.msra.mxu0 0.0
        %1723 = vmatprep.subr.mxu0 0.0
        %1724 = vmatpush1.msra.mxu0 0.0
        %1725 = vmatprep.subr.mxu0 0.0
        %1726 = vmatpush1.msra.mxu0 0.0
        %1727 = vmatprep.subr.mxu0 0.0
        %1728 = vmatpush1.msra.mxu0 0.0
        %1729 = vmatprep.subr.mxu0 0.0
        %1730 = vmatpush1.msra.mxu0 0.0
        %1731 = vmatprep.subr.mxu0 0.0
        %1732 = vmatpush1.msra.mxu0 0.0
        %1733 = vmatprep.subr.mxu0 0.0
        %1734 = vmatpush1.msra.mxu0 0.0
        %1735 = vmatprep.subr.mxu0 0.0
        %1736 = vmatpush1.msra.mxu0 0.0
        %1737 = vmatprep.subr.mxu0 0.0
        %1738 = vmatpush1.msra.mxu0 0.0
        %1739 = vmatprep.subr.mxu0 0.0
        %1740 = vmatpush1.msra.mxu0 0.0
        %1741 = vmatprep.subr.mxu0 0.0
        %1742 = vmatpush1.msra.mxu0 0.0
        %1743 = vmatprep.subr.mxu0 0.0
        %1744 = vmatpush1.msra.mxu0 0.0
        %1745 = vmatprep.subr.mxu0 0.0
        %1746 = vmatpush1.msra.mxu0 0.0
        %1747 = vmatprep.subr.mxu0 0.0
        %1748 = vmatpush1.msra.mxu0 0.0
        %1749 = vmatprep.subr.mxu0 0.0
        %1750 = vmatpush1.msra.mxu0 0.0
        %1751 = vmatprep.subr.mxu0 0.0
        %1752 = vmatpush1.msra.mxu0 0.0
        %1753 = vmatprep.subr.mxu0 0.0
        %1754 = vmatpush1.msra.mxu0 0.0
        %1755 = vmatprep.subr.mxu0 0.0
        %1756 = vmatpush1.msra.mxu0 0.0
        %1757 = vmatprep.subr.mxu0 0.0
        %1758 = vmatpush1.msra.mxu0 0.0
        %1759 = vmatprep.subr.mxu0 0.0
        %1760 = vmatpush1.msra.mxu0 0.0
        %1761 = vmatprep.subr.mxu0 0.0
        %1762 = vmatpush1.msra.mxu0 0.0
        %1763 = vmatprep.subr.mxu0 0.0
        %1764 = vmatpush1.msra.mxu0 0.0
        %1765 = vmatprep.subr.mxu0 0.0
        %1766 = vmatpush1.msra.mxu0 0.0
        %1767 = vmatprep.subr.mxu0 0.0
        %1768 = vmatpush1.msra.mxu0 0.0
        %1769 = vmatprep.subr.mxu0 0.0
        %1770 = vmatpush1.msra.mxu0 0.0
        %1771 = vmatprep.subr.mxu0 0.0
        %1772 = vmatpush1.msra.mxu0 0.0
        %1773 = vmatprep.subr.mxu0 0.0
        %1774 = vmatpush1.msra.mxu0 0.0
        %1775 = vmatprep.subr.mxu0 0.0
        %1776 = vmatpush1.msra.mxu0 0.0
        %1777 = vmatprep.subr.mxu0 0.0
        %1778 = vmatpush1.msra.mxu0 0.0
        %1779 = vmatprep.subr.mxu0 0.0
        %1780 = vmatpush1.msra.mxu0 0.0
        %1781 = vmatprep.mubr.f32.mxu0 0.0
        %1782 = vmatmul.mubr.f32.gmra.mrb[0].mxu0 %v585
        %v1783 = vpop.f32.mrb[0].mxu0
        %v1784 = vadd.f32 0.0, %v1783
        %v1785 = vpop.f32.mrb[0].mxu0
        %1786 = vmatprep.mubr.f32.mxu0 0.0
        %1787 = vmatmul.mubr.f32.gmra.mrb[0].mxu0 %v588
        %v1788 = vpop.f32.mrb[0].mxu0
        %v1789 = vadd.f32 0.0, %v1788
        %v1790 = vpop.f32.mrb[0].mxu0
        %1791 = vmatprep.mubr.f32.mxu0 0.0
        %1792 = vmatmul.mubr.f32.gmra.mrb[0].mxu0 %v591
        %v1793 = vpop.f32.mrb[0].mxu0
        %v1794 = vadd.f32 0.0, %v1793
        %v1795 = vpop.f32.mrb[0].mxu0
        %1796 = vmatprep.mubr.f32.mxu0 0.0
        %1797 = vmatmul.mubr.f32.gmra.mrb[0].mxu0 %v594
        %v1798 = vpop.f32.mrb[0].mxu0
        %v1799 = vadd.f32 0.0, %v1798
        %v1800 = vpop.f32.mrb[0].mxu0
        %1801 = vmatprep.mubr.f32.mxu0 0.0
        %1802 = vmatmul.mubr.f32.gmra.mrb[0].mxu0 %v597
        %v1803 = vpop.f32.mrb[0].mxu0
        %v1804 = vadd.f32 0.0, %v1803
        %v1805 = vpop.f32.mrb[0].mxu0
        %1806 = vmatprep.mubr.f32.mxu0 0.0
        %1807 = vmatmul.mubr.f32.gmra.mrb[0].mxu0 %v600
        %v1808 = vpop.f32.mrb[0].mxu0
        %v1809 = vadd.f32 0.0, %v1808
        %v1810 = vpop.f32.mrb[0].mxu0
        %1811 = vmatprep.mubr.f32.mxu0 0.0
        %1812 = vmatmul.mubr.f32.gmra.mrb[0].mxu0 %v603
        %v1813 = vpop.f32.mrb[0].mxu0
        %v1814 = vadd.f32 0.0, %v1813
        %v1815 = vpop.f32.mrb[0].mxu0
        %1816 = vmatprep.mubr.f32.mxu0 0.0
        %1817 = vmatmul.mubr.f32.gmra.mrb[0].mxu0 %v606
        %v1818 = vpop.f32.mrb[0].mxu0
        %v1819 = vadd.f32 0.0, %v1818
        %v1820 = vpop.f32.mrb[0].mxu0
        %1821 = vdwg.mxu0
        %v1822 = vsub.f32 1.0, %v1473
        %v1823 = vmul.f32 %v1822, %v1679
        %v1824 = vmul.f32 %v1822, %v1684
        %v1825 = vmul.f32 %v1822, %v1689
        %v1826 = vmul.f32 %v1822, %v1694
        %v1827 = vmul.f32 %v1822, %v1699
        %v1828 = vmul.f32 %v1822, %v1704
        %v1829 = vmul.f32 %v1822, %v1709
        %v1830 = vmul.f32 %v1822, %v1714
        %v1831 = vadd.f32 %v1473, %v1823
        %v1832 = vadd.f32 %v1473, %v1824
        %v1833 = vadd.f32 %v1473, %v1825
        %v1834 = vadd.f32 %v1473, %v1826
        %v1835 = vadd.f32 %v1473, %v1827
        %v1836 = vadd.f32 %v1473, %v1828
        %v1837 = vadd.f32 %v1473, %v1829
        %v1838 = vadd.f32 %v1473, %v1830
        %v1839 = vsub.f32 %v1831, %v1550
        %v1840 = vsub.f32 %v1832, %v1555
        %v1841 = vsub.f32 %v1833, %v1560
        %v1842 = vsub.f32 %v1834, %v1565
        %v1843 = vsub.f32 %v1835, %v1570
        %v1844 = vsub.f32 %v1836, %v1575
        %v1845 = vsub.f32 %v1837, %v1580
        %v1846 = vsub.f32 %v1838, %v1585
        %1848 = vset.pattern.permute.xlu0 0
        %1849 = vperm.xlu0 %1848, %v1784
        %v1850 = vpop.permute.xlu0 %1849
        %1853 = vset.pattern.permute.xlu0 0
        %1854 = vperm.xlu0 %1853, %v1789
        %v1855 = vpop.permute.xlu0 %1854
        %1858 = vset.pattern.permute.xlu0 0
        %1859 = vperm.xlu0 %1858, %v1794
        %v1860 = vpop.permute.xlu0 %1859
        %1863 = vset.pattern.permute.xlu0 0
        %1864 = vperm.xlu0 %1863, %v1799
        %v1865 = vpop.permute.xlu0 %1864
        %1868 = vset.pattern.permute.xlu0 0
        %1869 = vperm.xlu0 %1868, %v1804
        %v1870 = vpop.permute.xlu0 %1869
        %1873 = vset.pattern.permute.xlu0 0
        %1874 = vperm.xlu0 %1873, %v1809
        %v1875 = vpop.permute.xlu0 %1874
        %1878 = vset.pattern.permute.xlu0 0
        %1879 = vperm.xlu0 %1878, %v1814
        %v1880 = vpop.permute.xlu0 %1879
        %1883 = vset.pattern.permute.xlu0 0
        %1884 = vperm.xlu0 %1883, %v1819
        %v1885 = vpop.permute.xlu0 %1884
        %v1887 = vmul.f32 %v1850, %v1481
        %v1888 = vmul.f32 %v1855, %v1481
        %v1889 = vmul.f32 %v1860, %v1481
        %v1890 = vmul.f32 %v1865, %v1481
        %v1891 = vmul.f32 %v1870, %v1481
        %v1892 = vmul.f32 %v1875, %v1481
        %v1893 = vmul.f32 %v1880, %v1481
        %v1894 = vmul.f32 %v1885, %v1481
        %v1895 = vrcp.pop %v1887
        %v1896 = vrcp.pop %v1888
        %v1897 = vrcp.pop %v1889
        %v1898 = vrcp.pop %v1890
        %v1899 = vrcp.pop %v1891
        %v1900 = vrcp.pop %v1892
        %v1901 = vrcp.pop %v1893
        %v1902 = vrcp.pop %v1894
        %v1903 = vadd.f32 %v1839, 0.5
        %v1904 = vadd.f32 %v1840, 0.5
        %v1905 = vadd.f32 %v1841, 0.5
        %v1906 = vadd.f32 %v1842, 0.5
        %v1907 = vadd.f32 %v1843, 0.5
        %v1908 = vadd.f32 %v1844, 0.5
        %v1909 = vadd.f32 %v1845, 0.5
        %v1910 = vadd.f32 %v1846, 0.5
        %v1911 = vmul.f32 %v1903, %v1895
        %v1912 = vmul.f32 %v1904, %v1896
        %v1913 = vmul.f32 %v1905, %v1897
        %v1914 = vmul.f32 %v1906, %v1898
        %v1915 = vmul.f32 %v1907, %v1899
        %v1916 = vmul.f32 %v1908, %v1900
        %v1917 = vmul.f32 %v1909, %v1901
        %v1918 = vmul.f32 %v1910, %v1902
        %v1919 = vmul.f32 %v1911, 0.70710677
        %v1920 = vmul.f32 %v1912, 0.70710677
        %v1921 = vmul.f32 %v1913, 0.70710677
        %v1922 = vmul.f32 %v1914, 0.70710677
        %v1923 = vmul.f32 %v1915, 0.70710677
        %v1924 = vmul.f32 %v1916, 0.70710677
        %v1925 = vmul.f32 %v1917, 0.70710677
        %v1926 = vmul.f32 %v1918, 0.70710677
        %vm1927 = vcmp.ge.f32.partialorder %v1919, 0.0
        %vm1928 = vcmp.ge.f32.partialorder %v1920, 0.0
        %vm1929 = vcmp.ge.f32.partialorder %v1921, 0.0
        %vm1930 = vcmp.ge.f32.partialorder %v1922, 0.0
        %vm1931 = vcmp.ge.f32.partialorder %v1923, 0.0
        %vm1932 = vcmp.ge.f32.partialorder %v1924, 0.0
        %vm1933 = vcmp.ge.f32.partialorder %v1925, 0.0
        %vm1934 = vcmp.ge.f32.partialorder %v1926, 0.0
        %v1935 = vsel %vm1927, 1.0, -1.0
        %v1936 = vsel %vm1928, 1.0, -1.0
        %v1937 = vsel %vm1929, 1.0, -1.0
        %v1938 = vsel %vm1930, 1.0, -1.0
        %v1939 = vsel %vm1931, 1.0, -1.0
        %v1940 = vsel %vm1932, 1.0, -1.0
        %v1941 = vsel %vm1933, 1.0, -1.0
        %v1942 = vsel %vm1934, 1.0, -1.0
        %v1943 = vand.u32 2147483647, %v1919
        %v1944 = vand.u32 2147483647, %v1920
        %v1945 = vand.u32 2147483647, %v1921
        %v1946 = vand.u32 2147483647, %v1922
        %v1947 = vand.u32 2147483647, %v1923
        %v1948 = vand.u32 2147483647, %v1924
        %v1949 = vand.u32 2147483647, %v1925
        %v1950 = vand.u32 2147483647, %v1926
        %v1951 = vmul.f32 %v1943, 0.3275911
        %v1952 = vmul.f32 %v1944, 0.3275911
        %v1953 = vmul.f32 %v1945, 0.3275911
        %v1954 = vmul.f32 %v1946, 0.3275911
        %v1955 = vmul.f32 %v1947, 0.3275911
        %v1956 = vmul.f32 %v1948, 0.3275911
        %v1957 = vmul.f32 %v1949, 0.3275911
        %v1958 = vmul.f32 %v1950, 0.3275911
        %v1959 = vadd.f32 %v1951, 1.0
        %v1960 = vadd.f32 %v1952, 1.0
        %v1961 = vadd.f32 %v1953, 1.0
        %v1962 = vadd.f32 %v1954, 1.0
        %v1963 = vadd.f32 %v1955, 1.0
        %v1964 = vadd.f32 %v1956, 1.0
        %v1965 = vadd.f32 %v1957, 1.0
        %v1966 = vadd.f32 %v1958, 1.0
        %v1967 = vrcp.pop %v1959
        %v1968 = vrcp.pop %v1960
        %v1969 = vrcp.pop %v1961
        %v1970 = vrcp.pop %v1962
        %v1971 = vrcp.pop %v1963
        %v1972 = vrcp.pop %v1964
        %v1973 = vrcp.pop %v1965
        %v1974 = vrcp.pop %v1966
        %v1975 = vmul.f32 %v1967, 1.0614054
        %v1976 = vmul.f32 %v1968, 1.0614054
        %v1977 = vmul.f32 %v1969, 1.0614054
        %v1978 = vmul.f32 %v1970, 1.0614054
        %v1979 = vmul.f32 %v1971, 1.0614054
        %v1980 = vmul.f32 %v1972, 1.0614054
        %v1981 = vmul.f32 %v1973, 1.0614054
        %v1982 = vmul.f32 %v1974, 1.0614054
        %v1983 = vadd.f32 %v1975, -1.4531521
        %v1984 = vadd.f32 %v1976, -1.4531521
        %v1985 = vadd.f32 %v1977, -1.4531521
        %v1986 = vadd.f32 %v1978, -1.4531521
        %v1987 = vadd.f32 %v1979, -1.4531521
        %v1988 = vadd.f32 %v1980, -1.4531521
        %v1989 = vadd.f32 %v1981, -1.4531521
        %v1990 = vadd.f32 %v1982, -1.4531521
        %v1991 = vmul.f32 %v1983, %v1967
        %v1992 = vmul.f32 %v1984, %v1968
        %v1993 = vmul.f32 %v1985, %v1969
        %v1994 = vmul.f32 %v1986, %v1970
        %v1995 = vmul.f32 %v1987, %v1971
        %v1996 = vmul.f32 %v1988, %v1972
        %v1997 = vmul.f32 %v1989, %v1973
        %v1998 = vmul.f32 %v1990, %v1974
        %v1999 = vadd.f32 %v1991, 1.4214138
        %v2000 = vadd.f32 %v1992, 1.4214138
        %v2001 = vadd.f32 %v1993, 1.4214138
        %v2002 = vadd.f32 %v1994, 1.4214138
        %v2003 = vadd.f32 %v1995, 1.4214138
        %v2004 = vadd.f32 %v1996, 1.4214138
        %v2005 = vadd.f32 %v1997, 1.4214138
        %v2006 = vadd.f32 %v1998, 1.4214138
        %v2007 = vmul.f32 %v1999, %v1967
        %v2008 = vmul.f32 %v2000, %v1968
        %v2009 = vmul.f32 %v2001, %v1969
        %v2010 = vmul.f32 %v2002, %v1970
        %v2011 = vmul.f32 %v2003, %v1971
        %v2012 = vmul.f32 %v2004, %v1972
        %v2013 = vmul.f32 %v2005, %v1973
        %v2014 = vmul.f32 %v2006, %v1974
        %v2015 = vadd.f32 %v2007, -0.28449672
        %v2016 = vadd.f32 %v2008, -0.28449672
        %v2017 = vadd.f32 %v2009, -0.28449672
        %v2018 = vadd.f32 %v2010, -0.28449672
        %v2019 = vadd.f32 %v2011, -0.28449672
        %v2020 = vadd.f32 %v2012, -0.28449672
        %v2021 = vadd.f32 %v2013, -0.28449672
        %v2022 = vadd.f32 %v2014, -0.28449672
        %v2023 = vmul.f32 %v2015, %v1967
        %v2024 = vmul.f32 %v2016, %v1968
        %v2025 = vmul.f32 %v2017, %v1969
        %v2026 = vmul.f32 %v2018, %v1970
        %v2027 = vmul.f32 %v2019, %v1971
        %v2028 = vmul.f32 %v2020, %v1972
        %v2029 = vmul.f32 %v2021, %v1973
        %v2030 = vmul.f32 %v2022, %v1974
        %v2031 = vadd.f32 %v2023, 0.2548296
        %v2032 = vadd.f32 %v2024, 0.2548296
        %v2033 = vadd.f32 %v2025, 0.2548296
        %v2034 = vadd.f32 %v2026, 0.2548296
        %v2035 = vadd.f32 %v2027, 0.2548296
        %v2036 = vadd.f32 %v2028, 0.2548296
        %v2037 = vadd.f32 %v2029, 0.2548296
        %v2038 = vadd.f32 %v2030, 0.2548296
        %v2039 = vmul.f32 %v2031, %v1967
        %v2040 = vmul.f32 %v2032, %v1968
        %v2041 = vmul.f32 %v2033, %v1969
        %v2042 = vmul.f32 %v2034, %v1970
        %v2043 = vmul.f32 %v2035, %v1971
        %v2044 = vmul.f32 %v2036, %v1972
        %v2045 = vmul.f32 %v2037, %v1973
        %v2046 = vmul.f32 %v2038, %v1974
        %v2047 = vsub.f32 0.0, %v1943
        %v2048 = vsub.f32 0.0, %v1944
        %v2049 = vsub.f32 0.0, %v1945
        %v2050 = vsub.f32 0.0, %v1946
        %v2051 = vsub.f32 0.0, %v1947
        %v2052 = vsub.f32 0.0, %v1948
        %v2053 = vsub.f32 0.0, %v1949
        %v2054 = vsub.f32 0.0, %v1950
        %v2055 = vmul.f32 %v2047, %v1943
        %v2056 = vmul.f32 %v2048, %v1944
        %v2057 = vmul.f32 %v2049, %v1945
        %v2058 = vmul.f32 %v2050, %v1946
        %v2059 = vmul.f32 %v2051, %v1947
        %v2060 = vmul.f32 %v2052, %v1948
        %v2061 = vmul.f32 %v2053, %v1949
        %v2062 = vmul.f32 %v2054, %v1950
        %v2063 = vmul.f32 %v2055, 1.442695
        %v2064 = vpow.pop %v2063
        %v2065 = vmul.f32 %v2056, 1.442695
        %v2066 = vpow.pop %v2065
        %v2067 = vmul.f32 %v2057, 1.442695
        %v2068 = vpow.pop %v2067
        %v2069 = vmul.f32 %v2058, 1.442695
        %v2070 = vpow.pop %v2069
        %v2071 = vmul.f32 %v2059, 1.442695
        %v2072 = vpow.pop %v2071
        %v2073 = vmul.f32 %v2060, 1.442695
        %v2074 = vpow.pop %v2073
        %v2075 = vmul.f32 %v2061, 1.442695
        %v2076 = vpow.pop %v2075
        %v2077 = vmul.f32 %v2062, 1.442695
        %v2078 = vpow.pop %v2077
        %v2079 = vmul.f32 %v2039, %v2064
        %v2080 = vmul.f32 %v2040, %v2066
        %v2081 = vmul.f32 %v2041, %v2068
        %v2082 = vmul.f32 %v2042, %v2070
        %v2083 = vmul.f32 %v2043, %v2072
        %v2084 = vmul.f32 %v2044, %v2074
        %v2085 = vmul.f32 %v2045, %v2076
        %v2086 = vmul.f32 %v2046, %v2078
        %v2087 = vsub.f32 1.0, %v2079
        %v2088 = vsub.f32 1.0, %v2080
        %v2089 = vsub.f32 1.0, %v2081
        %v2090 = vsub.f32 1.0, %v2082
        %v2091 = vsub.f32 1.0, %v2083
        %v2092 = vsub.f32 1.0, %v2084
        %v2093 = vsub.f32 1.0, %v2085
        %v2094 = vsub.f32 1.0, %v2086
        %v2095 = vmul.f32 %v1935, %v2087
        %v2096 = vmul.f32 %v1936, %v2088
        %v2097 = vmul.f32 %v1937, %v2089
        %v2098 = vmul.f32 %v1938, %v2090
        %v2099 = vmul.f32 %v1939, %v2091
        %v2100 = vmul.f32 %v1940, %v2092
        %v2101 = vmul.f32 %v1941, %v2093
        %v2102 = vmul.f32 %v1942, %v2094
        %v2103 = vadd.f32 %v2095, 1.0
        %v2104 = vadd.f32 %v2096, 1.0
        %v2105 = vadd.f32 %v2097, 1.0
        %v2106 = vadd.f32 %v2098, 1.0
        %v2107 = vadd.f32 %v2099, 1.0
        %v2108 = vadd.f32 %v2100, 1.0
        %v2109 = vadd.f32 %v2101, 1.0
        %v2110 = vadd.f32 %v2102, 1.0
        %v2111 = vmul.f32 %v2103, 0.5
        %v2112 = vmul.f32 %v2104, 0.5
        %v2113 = vmul.f32 %v2105, 0.5
        %v2114 = vmul.f32 %v2106, 0.5
        %v2115 = vmul.f32 %v2107, 0.5
        %v2116 = vmul.f32 %v2108, 0.5
        %v2117 = vmul.f32 %v2109, 0.5
        %v2118 = vmul.f32 %v2110, 0.5
        %v2119 = vsub.f32 %v1839, 0.5
        %v2120 = vsub.f32 %v1840, 0.5
        %v2121 = vsub.f32 %v1841, 0.5
        %v2122 = vsub.f32 %v1842, 0.5
        %v2123 = vsub.f32 %v1843, 0.5
        %v2124 = vsub.f32 %v1844, 0.5
        %v2125 = vsub.f32 %v1845, 0.5
        %v2126 = vsub.f32 %v1846, 0.5
        %v2127 = vmul.f32 %v2119, %v1895
        %v2128 = vmul.f32 %v2120, %v1896
        %v2129 = vmul.f32 %v2121, %v1897
        %v2130 = vmul.f32 %v2122, %v1898
        %v2131 = vmul.f32 %v2123, %v1899
        %v2132 = vmul.f32 %v2124, %v1900
        %v2133 = vmul.f32 %v2125, %v1901
        %v2134 = vmul.f32 %v2126, %v1902
        %v2135 = vmul.f32 %v2127, 0.70710677
        %v2136 = vmul.f32 %v2128, 0.70710677
        %v2137 = vmul.f32 %v2129, 0.70710677
        %v2138 = vmul.f32 %v2130, 0.70710677
        %v2139 = vmul.f32 %v2131, 0.70710677
        %v2140 = vmul.f32 %v2132, 0.70710677
        %v2141 = vmul.f32 %v2133, 0.70710677
        %v2142 = vmul.f32 %v2134, 0.70710677
        %vm2143 = vcmp.ge.f32.partialorder %v2135, 0.0
        %vm2144 = vcmp.ge.f32.partialorder %v2136, 0.0
        %vm2145 = vcmp.ge.f32.partialorder %v2137, 0.0
        %vm2146 = vcmp.ge.f32.partialorder %v2138, 0.0
        %vm2147 = vcmp.ge.f32.partialorder %v2139, 0.0
        %vm2148 = vcmp.ge.f32.partialorder %v2140, 0.0
        %vm2149 = vcmp.ge.f32.partialorder %v2141, 0.0
        %vm2150 = vcmp.ge.f32.partialorder %v2142, 0.0
        %v2151 = vsel %vm2143, 1.0, -1.0
        %v2152 = vsel %vm2144, 1.0, -1.0
        %v2153 = vsel %vm2145, 1.0, -1.0
        %v2154 = vsel %vm2146, 1.0, -1.0
        %v2155 = vsel %vm2147, 1.0, -1.0
        %v2156 = vsel %vm2148, 1.0, -1.0
        %v2157 = vsel %vm2149, 1.0, -1.0
        %v2158 = vsel %vm2150, 1.0, -1.0
        %v2159 = vand.u32 2147483647, %v2135
        %v2160 = vand.u32 2147483647, %v2136
        %v2161 = vand.u32 2147483647, %v2137
        %v2162 = vand.u32 2147483647, %v2138
        %v2163 = vand.u32 2147483647, %v2139
        %v2164 = vand.u32 2147483647, %v2140
        %v2165 = vand.u32 2147483647, %v2141
        %v2166 = vand.u32 2147483647, %v2142
        %v2167 = vmul.f32 %v2159, 0.3275911
        %v2168 = vmul.f32 %v2160, 0.3275911
        %v2169 = vmul.f32 %v2161, 0.3275911
        %v2170 = vmul.f32 %v2162, 0.3275911
        %v2171 = vmul.f32 %v2163, 0.3275911
        %v2172 = vmul.f32 %v2164, 0.3275911
        %v2173 = vmul.f32 %v2165, 0.3275911
        %v2174 = vmul.f32 %v2166, 0.3275911
        %v2175 = vadd.f32 %v2167, 1.0
        %v2176 = vadd.f32 %v2168, 1.0
        %v2177 = vadd.f32 %v2169, 1.0
        %v2178 = vadd.f32 %v2170, 1.0
        %v2179 = vadd.f32 %v2171, 1.0
        %v2180 = vadd.f32 %v2172, 1.0
        %v2181 = vadd.f32 %v2173, 1.0
        %v2182 = vadd.f32 %v2174, 1.0
        %v2183 = vrcp.pop %v2175
        %v2184 = vrcp.pop %v2176
        %v2185 = vrcp.pop %v2177
        %v2186 = vrcp.pop %v2178
        %v2187 = vrcp.pop %v2179
        %v2188 = vrcp.pop %v2180
        %v2189 = vrcp.pop %v2181
        %v2190 = vrcp.pop %v2182
        %v2191 = vmul.f32 %v2183, 1.0614054
        %v2192 = vmul.f32 %v2184, 1.0614054
        %v2193 = vmul.f32 %v2185, 1.0614054
        %v2194 = vmul.f32 %v2186, 1.0614054
        %v2195 = vmul.f32 %v2187, 1.0614054
        %v2196 = vmul.f32 %v2188, 1.0614054
        %v2197 = vmul.f32 %v2189, 1.0614054
        %v2198 = vmul.f32 %v2190, 1.0614054
        %v2199 = vadd.f32 %v2191, -1.4531521
        %v2200 = vadd.f32 %v2192, -1.4531521
        %v2201 = vadd.f32 %v2193, -1.4531521
        %v2202 = vadd.f32 %v2194, -1.4531521
        %v2203 = vadd.f32 %v2195, -1.4531521
        %v2204 = vadd.f32 %v2196, -1.4531521
        %v2205 = vadd.f32 %v2197, -1.4531521
        %v2206 = vadd.f32 %v2198, -1.4531521
        %v2207 = vmul.f32 %v2199, %v2183
        %v2208 = vmul.f32 %v2200, %v2184
        %v2209 = vmul.f32 %v2201, %v2185
        %v2210 = vmul.f32 %v2202, %v2186
        %v2211 = vmul.f32 %v2203, %v2187
        %v2212 = vmul.f32 %v2204, %v2188
        %v2213 = vmul.f32 %v2205, %v2189
        %v2214 = vmul.f32 %v2206, %v2190
        %v2215 = vadd.f32 %v2207, 1.4214138
        %v2216 = vadd.f32 %v2208, 1.4214138
        %v2217 = vadd.f32 %v2209, 1.4214138
        %v2218 = vadd.f32 %v2210, 1.4214138
        %v2219 = vadd.f32 %v2211, 1.4214138
        %v2220 = vadd.f32 %v2212, 1.4214138
        %v2221 = vadd.f32 %v2213, 1.4214138
        %v2222 = vadd.f32 %v2214, 1.4214138
        %v2223 = vmul.f32 %v2215, %v2183
        %v2224 = vmul.f32 %v2216, %v2184
        %v2225 = vmul.f32 %v2217, %v2185
        %v2226 = vmul.f32 %v2218, %v2186
        %v2227 = vmul.f32 %v2219, %v2187
        %v2228 = vmul.f32 %v2220, %v2188
        %v2229 = vmul.f32 %v2221, %v2189
        %v2230 = vmul.f32 %v2222, %v2190
        %v2231 = vadd.f32 %v2223, -0.28449672
        %v2232 = vadd.f32 %v2224, -0.28449672
        %v2233 = vadd.f32 %v2225, -0.28449672
        %v2234 = vadd.f32 %v2226, -0.28449672
        %v2235 = vadd.f32 %v2227, -0.28449672
        %v2236 = vadd.f32 %v2228, -0.28449672
        %v2237 = vadd.f32 %v2229, -0.28449672
        %v2238 = vadd.f32 %v2230, -0.28449672
        %v2239 = vmul.f32 %v2231, %v2183
        %v2240 = vmul.f32 %v2232, %v2184
        %v2241 = vmul.f32 %v2233, %v2185
        %v2242 = vmul.f32 %v2234, %v2186
        %v2243 = vmul.f32 %v2235, %v2187
        %v2244 = vmul.f32 %v2236, %v2188
        %v2245 = vmul.f32 %v2237, %v2189
        %v2246 = vmul.f32 %v2238, %v2190
        %v2247 = vadd.f32 %v2239, 0.2548296
        %v2248 = vadd.f32 %v2240, 0.2548296
        %v2249 = vadd.f32 %v2241, 0.2548296
        %v2250 = vadd.f32 %v2242, 0.2548296
        %v2251 = vadd.f32 %v2243, 0.2548296
        %v2252 = vadd.f32 %v2244, 0.2548296
        %v2253 = vadd.f32 %v2245, 0.2548296
        %v2254 = vadd.f32 %v2246, 0.2548296
        %v2255 = vmul.f32 %v2247, %v2183
        %v2256 = vmul.f32 %v2248, %v2184
        %v2257 = vmul.f32 %v2249, %v2185
        %v2258 = vmul.f32 %v2250, %v2186
        %v2259 = vmul.f32 %v2251, %v2187
        %v2260 = vmul.f32 %v2252, %v2188
        %v2261 = vmul.f32 %v2253, %v2189
        %v2262 = vmul.f32 %v2254, %v2190
        %v2263 = vsub.f32 0.0, %v2159
        %v2264 = vsub.f32 0.0, %v2160
        %v2265 = vsub.f32 0.0, %v2161
        %v2266 = vsub.f32 0.0, %v2162
        %v2267 = vsub.f32 0.0, %v2163
        %v2268 = vsub.f32 0.0, %v2164
        %v2269 = vsub.f32 0.0, %v2165
        %v2270 = vsub.f32 0.0, %v2166
        %v2271 = vmul.f32 %v2263, %v2159
        %v2272 = vmul.f32 %v2264, %v2160
        %v2273 = vmul.f32 %v2265, %v2161
        %v2274 = vmul.f32 %v2266, %v2162
        %v2275 = vmul.f32 %v2267, %v2163
        %v2276 = vmul.f32 %v2268, %v2164
        %v2277 = vmul.f32 %v2269, %v2165
        %v2278 = vmul.f32 %v2270, %v2166
        %v2279 = vmul.f32 %v2271, 1.442695
        %v2280 = vpow.pop %v2279
        %v2281 = vmul.f32 %v2272, 1.442695
        %v2282 = vpow.pop %v2281
        %v2283 = vmul.f32 %v2273, 1.442695
        %v2284 = vpow.pop %v2283
        %v2285 = vmul.f32 %v2274, 1.442695
        %v2286 = vpow.pop %v2285
        %v2287 = vmul.f32 %v2275, 1.442695
        %v2288 = vpow.pop %v2287
        %v2289 = vmul.f32 %v2276, 1.442695
        %v2290 = vpow.pop %v2289
        %v2291 = vmul.f32 %v2277, 1.442695
        %v2292 = vpow.pop %v2291
        %v2293 = vmul.f32 %v2278, 1.442695
        %v2294 = vpow.pop %v2293
        %v2295 = vmul.f32 %v2255, %v2280
        %v2296 = vmul.f32 %v2256, %v2282
        %v2297 = vmul.f32 %v2257, %v2284
        %v2298 = vmul.f32 %v2258, %v2286
        %v2299 = vmul.f32 %v2259, %v2288
        %v2300 = vmul.f32 %v2260, %v2290
        %v2301 = vmul.f32 %v2261, %v2292
        %v2302 = vmul.f32 %v2262, %v2294
        %v2303 = vsub.f32 1.0, %v2295
        %v2304 = vsub.f32 1.0, %v2296
        %v2305 = vsub.f32 1.0, %v2297
        %v2306 = vsub.f32 1.0, %v2298
        %v2307 = vsub.f32 1.0, %v2299
        %v2308 = vsub.f32 1.0, %v2300
        %v2309 = vsub.f32 1.0, %v2301
        %v2310 = vsub.f32 1.0, %v2302
        %v2311 = vmul.f32 %v2151, %v2303
        %v2312 = vmul.f32 %v2152, %v2304
        %v2313 = vmul.f32 %v2153, %v2305
        %v2314 = vmul.f32 %v2154, %v2306
        %v2315 = vmul.f32 %v2155, %v2307
        %v2316 = vmul.f32 %v2156, %v2308
        %v2317 = vmul.f32 %v2157, %v2309
        %v2318 = vmul.f32 %v2158, %v2310
        %v2319 = vadd.f32 %v2311, 1.0
        %v2320 = vadd.f32 %v2312, 1.0
        %v2321 = vadd.f32 %v2313, 1.0
        %v2322 = vadd.f32 %v2314, 1.0
        %v2323 = vadd.f32 %v2315, 1.0
        %v2324 = vadd.f32 %v2316, 1.0
        %v2325 = vadd.f32 %v2317, 1.0
        %v2326 = vadd.f32 %v2318, 1.0
        %v2327 = vmul.f32 %v2319, 0.5
        %v2328 = vmul.f32 %v2320, 0.5
        %v2329 = vmul.f32 %v2321, 0.5
        %v2330 = vmul.f32 %v2322, 0.5
        %v2331 = vmul.f32 %v2323, 0.5
        %v2332 = vmul.f32 %v2324, 0.5
        %v2333 = vmul.f32 %v2325, 0.5
        %v2334 = vmul.f32 %v2326, 0.5
        %v2335 = vsub.f32 %v2111, %v2327
        %v2336 = vsub.f32 %v2112, %v2328
        %v2337 = vsub.f32 %v2113, %v2329
        %v2338 = vsub.f32 %v2114, %v2330
        %v2339 = vsub.f32 %v2115, %v2331
        %v2340 = vsub.f32 %v2116, %v2332
        %v2341 = vsub.f32 %v2117, %v2333
        %v2342 = vsub.f32 %v2118, %v2334
        %v2343 = vmax.f32 %v2335, 0.0
        %v2344 = vmax.f32 %v2336, 0.0
        %v2345 = vmax.f32 %v2337, 0.0
        %v2346 = vmax.f32 %v2338, 0.0
        %v2347 = vmax.f32 %v2339, 0.0
        %v2348 = vmax.f32 %v2340, 0.0
        %v2349 = vmax.f32 %v2341, 0.0
        %v2350 = vmax.f32 %v2342, 0.0
        %v2351 = vadd.f32 %v2343, 1e-10
        %v2352 = vadd.f32 %v2344, 1e-10
        %v2353 = vadd.f32 %v2345, 1e-10
        %v2354 = vadd.f32 %v2346, 1e-10
        %v2355 = vadd.f32 %v2347, 1e-10
        %v2356 = vadd.f32 %v2348, 1e-10
        %v2357 = vadd.f32 %v2349, 1e-10
        %v2358 = vadd.f32 %v2350, 1e-10
        %v2359 = vlog2.pop %v2351
        %v2360 = vmul.f32 %v2359, 0.6931472
        %v2361 = vlog2.pop %v2352
        %v2362 = vmul.f32 %v2361, 0.6931472
        %v2363 = vlog2.pop %v2353
        %v2364 = vmul.f32 %v2363, 0.6931472
        %v2365 = vlog2.pop %v2354
        %v2366 = vmul.f32 %v2365, 0.6931472
        %v2367 = vlog2.pop %v2355
        %v2368 = vmul.f32 %v2367, 0.6931472
        %v2369 = vlog2.pop %v2356
        %v2370 = vmul.f32 %v2369, 0.6931472
        %v2371 = vlog2.pop %v2357
        %v2372 = vmul.f32 %v2371, 0.6931472
        %v2373 = vlog2.pop %v2358
        %v2374 = vmul.f32 %v2373, 0.6931472
        %v2375 = vmul.f32 %v2351, %v1473
        %v2376 = vmul.f32 %v2352, %v1473
        %v2377 = vmul.f32 %v2353, %v1473
        %v2378 = vmul.f32 %v2354, %v1473
        %v2379 = vmul.f32 %v2355, %v1473
        %v2380 = vmul.f32 %v2356, %v1473
        %v2381 = vmul.f32 %v2357, %v1473
        %v2382 = vmul.f32 %v2358, %v1473
        %v2384 = vsel %vm583, %v2375, 0
        %v2387 = vsel %vm583, %v2376, 0
        %v2390 = vsel %vm583, %v2377, 0
        %v2393 = vsel %vm583, %v2378, 0
        %v2396 = vsel %vm583, %v2379, 0
        %v2399 = vsel %vm583, %v2380, 0
        %v2402 = vsel %vm583, %v2381, 0
        %v2405 = vsel %vm583, %v2382, 0
        %2407 = vmatprep.subr.mxu0 0.0
        %2408 = vmatpush1.msra.mxu0 1.0
        %2409 = vmatprep.subr.mxu0 0.0
        %2410 = vmatpush1.msra.mxu0 0.0
        %2411 = vmatprep.subr.mxu0 0.0
        %2412 = vmatpush1.msra.mxu0 0.0
        %2413 = vmatprep.subr.mxu0 0.0
        %2414 = vmatpush1.msra.mxu0 0.0
        %2415 = vmatprep.subr.mxu0 0.0
        %2416 = vmatpush1.msra.mxu0 0.0
        %2417 = vmatprep.subr.mxu0 0.0
        %2418 = vmatpush1.msra.mxu0 0.0
        %2419 = vmatprep.subr.mxu0 0.0
        %2420 = vmatpush1.msra.mxu0 0.0
        %2421 = vmatprep.subr.mxu0 0.0
        %2422 = vmatpush1.msra.mxu0 0.0
        %2423 = vmatprep.subr.mxu0 0.0
        %2424 = vmatpush1.msra.mxu0 0.0
        %2425 = vmatprep.subr.mxu0 0.0
        %2426 = vmatpush1.msra.mxu0 0.0
        %2427 = vmatprep.subr.mxu0 0.0
        %2428 = vmatpush1.msra.mxu0 0.0
        %2429 = vmatprep.subr.mxu0 0.0
        %2430 = vmatpush1.msra.mxu0 0.0
        %2431 = vmatprep.subr.mxu0 0.0
        %2432 = vmatpush1.msra.mxu0 0.0
        %2433 = vmatprep.subr.mxu0 0.0
        %2434 = vmatpush1.msra.mxu0 0.0
        %2435 = vmatprep.subr.mxu0 0.0
        %2436 = vmatpush1.msra.mxu0 0.0
        %2437 = vmatprep.subr.mxu0 0.0
        %2438 = vmatpush1.msra.mxu0 0.0
        %2439 = vmatprep.subr.mxu0 0.0
        %2440 = vmatpush1.msra.mxu0 0.0
        %2441 = vmatprep.subr.mxu0 0.0
        %2442 = vmatpush1.msra.mxu0 0.0
        %2443 = vmatprep.subr.mxu0 0.0
        %2444 = vmatpush1.msra.mxu0 0.0
        %2445 = vmatprep.subr.mxu0 0.0
        %2446 = vmatpush1.msra.mxu0 0.0
        %2447 = vmatprep.subr.mxu0 0.0
        %2448 = vmatpush1.msra.mxu0 0.0
        %2449 = vmatprep.subr.mxu0 0.0
        %2450 = vmatpush1.msra.mxu0 0.0
        %2451 = vmatprep.subr.mxu0 0.0
        %2452 = vmatpush1.msra.mxu0 0.0
        %2453 = vmatprep.subr.mxu0 0.0
        %2454 = vmatpush1.msra.mxu0 0.0
        %2455 = vmatprep.subr.mxu0 0.0
        %2456 = vmatpush1.msra.mxu0 0.0
        %2457 = vmatprep.subr.mxu0 0.0
        %2458 = vmatpush1.msra.mxu0 0.0
        %2459 = vmatprep.subr.mxu0 0.0
        %2460 = vmatpush1.msra.mxu0 0.0
        %2461 = vmatprep.subr.mxu0 0.0
        %2462 = vmatpush1.msra.mxu0 0.0
        %2463 = vmatprep.subr.mxu0 0.0
        %2464 = vmatpush1.msra.mxu0 0.0
        %2465 = vmatprep.subr.mxu0 0.0
        %2466 = vmatpush1.msra.mxu0 0.0
        %2467 = vmatprep.subr.mxu0 0.0
        %2468 = vmatpush1.msra.mxu0 0.0
        %2469 = vmatprep.subr.mxu0 0.0
        %2470 = vmatpush1.msra.mxu0 0.0
        %2471 = vmatprep.mubr.f32.mxu0 0.0
        %2472 = vmatmul.mubr.f32.gmra.mrb[0].mxu0 %v2384
        %v2473 = vpop.f32.mrb[0].mxu0
        %v2474 = vadd.f32 0.0, %v2473
        %v2475 = vpop.f32.mrb[0].mxu0
        %2476 = vmatprep.mubr.f32.mxu0 0.0
        %2477 = vmatmul.mubr.f32.gmra.mrb[0].mxu0 %v2387
        %v2478 = vpop.f32.mrb[0].mxu0
        %v2479 = vadd.f32 0.0, %v2478
        %v2480 = vpop.f32.mrb[0].mxu0
        %2481 = vmatprep.mubr.f32.mxu0 0.0
        %2482 = vmatmul.mubr.f32.gmra.mrb[0].mxu0 %v2390
        %v2483 = vpop.f32.mrb[0].mxu0
        %v2484 = vadd.f32 0.0, %v2483
        %v2485 = vpop.f32.mrb[0].mxu0
        %2486 = vmatprep.mubr.f32.mxu0 0.0
        %2487 = vmatmul.mubr.f32.gmra.mrb[0].mxu0 %v2393
        %v2488 = vpop.f32.mrb[0].mxu0
        %v2489 = vadd.f32 0.0, %v2488
        %v2490 = vpop.f32.mrb[0].mxu0
        %2491 = vmatprep.mubr.f32.mxu0 0.0
        %2492 = vmatmul.mubr.f32.gmra.mrb[0].mxu0 %v2396
        %v2493 = vpop.f32.mrb[0].mxu0
        %v2494 = vadd.f32 0.0, %v2493
        %v2495 = vpop.f32.mrb[0].mxu0
        %2496 = vmatprep.mubr.f32.mxu0 0.0
        %2497 = vmatmul.mubr.f32.gmra.mrb[0].mxu0 %v2399
        %v2498 = vpop.f32.mrb[0].mxu0
        %v2499 = vadd.f32 0.0, %v2498
        %v2500 = vpop.f32.mrb[0].mxu0
        %2501 = vmatprep.mubr.f32.mxu0 0.0
        %2502 = vmatmul.mubr.f32.gmra.mrb[0].mxu0 %v2402
        %v2503 = vpop.f32.mrb[0].mxu0
        %v2504 = vadd.f32 0.0, %v2503
        %v2505 = vpop.f32.mrb[0].mxu0
        %2506 = vmatprep.mubr.f32.mxu0 0.0
        %2507 = vmatmul.mubr.f32.gmra.mrb[0].mxu0 %v2405
        %v2508 = vpop.f32.mrb[0].mxu0
        %v2509 = vadd.f32 0.0, %v2508
        %v2510 = vpop.f32.mrb[0].mxu0
        %2511 = vdwg.mxu0
        %v2512 = vlog2.pop %v2474
        %v2513 = vmul.f32 %v2512, 0.6931472
        %v2514 = vlog2.pop %v2479
        %v2515 = vmul.f32 %v2514, 0.6931472
        %v2516 = vlog2.pop %v2484
        %v2517 = vmul.f32 %v2516, 0.6931472
        %v2518 = vlog2.pop %v2489
        %v2519 = vmul.f32 %v2518, 0.6931472
        %v2520 = vlog2.pop %v2494
        %v2521 = vmul.f32 %v2520, 0.6931472
        %v2522 = vlog2.pop %v2499
        %v2523 = vmul.f32 %v2522, 0.6931472
        %v2524 = vlog2.pop %v2504
        %v2525 = vmul.f32 %v2524, 0.6931472
        %v2526 = vlog2.pop %v2509
        %v2527 = vmul.f32 %v2526, 0.6931472
        %v2528 = vmul.f32 %v1473, %v1679
        %v2529 = vmul.f32 %v1473, %v1684
        %v2530 = vmul.f32 %v1473, %v1689
        %v2531 = vmul.f32 %v1473, %v1694
        %v2532 = vmul.f32 %v1473, %v1699
        %v2533 = vmul.f32 %v1473, %v1704
        %v2534 = vmul.f32 %v1473, %v1709
        %v2535 = vmul.f32 %v1473, %v1714
        %v2536 = vmul.f32 %v1477, %v458
        %v2537 = vmul.f32 %v1477, %v463
        %v2538 = vmul.f32 %v1477, %v468
        %v2539 = vmul.f32 %v1477, %v473
        %v2540 = vmul.f32 %v1477, %v478
        %v2541 = vmul.f32 %v1477, %v483
        %v2542 = vmul.f32 %v1477, %v488
        %v2543 = vmul.f32 %v1477, %v493
        %v2544 = vadd.f32 %v2528, %v2536
        %v2545 = vadd.f32 %v2529, %v2537
        %v2546 = vadd.f32 %v2530, %v2538
        %v2547 = vadd.f32 %v2531, %v2539
        %v2548 = vadd.f32 %v2532, %v2540
        %v2549 = vadd.f32 %v2533, %v2541
        %v2550 = vadd.f32 %v2534, %v2542
        %v2551 = vadd.f32 %v2535, %v2543
        %2553 = vset.pattern.permute.xlu0 0
        %2554 = vperm.xlu0 %2553, %v2513
        %v2555 = vpop.permute.xlu0 %2554
        %2558 = vset.pattern.permute.xlu0 0
        %2559 = vperm.xlu0 %2558, %v2515
        %v2560 = vpop.permute.xlu0 %2559
        %2563 = vset.pattern.permute.xlu0 0
        %2564 = vperm.xlu0 %2563, %v2517
        %v2565 = vpop.permute.xlu0 %2564
        %2568 = vset.pattern.permute.xlu0 0
        %2569 = vperm.xlu0 %2568, %v2519
        %v2570 = vpop.permute.xlu0 %2569
        %2573 = vset.pattern.permute.xlu0 0
        %2574 = vperm.xlu0 %2573, %v2521
        %v2575 = vpop.permute.xlu0 %2574
        %2578 = vset.pattern.permute.xlu0 0
        %2579 = vperm.xlu0 %2578, %v2523
        %v2580 = vpop.permute.xlu0 %2579
        %2583 = vset.pattern.permute.xlu0 0
        %2584 = vperm.xlu0 %2583, %v2525
        %v2585 = vpop.permute.xlu0 %2584
        %2588 = vset.pattern.permute.xlu0 0
        %2589 = vperm.xlu0 %2588, %v2527
        %v2590 = vpop.permute.xlu0 %2589
        %v2592 = vmul.f32 %v2555, %v1473
        %v2593 = vmul.f32 %v2560, %v1473
        %v2594 = vmul.f32 %v2565, %v1473
        %v2595 = vmul.f32 %v2570, %v1473
        %v2596 = vmul.f32 %v2575, %v1473
        %v2597 = vmul.f32 %v2580, %v1473
        %v2598 = vmul.f32 %v2585, %v1473
        %v2599 = vmul.f32 %v2590, %v1473
        %v2600 = vsub.f32 %v2360, %v2592
        %v2601 = vsub.f32 %v2362, %v2593
        %v2602 = vsub.f32 %v2364, %v2594
        %v2603 = vsub.f32 %v2366, %v2595
        %v2604 = vsub.f32 %v2368, %v2596
        %v2605 = vsub.f32 %v2370, %v2597
        %v2606 = vsub.f32 %v2372, %v2598
        %v2607 = vsub.f32 %v2374, %v2599
        %v2608 = vmul.f32 %v2600, %v2544
        %v2609 = vmul.f32 %v2601, %v2545
        %v2610 = vmul.f32 %v2602, %v2546
        %v2611 = vmul.f32 %v2603, %v2547
        %v2612 = vmul.f32 %v2604, %v2548
        %v2613 = vmul.f32 %v2605, %v2549
        %v2614 = vmul.f32 %v2606, %v2550
        %v2615 = vmul.f32 %v2607, %v2551
        %2616 = vmatprep.subr.mxu0 0.0
        %2617 = vmatpush1.msra.mxu0 %v2608
        %2618 = vmatprep.subr.mxu0 0.0
        %2619 = vmatpush1.msra.mxu0 %v2609
        %2620 = vmatprep.subr.mxu0 0.0
        %2621 = vmatpush1.msra.mxu0 %v2610
        %2622 = vmatprep.subr.mxu0 0.0
        %2623 = vmatpush1.msra.mxu0 %v2611
        %2624 = vmatprep.subr.mxu0 0.0
        %2625 = vmatpush1.msra.mxu0 %v2612
        %2626 = vmatprep.subr.mxu0 0.0
        %2627 = vmatpush1.msra.mxu0 %v2613
        %2628 = vmatprep.subr.mxu0 0.0
        %2629 = vmatpush1.msra.mxu0 %v2614
        %2630 = vmatprep.subr.mxu0 0.0
        %2631 = vmatpush1.msra.mxu0 %v2615
        %2632 = vmatprep.subr.mxu0 0.0
        %2633 = vmatpush1.msra.mxu0 0.0
        %2634 = vmatprep.subr.mxu0 0.0
        %2635 = vmatpush1.msra.mxu0 0.0
        %2636 = vmatprep.subr.mxu0 0.0
        %2637 = vmatpush1.msra.mxu0 0.0
        %2638 = vmatprep.subr.mxu0 0.0
        %2639 = vmatpush1.msra.mxu0 0.0
        %2640 = vmatprep.subr.mxu0 0.0
        %2641 = vmatpush1.msra.mxu0 0.0
        %2642 = vmatprep.subr.mxu0 0.0
        %2643 = vmatpush1.msra.mxu0 0.0
        %2644 = vmatprep.subr.mxu0 0.0
        %2645 = vmatpush1.msra.mxu0 0.0
        %2646 = vmatprep.subr.mxu0 0.0
        %2647 = vmatpush1.msra.mxu0 0.0
        %2648 = vmatprep.subr.mxu0 0.0
        %2649 = vmatpush1.msra.mxu0 0.0
        %2650 = vmatprep.subr.mxu0 0.0
        %2651 = vmatpush1.msra.mxu0 0.0
        %2652 = vmatprep.subr.mxu0 0.0
        %2653 = vmatpush1.msra.mxu0 0.0
        %2654 = vmatprep.subr.mxu0 0.0
        %2655 = vmatpush1.msra.mxu0 0.0
        %2656 = vmatprep.subr.mxu0 0.0
        %2657 = vmatpush1.msra.mxu0 0.0
        %2658 = vmatprep.subr.mxu0 0.0
        %2659 = vmatpush1.msra.mxu0 0.0
        %2660 = vmatprep.subr.mxu0 0.0
        %2661 = vmatpush1.msra.mxu0 0.0
        %2662 = vmatprep.subr.mxu0 0.0
        %2663 = vmatpush1.msra.mxu0 0.0
        %2664 = vmatprep.subr.mxu0 0.0
        %2665 = vmatpush1.msra.mxu0 0.0
        %2666 = vmatprep.subr.mxu0 0.0
        %2667 = vmatpush1.msra.mxu0 0.0
        %2668 = vmatprep.subr.mxu0 0.0
        %2669 = vmatpush1.msra.mxu0 0.0
        %2670 = vmatprep.subr.mxu0 0.0
        %2671 = vmatpush1.msra.mxu0 0.0
        %2672 = vmatprep.subr.mxu0 0.0
        %2673 = vmatpush1.msra.mxu0 0.0
        %2674 = vmatprep.subr.mxu0 0.0
        %2675 = vmatpush1.msra.mxu0 0.0
        %2676 = vmatprep.subr.mxu0 0.0
        %2677 = vmatpush1.msra.mxu0 0.0
        %2678 = vmatprep.subr.mxu0 0.0
        %2679 = vmatpush1.msra.mxu0 0.0
        %2680 = vmatprep.mubr.f32.mxu0 0.0
        %2681 = vmatmul.mubr.f32.gmra.mrb[0].mxu0 %v505
        %v2682 = vpop.f32.mrb[0].mxu0
        %v2683 = vadd.f32 0.0, %v2682
        %v2684 = vpop.f32.mrb[0].mxu0
        %2685 = vdwg.mxu0
        %v2687 = vsel %vm583, %v2683, 0
        %2689 = vmatprep.subr.mxu0 0.0
        %2690 = vmatpush1.msra.mxu0 1.0
        %2691 = vmatprep.subr.mxu0 0.0
        %2692 = vmatpush1.msra.mxu0 0.0
        %2693 = vmatprep.subr.mxu0 0.0
        %2694 = vmatpush1.msra.mxu0 0.0
        %2695 = vmatprep.subr.mxu0 0.0
        %2696 = vmatpush1.msra.mxu0 0.0
        %2697 = vmatprep.subr.mxu0 0.0
        %2698 = vmatpush1.msra.mxu0 0.0
        %2699 = vmatprep.subr.mxu0 0.0
        %2700 = vmatpush1.msra.mxu0 0.0
        %2701 = vmatprep.subr.mxu0 0.0
        %2702 = vmatpush1.msra.mxu0 0.0
        %2703 = vmatprep.subr.mxu0 0.0
        %2704 = vmatpush1.msra.mxu0 0.0
        %2705 = vmatprep.subr.mxu0 0.0
        %2706 = vmatpush1.msra.mxu0 0.0
        %2707 = vmatprep.subr.mxu0 0.0
        %2708 = vmatpush1.msra.mxu0 0.0
        %2709 = vmatprep.subr.mxu0 0.0
        %2710 = vmatpush1.msra.mxu0 0.0
        %2711 = vmatprep.subr.mxu0 0.0
        %2712 = vmatpush1.msra.mxu0 0.0
        %2713 = vmatprep.subr.mxu0 0.0
        %2714 = vmatpush1.msra.mxu0 0.0
        %2715 = vmatprep.subr.mxu0 0.0
        %2716 = vmatpush1.msra.mxu0 0.0
        %2717 = vmatprep.subr.mxu0 0.0
        %2718 = vmatpush1.msra.mxu0 0.0
        %2719 = vmatprep.subr.mxu0 0.0
        %2720 = vmatpush1.msra.mxu0 0.0
        %2721 = vmatprep.subr.mxu0 0.0
        %2722 = vmatpush1.msra.mxu0 0.0
        %2723 = vmatprep.subr.mxu0 0.0
        %2724 = vmatpush1.msra.mxu0 0.0
        %2725 = vmatprep.subr.mxu0 0.0
        %2726 = vmatpush1.msra.mxu0 0.0
        %2727 = vmatprep.subr.mxu0 0.0
        %2728 = vmatpush1.msra.mxu0 0.0
        %2729 = vmatprep.subr.mxu0 0.0
        %2730 = vmatpush1.msra.mxu0 0.0
        %2731 = vmatprep.subr.mxu0 0.0
        %2732 = vmatpush1.msra.mxu0 0.0
        %2733 = vmatprep.subr.mxu0 0.0
        %2734 = vmatpush1.msra.mxu0 0.0
        %2735 = vmatprep.subr.mxu0 0.0
        %2736 = vmatpush1.msra.mxu0 0.0
        %2737 = vmatprep.subr.mxu0 0.0
        %2738 = vmatpush1.msra.mxu0 0.0
        %2739 = vmatprep.subr.mxu0 0.0
        %2740 = vmatpush1.msra.mxu0 0.0
        %2741 = vmatprep.subr.mxu0 0.0
        %2742 = vmatpush1.msra.mxu0 0.0
        %2743 = vmatprep.subr.mxu0 0.0
        %2744 = vmatpush1.msra.mxu0 0.0
        %2745 = vmatprep.subr.mxu0 0.0
        %2746 = vmatpush1.msra.mxu0 0.0
        %2747 = vmatprep.subr.mxu0 0.0
        %2748 = vmatpush1.msra.mxu0 0.0
        %2749 = vmatprep.subr.mxu0 0.0
        %2750 = vmatpush1.msra.mxu0 0.0
        %2751 = vmatprep.subr.mxu0 0.0
        %2752 = vmatpush1.msra.mxu0 0.0
        %2753 = vmatprep.mubr.f32.mxu0 0.0
        %2754 = vmatmul.mubr.f32.gmra.mrb[0].mxu0 %v2687
        %v2755 = vpop.f32.mrb[0].mxu0
        %v2756 = vadd.f32 0.0, %v2755
        %v2757 = vpop.f32.mrb[0].mxu0
        %2758 = vdwg.mxu0
        %2760 = vrot.lane.b32.xlu0 %v2756, 1
        %v2761 = vpop.permute.xlu0 %2760
        %v2763 = vadd.f32 %v1482, %v2761
        %v2764 = vsub.f32 0.0, %v2763
        %2766 = vrot.lane.b32.xlu0 %v2764, 2
        %v2767 = vpop.permute.xlu0 %2766
        %v2769 = vsel %vm1423, %v2767, 0.0
        %v2770 = vld [vmem:[%s270] sm:$0xff]
        %2772 = vset.pattern.permute.xlu0 3
        %2773 = vperm.xlu0 %2772, %v2769
        %v2774 = vpop.permute.xlu0 %2773
        %v2776 = vadd.f32 %v2770, %v2774
        %2777 = vst [vmem:[%s270] sm:$0xff] %v2776
      $region44: #{gfmdiff_forward.1} parent=39 // pred_fallthru
        _
      %p2778 = scmp.lt.s32.totalorder %s23, 1
      %s2779 = scalar_select %p2778, %s23, 1
      %s2780 = smul.addr %s2779, 8
      %s2781 = scalar_lea.vmem %s6, %s2780
      // Predicated region
      $region45: #{gfmdiff_forward.1} parent=39 // pred_check
        %p2782 = pneg %p161
      $region46: #{gfmdiff_forward.1} parent=39 // pred_check_branch
        %2784 = sbr.rel (%p2782) target = $region48
      $region47: #{gfmdiff_forward.1} parent=39 // pred_region
        _
      $region48: #{gfmdiff_forward.1} parent=39 // pred_fallthru
        _
    $region40: #{gfmdiff_forward.1} parent=5 // pred_fallthru
      _
    %p2785 = scmp.le.s32.totalorder 2, %s18
    // Predicated region
    $region49: #{gfmdiff_forward.1} parent=5 // pred_check
      %p2786 = pneg %p2785
    $region50: #{gfmdiff_forward.1} parent=5 // pred_check_branch
      %2788 = sbr.rel (%p2786) target = $region52
    $region51: #{gfmdiff_forward.1} parent=5 // pred_region
      %s2789 = ssub.s32 %s18, 2
      // Predicated region
      $region53: #{gfmdiff_forward.1} parent=51 // pred_check
        %p2790 = pneg %p167
      $region54: #{gfmdiff_forward.1} parent=51 // pred_check_branch
        %2792 = sbr.rel (%p2790) target = $region56
      $region55: #{gfmdiff_forward.1} parent=51 // pred_region
        %p2793 = scmp.lt.s32.totalorder %s24, 1
        %s2794 = scalar_select %p2793, %s24, 1
        %s2795 = smul.addr %s2794, 8
        %s2796 = scalar_lea.vmem %s6, %s2795
      $region56: #{gfmdiff_forward.1} parent=51 // pred_fallthru
        _
    $region52: #{gfmdiff_forward.1} parent=5 // pred_fallthru
      _
  $region6: #{gfmdiff_forward.1} parent=0 // loop_footer
    %s22 = sadd.s32 1, %s18
  $region7: #{gfmdiff_forward.1} parent=0 // loop_footer_branch
    %17 = sbr.rel target = $region3
  $region8: #{gfmdiff_forward.1} parent=0 // loop_exit
    _

</llo_original>
